<compile_context>
chip_gen: v6e
topology: v6e:2x2x1
jax: 0.10.0
libtpu: 0.0.40
codegen_flags: <defaults>
</compile_context>

<pallas_src>
import math
from functools import partial

import jax
import jax.numpy as jnp
from jax import lax
from jax.experimental import pallas as pl
from jax.experimental.pallas import tpu as pltpu

_AB = (((1,), (0,)), ((), ()))    # (M,K) @ (K,N)
_ABT = (((1,), (1,)), ((), ()))   # (M,K) @ (N,K)^T


def _dacd_kernel(xyz1_ref, xyz1t_ref, xyz2t_ref, loss_ref, *,
                 alpha, n_lambda, inv_frac_21, ceil_frac_21, bt):
    # xyz1_ref : (bt, n_x, 3)  predictions
    # xyz1t_ref: (bt, 3, n_x)  predictions, transposed coordinate layout
    # xyz2t_ref: (bt, 3, n_gt) ground truth, transposed coordinate layout
    # loss_ref : (1, 1, bt)    per-batch-element (loss1+loss2)/2
    n_x = xyz1_ref.shape[1]
    n_gt = xyz2t_ref.shape[2]

    # Hoisted loop invariants (rows/columns only; no full-matrix iotas).
    x_ids_col = lax.broadcasted_iota(jnp.int32, (n_x, 1), 0)     # (n_x, 1)
    gt_ids_row = lax.broadcasted_iota(jnp.int32, (1, n_gt), 1)   # (1, n_gt)
    ones_1x = jnp.ones((1, n_x), jnp.float32)
    ones_1gt = jnp.ones((1, n_gt), jnp.float32)

    def per_batch(b):
        p1 = xyz1_ref[b]        # (n_x, 3)
        p1t = xyz1t_ref[b]      # (3, n_x)
        p2t = xyz2t_ref[b]      # (3, n_gt)

        sq1_col = jnp.sum(p1 * p1, axis=1, keepdims=True)        # (n_x, 1)
        sq2_row = jnp.sum(p2t * p2t, axis=0, keepdims=True)      # (1, n_gt)

        # ---- single distance matmul (n_gt on the lane/N dimension) ----
        ip = lax.dot_general(p1, p2t, _AB,
                             preferred_element_type=jnp.float32)  # (n_x, n_gt)
        d = sq1_col - 2.0 * ip + sq2_row                          # (n_x, n_gt)

        # Both argmin directions from the one matrix (first-index tie break,
        # matching argmin semantics). No clamp: d only locates the argmin.
        min2_col = jnp.min(d, axis=1, keepdims=True)              # (n_x, 1)
        idx2_col = jnp.min(jnp.where(d == min2_col, gt_ids_row, n_gt),
                           axis=1, keepdims=True)                 # (n_x, 1)
        min1_row = jnp.min(d, axis=0, keepdims=True)              # (1, n_gt)
        idx1_row = jnp.min(jnp.where(d == min1_row, x_ids_col, n_x),
                           axis=0, keepdims=True)                 # (1, n_gt)
        # d dies here.

        # ---- gt side: each gt point's NN among predictions ----
        eq1 = (x_ids_col == idx1_row).astype(jnp.float32)         # (n_x, n_gt)
        count1 = lax.dot_general(ones_1gt, eq1, _ABT,
                                 preferred_element_type=jnp.float32)  # (1, n_x)
        lhs1 = jnp.concatenate([count1, p1t], axis=0)             # (4, n_x)
        res1 = lax.dot_general(lhs1, eq1, _AB,
                               preferred_element_type=jnp.float32)    # (4, n_gt)
        # eq1 dies here.
        g1 = res1[0:1, :]                                         # gathered count
        nn1t = res1[1:4, :]                                       # NN coords (3, n_gt)
        dist1 = jnp.sum(jnp.square(p2t - nn1t), axis=0, keepdims=True)  # exact
        exp1 = jnp.exp(dist1 * (-alpha))
        w1 = g1 if n_lambda == 1 else g1 ** n_lambda
        w1 = jnp.minimum(w1 * inv_frac_21, 1.0)   # == 1/max(frac/w + 1e-6, 1) to ~1e-6
        loss1 = jnp.mean(1.0 - exp1 * w1)

        # ---- x side: each prediction's NN among gt points ----
        eq2 = (gt_ids_row == idx2_col).astype(jnp.float32)        # (n_x, n_gt)
        count2 = lax.dot_general(ones_1x, eq2, _AB,
                                 preferred_element_type=jnp.float32)  # (1, n_gt)
        lhs2 = jnp.concatenate([count2, p2t], axis=0)             # (4, n_gt)
        res2 = lax.dot_general(lhs2, eq2, _ABT,
                               preferred_element_type=jnp.float32)    # (4, n_x)
        # eq2 dies here.
        g2 = res2[0:1, :]
        nn2t = res2[1:4, :]
        dist2 = jnp.sum(jnp.square(p1t - nn2t), axis=0, keepdims=True)  # exact
        exp2 = jnp.exp(dist2 * (-alpha))
        w2 = g2 if n_lambda == 1 else g2 ** n_lambda
        w2 = 1.0 / (ceil_frac_21 * w2 + 1e-6)
        loss2 = jnp.mean(1.0 - exp2 * w2)

        return (loss1 + loss2) * 0.5

    # bt is a small static constant: the Python loop is fully unrolled, so the
    # LLO scheduler can interleave MXU/XLU/EUP work across batch elements.
    lane_ids = lax.broadcasted_iota(jnp.int32, (1, 1, bt), 2)
    acc = jnp.zeros((1, 1, bt), jnp.float32)
    for b in range(bt):
        acc = acc + jnp.where(lane_ids == b, per_batch(b), 0.0)
    loss_ref[...] = acc


def _tensorcores_per_chip():
    # Heuristic: only v7x exposes 2 TensorCores per chip among the targets
    # (v5e/v6e are single-TC). Worst case this is merely a suboptimal tiling.
    try:
        kind = jax.devices()[0].device_kind.lower()
    except Exception:
        return 1
    return 2 if "v7" in kind else 1


def _vmem_budget_bytes():
    # Generation-aware VMEM cap with ~15% headroom for double-buffered I/O
    # blocks and Mosaic-internal scratch (v7x: 64 MiB, v5e/v6e: 128 MiB).
    try:
        cap = int(pltpu.get_tpu_info().vmem_capacity_bytes)
    except Exception:
        cap = 64 << 20
    return max(min(int(cap * 0.85), 112 << 20), 32 << 20)


def _pick_batch_tile(B, num_tc):
    if B <= 1 or num_tc <= 1:
        return B  # single grid step on single-TC chips (overhead-dominated)
    # Keep >= num_tc grid steps so the "parallel" axis shards across cores.
    for bt in range(max(B // num_tc, 1), 0, -1):
        if B % bt == 0:
            return bt
    return 1


def density_aware_chamfer_distance(xyz1, xyz2, alpha=1000, n_lambda=1,
                                   non_reg=False, ignore_zeros=False,
                                   batch_tile=None):
    """Forward pass of DensityAwareChamferDistance. Returns a scalar."""
    del non_reg  # stored in the module but unused in the reference forward
    xyz1 = jnp.asarray(xyz1, jnp.float32)
    xyz2 = jnp.asarray(xyz2, jnp.float32)
    B, n_x, _ = xyz1.shape
    _, n_gt, _ = xyz2.shape
    if ignore_zeros and B == 1:
        # TODO(synk): ignore_zeros drops all-zero points (dynamic shapes); no
        # clean static-shape Pallas equivalent.
        raise NotImplementedError("ignore_zeros with batch==1 is not supported")

    frac_21 = n_gt / n_x
    nl = float(n_lambda)
    nl = int(nl) if nl.is_integer() else nl

    num_tc = _tensorcores_per_chip()
    bt = batch_tile if batch_tile is not None else _pick_batch_tile(B, num_tc)
    assert B % bt == 0, "batch_tile must divide the batch size"
    steps = B // bt

    # Transposed (B, 3, n) coordinate layouts produced once by XLA: inside the
    # kernel everything (gather LHS, exact NN distance, weights) stays on
    # lane-dense rows with no in-kernel transposes.
    xyz1_t = jnp.transpose(xyz1, (0, 2, 1))   # (B, 3, n_x)
    xyz2_t = jnp.transpose(xyz2, (0, 2, 1))   # (B, 3, n_gt)

    kernel = partial(_dacd_kernel, alpha=float(alpha), n_lambda=nl,
                     inv_frac_21=float(1.0 / frac_21),
                     ceil_frac_21=float(math.ceil(frac_21)), bt=bt)

    # One big (n_x, n_gt) f32 matrix live at a time (plus a transient int32
    # companion during argmin) + double-buffered I/O blocks + slack.
    mat_bytes = n_x * n_gt * 4
    io_bytes = 2 * 2 * bt * 3 * (2 * n_x + n_gt) * 4
    vmem_limit = int(min(max(4 * mat_bytes + io_bytes + (8 << 20), 32 << 20),
                         _vmem_budget_bytes()))

    per_step = pl.pallas_call(
        kernel,
        out_shape=jax.ShapeDtypeStruct((steps, 1, bt), jnp.float32),
        grid_spec=pltpu.PrefetchScalarGridSpec(
            num_scalar_prefetch=0,
            grid=(steps,),
            in_specs=[
                pl.BlockSpec((bt, n_x, 3), lambda g: (g, 0, 0)),
                pl.BlockSpec((bt, 3, n_x), lambda g: (g, 0, 0)),
                pl.BlockSpec((bt, 3, n_gt), lambda g: (g, 0, 0)),
            ],
            out_specs=pl.BlockSpec((1, 1, bt), lambda g: (g, 0, 0))),
        compiler_params=pltpu.CompilerParams(
            dimension_semantics=("parallel",),
            vmem_limit_bytes=vmem_limit),
    )(xyz1, xyz1_t, xyz2_t)

    return jnp.mean(per_step)


def _reference(xyz1, xyz2, alpha=1000, n_lambda=1):
    """Pure-JAX reference replicating the PyTorch module semantics."""
    _, n_x, _ = xyz1.shape
    _, n_gt, _ = xyz2.shape
    frac_21 = n_gt / n_x
    diff = xyz2[:, :, None, :] - xyz1[:, None, :, :]          # (B, n_gt, n_x, 3)
    d = jnp.sum(diff * diff, axis=-1)
    dist1, idx1 = jnp.min(d, axis=2), jnp.argmin(d, axis=2)   # (B, n_gt)
    dist2, idx2 = jnp.min(d, axis=1), jnp.argmin(d, axis=1)   # (B, n_x)
    exp1, exp2 = jnp.exp(-dist1 * alpha), jnp.exp(-dist2 * alpha)

    count1 = jax.vmap(lambda ix: jnp.zeros((n_x,), jnp.float32).at[ix].add(1.0))(idx1)
    w1 = jnp.take_along_axis(count1, idx1, axis=1) ** n_lambda
    w1 = 1.0 / jnp.maximum(frac_21 / w1 + 1e-6, 1.0)
    loss1 = jnp.mean(1.0 - exp1 * w1, axis=1)

    count2 = jax.vmap(lambda ix: jnp.zeros((n_gt,), jnp.float32).at[ix].add(1.0))(idx2)
    w2 = jnp.take_along_axis(count2, idx2, axis=1) ** n_lambda
    w2 = 1.0 / (math.ceil(frac_21) * w2 + 1e-6)
    loss2 = jnp.mean(1.0 - exp2 * w2, axis=1)
    return jnp.mean((loss1 + loss2) / 2.0)


if __name__ == "__main__":
    key = jax.random.PRNGKey(0)
    k1, k2, k3, k4 = jax.random.split(key, 4)

    # Config 1: B=2, n_x=128 predictions, n_gt=256 ground-truth points.
    xyz1 = jax.random.normal(k1, (2, 128, 3), dtype=jnp.float32)   # prediction
    xyz2 = jax.random.normal(k2, (2, 256, 3), dtype=jnp.float32)   # ground truth
    loss = density_aware_chamfer_distance(xyz1, xyz2)
    jax.block_until_ready(loss)
    ref = _reference(xyz1, xyz2)
    assert jnp.allclose(loss, ref, rtol=1e-3, atol=1e-3), (float(loss), float(ref))

    # Config 2: B=4, non-power-of-two gt count (exercises the unrolled
    # in-kernel batch loop and lane-padded matrices).
    xyz1b = jax.random.normal(k3, (4, 128, 3), dtype=jnp.float32)
    xyz2b = jax.random.normal(k4, (4, 192, 3), dtype=jnp.float32)
    lossb = density_aware_chamfer_distance(xyz1b, xyz2b)
    jax.block_until_ready(lossb)
    refb = _reference(xyz1b, xyz2b)
    assert jnp.allclose(lossb, refb, rtol=1e-3, atol=1e-3), (float(lossb), float(refb))

    print("KERNEL_OK")
</pallas_src>

<mosaic_0001>
module attributes {stable_mosaic.version = 11 : i64} {
  func.func @_dacd_kernel(%arg0: i32, %arg1: memref<2x128x3xf32, #tpu.memory_space<vmem>>, %arg2: memref<2x3x128xf32, #tpu.memory_space<vmem>>, %arg3: memref<2x3x256xf32, #tpu.memory_space<vmem>>, %arg4: memref<1x1x2xf32, #tpu.memory_space<vmem>>) attributes {dimension_semantics = [#tpu.dimension_semantics<parallel>], iteration_bounds = array<i64: 1>, scalar_prefetch = 0 : i64, scratch_operands = 0 : i64, tpu.core_type = #tpu.core_type<tc>, window_params = [{transform_indices = @transform_0, window_bounds = array<i64: 2, 128, 3>}, {transform_indices = @transform_1, window_bounds = array<i64: 2, 3, 128>}, {transform_indices = @transform_2, window_bounds = array<i64: 2, 3, 256>}, {transform_indices = @transform_3, window_bounds = array<i64: 1, 1, 2>}]} {
    %0 = tpu.iota {dimensions = array<i32: 0>} : vector<128x1xi32>
    %1 = tpu.iota {dimensions = array<i32: 1>} : vector<1x256xi32>
    %cst = arith.constant 1.000000e+00 : f32
    %2 = vector.broadcast %cst : f32 to vector<1x128xf32>
    %cst_0 = arith.constant 1.000000e+00 : f32
    %3 = vector.broadcast %cst_0 : f32 to vector<1x256xf32>
    %4 = tpu.iota {dimensions = array<i32: 2>} : vector<1x1x2xi32>
    %cst_1 = arith.constant 0.000000e+00 : f32
    %5 = vector.broadcast %cst_1 : f32 to vector<1x1x2xf32>
    %c0_i32 = arith.constant 0 : i32
    %6 = vector.broadcast %c0_i32 : i32 to vector<1x1x2xi32>
    %7 = arith.cmpi eq, %4, %6 : vector<1x1x2xi32>
    %c0 = arith.constant 0 : index
    %c0_2 = arith.constant 0 : index
    %c0_3 = arith.constant 0 : index
    %8 = vector.load %arg1[%c0, %c0_2, %c0_3] : memref<2x128x3xf32, #tpu.memory_space<vmem>>, vector<1x128x3xf32>
    %9 = vector.shape_cast %8 : vector<1x128x3xf32> to vector<128x3xf32>
    %c0_4 = arith.constant 0 : index
    %c0_5 = arith.constant 0 : index
    %c0_6 = arith.constant 0 : index
    %10 = vector.load %arg2[%c0_4, %c0_5, %c0_6] : memref<2x3x128xf32, #tpu.memory_space<vmem>>, vector<1x3x128xf32>
    %11 = vector.shape_cast %10 : vector<1x3x128xf32> to vector<3x128xf32>
    %c0_7 = arith.constant 0 : index
    %c0_8 = arith.constant 0 : index
    %c0_9 = arith.constant 0 : index
    %12 = vector.load %arg3[%c0_7, %c0_8, %c0_9] : memref<2x3x256xf32, #tpu.memory_space<vmem>>, vector<1x3x256xf32>
    %13 = vector.shape_cast %12 : vector<1x3x256xf32> to vector<3x256xf32>
    %14 = arith.mulf %9, %9 : vector<128x3xf32>
    %cst_10 = arith.constant dense<0.000000e+00> : vector<128xf32>
    %15 = vector.multi_reduction <add>, %14, %cst_10 [1] : vector<128x3xf32> to vector<128xf32>
    %16 = vector.shape_cast %15 : vector<128xf32> to vector<128x1xf32>
    %17 = arith.mulf %13, %13 : vector<3x256xf32>
    %cst_11 = arith.constant dense<0.000000e+00> : vector<256xf32>
    %18 = vector.multi_reduction <add>, %17, %cst_11 [0] : vector<3x256xf32> to vector<256xf32>
    %19 = vector.shape_cast %18 : vector<256xf32> to vector<1x256xf32>
    %cst_12 = arith.constant dense<0.000000e+00> : vector<128x256xf32>
    %20 = tpu.matmul %9, %13, %cst_12 {dimension_numbers = #tpu.dot_dimension_numbers<[1], [0], [0], [1], [0, 0, 1, 1], [], []>} : vector<128x3xf32>, vector<3x256xf32>, vector<128x256xf32> -> vector<128x256xf32>
    %cst_13 = arith.constant 2.000000e+00 : f32
    %21 = vector.broadcast %cst_13 : f32 to vector<128x256xf32>
    %22 = arith.mulf %21, %20 : vector<128x256xf32>
    %23 = vector.broadcast %16 : vector<128x1xf32> to vector<128x256xf32>
    %24 = arith.subf %23, %22 : vector<128x256xf32>
    %25 = vector.broadcast %19 : vector<1x256xf32> to vector<128x256xf32>
    %26 = arith.addf %24, %25 : vector<128x256xf32>
    %cst_14 = arith.constant dense<0x7F800000> : vector<128xf32>
    %27 = vector.multi_reduction <minimumf>, %26, %cst_14 [1] : vector<128x256xf32> to vector<128xf32>
    %28 = vector.shape_cast %27 : vector<128xf32> to vector<128x1xf32>
    %29 = vector.broadcast %28 : vector<128x1xf32> to vector<128x256xf32>
    %30 = arith.cmpf oeq, %26, %29 : vector<128x256xf32>
    %c256_i32 = arith.constant 256 : i32
    %31 = vector.shape_cast %1 : vector<1x256xi32> to vector<1x256xi32>
    %32 = vector.broadcast %31 : vector<1x256xi32> to vector<128x256xi32>
    %33 = vector.broadcast %c256_i32 : i32 to vector<128x256xi32>
    %34 = arith.select %30, %32, %33 : vector<128x256xi1>, vector<128x256xi32>
    %cst_15 = arith.constant dense<2147483647> : vector<128xi32>
    %35 = vector.multi_reduction <minsi>, %34, %cst_15 [1] : vector<128x256xi32> to vector<128xi32>
    %36 = vector.shape_cast %35 : vector<128xi32> to vector<128x1xi32>
    %cst_16 = arith.constant dense<0x7F800000> : vector<256xf32>
    %37 = vector.multi_reduction <minimumf>, %26, %cst_16 [0] : vector<128x256xf32> to vector<256xf32>
    %38 = vector.shape_cast %37 : vector<256xf32> to vector<1x256xf32>
    %39 = vector.broadcast %38 : vector<1x256xf32> to vector<128x256xf32>
    %40 = arith.cmpf oeq, %26, %39 : vector<128x256xf32>
    %c128_i32 = arith.constant 128 : i32
    %41 = vector.shape_cast %0 : vector<128x1xi32> to vector<128x1xi32>
    %42 = vector.broadcast %41 : vector<128x1xi32> to vector<128x256xi32>
    %43 = vector.broadcast %c128_i32 : i32 to vector<128x256xi32>
    %44 = arith.select %40, %42, %43 : vector<128x256xi1>, vector<128x256xi32>
    %cst_17 = arith.constant dense<2147483647> : vector<256xi32>
    %45 = vector.multi_reduction <minsi>, %44, %cst_17 [0] : vector<128x256xi32> to vector<256xi32>
    %46 = vector.shape_cast %45 : vector<256xi32> to vector<1x256xi32>
    %47 = vector.broadcast %0 : vector<128x1xi32> to vector<128x256xi32>
    %48 = vector.broadcast %46 : vector<1x256xi32> to vector<128x256xi32>
    %49 = arith.cmpi eq, %47, %48 : vector<128x256xi32>
    %50 = arith.extui %49 : vector<128x256xi1> to vector<128x256xi32>
    %51 = arith.sitofp %50 : vector<128x256xi32> to vector<128x256xf32>
    %cst_18 = arith.constant dense<0.000000e+00> : vector<1x128xf32>
    %52 = tpu.matmul %3, %51, %cst_18 {dimension_numbers = #tpu.dot_dimension_numbers<[1], [1], [0], [0], [0, 0, 1, 0], [], []>} : vector<1x256xf32>, vector<128x256xf32>, vector<1x128xf32> -> vector<1x128xf32>
    %53 = tpu.concatenate %52, %11 in 0 : vector<1x128xf32>, vector<3x128xf32> -> vector<4x128xf32>
    %cst_19 = arith.constant dense<0.000000e+00> : vector<4x256xf32>
    %54 = tpu.matmul %53, %51, %cst_19 {dimension_numbers = #tpu.dot_dimension_numbers<[1], [0], [0], [1], [0, 0, 1, 1], [], []>} : vector<4x128xf32>, vector<128x256xf32>, vector<4x256xf32> -> vector<4x256xf32>
    %55 = vector.extract_strided_slice %54 {offsets = [0, 0], sizes = [1, 256], strides = [1, 1]} : vector<4x256xf32> to vector<1x256xf32>
    %56 = vector.extract_strided_slice %54 {offsets = [1, 0], sizes = [3, 256], strides = [1, 1]} : vector<4x256xf32> to vector<3x256xf32>
    %57 = arith.subf %13, %56 : vector<3x256xf32>
    %58 = arith.mulf %57, %57 : vector<3x256xf32>
    %cst_20 = arith.constant dense<0.000000e+00> : vector<256xf32>
    %59 = vector.multi_reduction <add>, %58, %cst_20 [0] : vector<3x256xf32> to vector<256xf32>
    %60 = vector.shape_cast %59 : vector<256xf32> to vector<1x256xf32>
    %cst_21 = arith.constant -1.000000e+03 : f32
    %61 = vector.broadcast %cst_21 : f32 to vector<1x256xf32>
    %62 = arith.mulf %60, %61 : vector<1x256xf32>
    %63 = math.exp %62 : vector<1x256xf32>
    %cst_22 = arith.constant 5.000000e-01 : f32
    %64 = vector.broadcast %cst_22 : f32 to vector<1x256xf32>
    %65 = arith.mulf %55, %64 : vector<1x256xf32>
    %cst_23 = arith.constant 1.000000e+00 : f32
    %66 = vector.broadcast %cst_23 : f32 to vector<1x256xf32>
    %67 = arith.minimumf %65, %66 : vector<1x256xf32>
    %68 = arith.mulf %63, %67 : vector<1x256xf32>
    %cst_24 = arith.constant 1.000000e+00 : f32
    %69 = vector.broadcast %cst_24 : f32 to vector<1x256xf32>
    %70 = arith.subf %69, %68 : vector<1x256xf32>
    %71 = vector.shape_cast %70 : vector<1x256xf32> to vector<1x1x256xf32>
    %cst_25 = arith.constant dense<0.000000e+00> : vector<1xf32>
    %72 = vector.multi_reduction <add>, %71, %cst_25 [1, 2] : vector<1x1x256xf32> to vector<1xf32>
    %73 = vector.shape_cast %72 : vector<1xf32> to vector<1x1x1xf32>
    %74 = vector.extract %73[0, 0, 0] : f32 from vector<1x1x1xf32>
    %cst_26 = arith.constant 2.560000e+02 : f32
    %75 = arith.divf %74, %cst_26 : f32
    %76 = vector.broadcast %1 : vector<1x256xi32> to vector<128x256xi32>
    %77 = vector.broadcast %36 : vector<128x1xi32> to vector<128x256xi32>
    %78 = arith.cmpi eq, %76, %77 : vector<128x256xi32>
    %79 = arith.extui %78 : vector<128x256xi1> to vector<128x256xi32>
    %80 = arith.sitofp %79 : vector<128x256xi32> to vector<128x256xf32>
    %cst_27 = arith.constant dense<0.000000e+00> : vector<1x256xf32>
    %81 = tpu.matmul %2, %80, %cst_27 {dimension_numbers = #tpu.dot_dimension_numbers<[1], [0], [0], [1], [0, 0, 1, 1], [], []>} : vector<1x128xf32>, vector<128x256xf32>, vector<1x256xf32> -> vector<1x256xf32>
    %82 = tpu.concatenate %81, %13 in 0 : vector<1x256xf32>, vector<3x256xf32> -> vector<4x256xf32>
    %cst_28 = arith.constant dense<0.000000e+00> : vector<4x128xf32>
    %83 = tpu.matmul %82, %80, %cst_28 {dimension_numbers = #tpu.dot_dimension_numbers<[1], [1], [0], [0], [0, 0, 1, 0], [], []>} : vector<4x256xf32>, vector<128x256xf32>, vector<4x128xf32> -> vector<4x128xf32>
    %84 = vector.extract_strided_slice %83 {offsets = [0, 0], sizes = [1, 128], strides = [1, 1]} : vector<4x128xf32> to vector<1x128xf32>
    %85 = vector.extract_strided_slice %83 {offsets = [1, 0], sizes = [3, 128], strides = [1, 1]} : vector<4x128xf32> to vector<3x128xf32>
    %86 = arith.subf %11, %85 : vector<3x128xf32>
    %87 = arith.mulf %86, %86 : vector<3x128xf32>
    %cst_29 = arith.constant dense<0.000000e+00> : vector<128xf32>
    %88 = vector.multi_reduction <add>, %87, %cst_29 [0] : vector<3x128xf32> to vector<128xf32>
    %89 = vector.shape_cast %88 : vector<128xf32> to vector<1x128xf32>
    %cst_30 = arith.constant -1.000000e+03 : f32
    %90 = vector.broadcast %cst_30 : f32 to vector<1x128xf32>
    %91 = arith.mulf %89, %90 : vector<1x128xf32>
    %92 = math.exp %91 : vector<1x128xf32>
    %cst_31 = arith.constant 2.000000e+00 : f32
    %93 = vector.broadcast %cst_31 : f32 to vector<1x128xf32>
    %94 = arith.mulf %93, %84 : vector<1x128xf32>
    %cst_32 = arith.constant 9.99999997E-7 : f32
    %95 = vector.broadcast %cst_32 : f32 to vector<1x128xf32>
    %96 = arith.addf %94, %95 : vector<1x128xf32>
    %cst_33 = arith.constant 1.000000e+00 : f32
    %97 = vector.broadcast %cst_33 : f32 to vector<1x128xf32>
    %98 = arith.divf %97, %96 : vector<1x128xf32>
    %99 = arith.mulf %92, %98 : vector<1x128xf32>
    %cst_34 = arith.constant 1.000000e+00 : f32
    %100 = vector.broadcast %cst_34 : f32 to vector<1x128xf32>
    %101 = arith.subf %100, %99 : vector<1x128xf32>
    %102 = vector.shape_cast %101 : vector<1x128xf32> to vector<1x1x128xf32>
    %cst_35 = arith.constant dense<0.000000e+00> : vector<1xf32>
    %103 = vector.multi_reduction <add>, %102, %cst_35 [1, 2] : vector<1x1x128xf32> to vector<1xf32>
    %104 = vector.shape_cast %103 : vector<1xf32> to vector<1x1x1xf32>
    %105 = vector.extract %104[0, 0, 0] : f32 from vector<1x1x1xf32>
    %cst_36 = arith.constant 1.280000e+02 : f32
    %106 = arith.divf %105, %cst_36 : f32
    %107 = arith.addf %75, %106 : f32
    %cst_37 = arith.constant 5.000000e-01 : f32
    %108 = arith.mulf %107, %cst_37 : f32
    %cst_38 = arith.constant 0.000000e+00 : f32
    %109 = vector.broadcast %108 : f32 to vector<1x1x2xf32>
    %110 = vector.broadcast %cst_38 : f32 to vector<1x1x2xf32>
    %111 = arith.select %7, %109, %110 : vector<1x1x2xi1>, vector<1x1x2xf32>
    %112 = arith.addf %5, %111 : vector<1x1x2xf32>
    %c1_i32 = arith.constant 1 : i32
    %113 = vector.broadcast %c1_i32 : i32 to vector<1x1x2xi32>
    %114 = arith.cmpi eq, %4, %113 : vector<1x1x2xi32>
    %c1 = arith.constant 1 : index
    %c0_39 = arith.constant 0 : index
    %c0_40 = arith.constant 0 : index
    %115 = vector.load %arg1[%c1, %c0_39, %c0_40] : memref<2x128x3xf32, #tpu.memory_space<vmem>>, vector<1x128x3xf32>
    %116 = vector.shape_cast %115 : vector<1x128x3xf32> to vector<128x3xf32>
    %c1_41 = arith.constant 1 : index
    %c0_42 = arith.constant 0 : index
    %c0_43 = arith.constant 0 : index
    %117 = vector.load %arg2[%c1_41, %c0_42, %c0_43] : memref<2x3x128xf32, #tpu.memory_space<vmem>>, vector<1x3x128xf32>
    %118 = vector.shape_cast %117 : vector<1x3x128xf32> to vector<3x128xf32>
    %c1_44 = arith.constant 1 : index
    %c0_45 = arith.constant 0 : index
    %c0_46 = arith.constant 0 : index
    %119 = vector.load %arg3[%c1_44, %c0_45, %c0_46] : memref<2x3x256xf32, #tpu.memory_space<vmem>>, vector<1x3x256xf32>
    %120 = vector.shape_cast %119 : vector<1x3x256xf32> to vector<3x256xf32>
    %121 = arith.mulf %116, %116 : vector<128x3xf32>
    %cst_47 = arith.constant dense<0.000000e+00> : vector<128xf32>
    %122 = vector.multi_reduction <add>, %121, %cst_47 [1] : vector<128x3xf32> to vector<128xf32>
    %123 = vector.shape_cast %122 : vector<128xf32> to vector<128x1xf32>
    %124 = arith.mulf %120, %120 : vector<3x256xf32>
    %cst_48 = arith.constant dense<0.000000e+00> : vector<256xf32>
    %125 = vector.multi_reduction <add>, %124, %cst_48 [0] : vector<3x256xf32> to vector<256xf32>
    %126 = vector.shape_cast %125 : vector<256xf32> to vector<1x256xf32>
    %cst_49 = arith.constant dense<0.000000e+00> : vector<128x256xf32>
    %127 = tpu.matmul %116, %120, %cst_49 {dimension_numbers = #tpu.dot_dimension_numbers<[1], [0], [0], [1], [0, 0, 1, 1], [], []>} : vector<128x3xf32>, vector<3x256xf32>, vector<128x256xf32> -> vector<128x256xf32>
    %cst_50 = arith.constant 2.000000e+00 : f32
    %128 = vector.broadcast %cst_50 : f32 to vector<128x256xf32>
    %129 = arith.mulf %128, %127 : vector<128x256xf32>
    %130 = vector.broadcast %123 : vector<128x1xf32> to vector<128x256xf32>
    %131 = arith.subf %130, %129 : vector<128x256xf32>
    %132 = vector.broadcast %126 : vector<1x256xf32> to vector<128x256xf32>
    %133 = arith.addf %131, %132 : vector<128x256xf32>
    %cst_51 = arith.constant dense<0x7F800000> : vector<128xf32>
    %134 = vector.multi_reduction <minimumf>, %133, %cst_51 [1] : vector<128x256xf32> to vector<128xf32>
    %135 = vector.shape_cast %134 : vector<128xf32> to vector<128x1xf32>
    %136 = vector.broadcast %135 : vector<128x1xf32> to vector<128x256xf32>
    %137 = arith.cmpf oeq, %133, %136 : vector<128x256xf32>
    %c256_i32_52 = arith.constant 256 : i32
    %138 = vector.shape_cast %1 : vector<1x256xi32> to vector<1x256xi32>
    %139 = vector.broadcast %138 : vector<1x256xi32> to vector<128x256xi32>
    %140 = vector.broadcast %c256_i32_52 : i32 to vector<128x256xi32>
    %141 = arith.select %137, %139, %140 : vector<128x256xi1>, vector<128x256xi32>
    %cst_53 = arith.constant dense<2147483647> : vector<128xi32>
    %142 = vector.multi_reduction <minsi>, %141, %cst_53 [1] : vector<128x256xi32> to vector<128xi32>
    %143 = vector.shape_cast %142 : vector<128xi32> to vector<128x1xi32>
    %cst_54 = arith.constant dense<0x7F800000> : vector<256xf32>
    %144 = vector.multi_reduction <minimumf>, %133, %cst_54 [0] : vector<128x256xf32> to vector<256xf32>
    %145 = vector.shape_cast %144 : vector<256xf32> to vector<1x256xf32>
    %146 = vector.broadcast %145 : vector<1x256xf32> to vector<128x256xf32>
    %147 = arith.cmpf oeq, %133, %146 : vector<128x256xf32>
    %c128_i32_55 = arith.constant 128 : i32
    %148 = vector.shape_cast %0 : vector<128x1xi32> to vector<128x1xi32>
    %149 = vector.broadcast %148 : vector<128x1xi32> to vector<128x256xi32>
    %150 = vector.broadcast %c128_i32_55 : i32 to vector<128x256xi32>
    %151 = arith.select %147, %149, %150 : vector<128x256xi1>, vector<128x256xi32>
    %cst_56 = arith.constant dense<2147483647> : vector<256xi32>
    %152 = vector.multi_reduction <minsi>, %151, %cst_56 [0] : vector<128x256xi32> to vector<256xi32>
    %153 = vector.shape_cast %152 : vector<256xi32> to vector<1x256xi32>
    %154 = vector.broadcast %0 : vector<128x1xi32> to vector<128x256xi32>
    %155 = vector.broadcast %153 : vector<1x256xi32> to vector<128x256xi32>
    %156 = arith.cmpi eq, %154, %155 : vector<128x256xi32>
    %157 = arith.extui %156 : vector<128x256xi1> to vector<128x256xi32>
    %158 = arith.sitofp %157 : vector<128x256xi32> to vector<128x256xf32>
    %cst_57 = arith.constant dense<0.000000e+00> : vector<1x128xf32>
    %159 = tpu.matmul %3, %158, %cst_57 {dimension_numbers = #tpu.dot_dimension_numbers<[1], [1], [0], [0], [0, 0, 1, 0], [], []>} : vector<1x256xf32>, vector<128x256xf32>, vector<1x128xf32> -> vector<1x128xf32>
    %160 = tpu.concatenate %159, %118 in 0 : vector<1x128xf32>, vector<3x128xf32> -> vector<4x128xf32>
    %cst_58 = arith.constant dense<0.000000e+00> : vector<4x256xf32>
    %161 = tpu.matmul %160, %158, %cst_58 {dimension_numbers = #tpu.dot_dimension_numbers<[1], [0], [0], [1], [0, 0, 1, 1], [], []>} : vector<4x128xf32>, vector<128x256xf32>, vector<4x256xf32> -> vector<4x256xf32>
    %162 = vector.extract_strided_slice %161 {offsets = [0, 0], sizes = [1, 256], strides = [1, 1]} : vector<4x256xf32> to vector<1x256xf32>
    %163 = vector.extract_strided_slice %161 {offsets = [1, 0], sizes = [3, 256], strides = [1, 1]} : vector<4x256xf32> to vector<3x256xf32>
    %164 = arith.subf %120, %163 : vector<3x256xf32>
    %165 = arith.mulf %164, %164 : vector<3x256xf32>
    %cst_59 = arith.constant dense<0.000000e+00> : vector<256xf32>
    %166 = vector.multi_reduction <add>, %165, %cst_59 [0] : vector<3x256xf32> to vector<256xf32>
    %167 = vector.shape_cast %166 : vector<256xf32> to vector<1x256xf32>
    %cst_60 = arith.constant -1.000000e+03 : f32
    %168 = vector.broadcast %cst_60 : f32 to vector<1x256xf32>
    %169 = arith.mulf %167, %168 : vector<1x256xf32>
    %170 = math.exp %169 : vector<1x256xf32>
    %cst_61 = arith.constant 5.000000e-01 : f32
    %171 = vector.broadcast %cst_61 : f32 to vector<1x256xf32>
    %172 = arith.mulf %162, %171 : vector<1x256xf32>
    %cst_62 = arith.constant 1.000000e+00 : f32
    %173 = vector.broadcast %cst_62 : f32 to vector<1x256xf32>
    %174 = arith.minimumf %172, %173 : vector<1x256xf32>
    %175 = arith.mulf %170, %174 : vector<1x256xf32>
    %cst_63 = arith.constant 1.000000e+00 : f32
    %176 = vector.broadcast %cst_63 : f32 to vector<1x256xf32>
    %177 = arith.subf %176, %175 : vector<1x256xf32>
    %178 = vector.shape_cast %177 : vector<1x256xf32> to vector<1x1x256xf32>
    %cst_64 = arith.constant dense<0.000000e+00> : vector<1xf32>
    %179 = vector.multi_reduction <add>, %178, %cst_64 [1, 2] : vector<1x1x256xf32> to vector<1xf32>
    %180 = vector.shape_cast %179 : vector<1xf32> to vector<1x1x1xf32>
    %181 = vector.extract %180[0, 0, 0] : f32 from vector<1x1x1xf32>
    %cst_65 = arith.constant 2.560000e+02 : f32
    %182 = arith.divf %181, %cst_65 : f32
    %183 = vector.broadcast %1 : vector<1x256xi32> to vector<128x256xi32>
    %184 = vector.broadcast %143 : vector<128x1xi32> to vector<128x256xi32>
    %185 = arith.cmpi eq, %183, %184 : vector<128x256xi32>
    %186 = arith.extui %185 : vector<128x256xi1> to vector<128x256xi32>
    %187 = arith.sitofp %186 : vector<128x256xi32> to vector<128x256xf32>
    %cst_66 = arith.constant dense<0.000000e+00> : vector<1x256xf32>
    %188 = tpu.matmul %2, %187, %cst_66 {dimension_numbers = #tpu.dot_dimension_numbers<[1], [0], [0], [1], [0, 0, 1, 1], [], []>} : vector<1x128xf32>, vector<128x256xf32>, vector<1x256xf32> -> vector<1x256xf32>
    %189 = tpu.concatenate %188, %120 in 0 : vector<1x256xf32>, vector<3x256xf32> -> vector<4x256xf32>
    %cst_67 = arith.constant dense<0.000000e+00> : vector<4x128xf32>
    %190 = tpu.matmul %189, %187, %cst_67 {dimension_numbers = #tpu.dot_dimension_numbers<[1], [1], [0], [0], [0, 0, 1, 0], [], []>} : vector<4x256xf32>, vector<128x256xf32>, vector<4x128xf32> -> vector<4x128xf32>
    %191 = vector.extract_strided_slice %190 {offsets = [0, 0], sizes = [1, 128], strides = [1, 1]} : vector<4x128xf32> to vector<1x128xf32>
    %192 = vector.extract_strided_slice %190 {offsets = [1, 0], sizes = [3, 128], strides = [1, 1]} : vector<4x128xf32> to vector<3x128xf32>
    %193 = arith.subf %118, %192 : vector<3x128xf32>
    %194 = arith.mulf %193, %193 : vector<3x128xf32>
    %cst_68 = arith.constant dense<0.000000e+00> : vector<128xf32>
    %195 = vector.multi_reduction <add>, %194, %cst_68 [0] : vector<3x128xf32> to vector<128xf32>
    %196 = vector.shape_cast %195 : vector<128xf32> to vector<1x128xf32>
    %cst_69 = arith.constant -1.000000e+03 : f32
    %197 = vector.broadcast %cst_69 : f32 to vector<1x128xf32>
    %198 = arith.mulf %196, %197 : vector<1x128xf32>
    %199 = math.exp %198 : vector<1x128xf32>
    %cst_70 = arith.constant 2.000000e+00 : f32
    %200 = vector.broadcast %cst_70 : f32 to vector<1x128xf32>
    %201 = arith.mulf %200, %191 : vector<1x128xf32>
    %cst_71 = arith.constant 9.99999997E-7 : f32
    %202 = vector.broadcast %cst_71 : f32 to vector<1x128xf32>
    %203 = arith.addf %201, %202 : vector<1x128xf32>
    %cst_72 = arith.constant 1.000000e+00 : f32
    %204 = vector.broadcast %cst_72 : f32 to vector<1x128xf32>
    %205 = arith.divf %204, %203 : vector<1x128xf32>
    %206 = arith.mulf %199, %205 : vector<1x128xf32>
    %cst_73 = arith.constant 1.000000e+00 : f32
    %207 = vector.broadcast %cst_73 : f32 to vector<1x128xf32>
    %208 = arith.subf %207, %206 : vector<1x128xf32>
    %209 = vector.shape_cast %208 : vector<1x128xf32> to vector<1x1x128xf32>
    %cst_74 = arith.constant dense<0.000000e+00> : vector<1xf32>
    %210 = vector.multi_reduction <add>, %209, %cst_74 [1, 2] : vector<1x1x128xf32> to vector<1xf32>
    %211 = vector.shape_cast %210 : vector<1xf32> to vector<1x1x1xf32>
    %212 = vector.extract %211[0, 0, 0] : f32 from vector<1x1x1xf32>
    %cst_75 = arith.constant 1.280000e+02 : f32
    %213 = arith.divf %212, %cst_75 : f32
    %214 = arith.addf %182, %213 : f32
    %cst_76 = arith.constant 5.000000e-01 : f32
    %215 = arith.mulf %214, %cst_76 : f32
    %cst_77 = arith.constant 0.000000e+00 : f32
    %216 = vector.broadcast %215 : f32 to vector<1x1x2xf32>
    %217 = vector.broadcast %cst_77 : f32 to vector<1x1x2xf32>
    %218 = arith.select %114, %216, %217 : vector<1x1x2xi1>, vector<1x1x2xf32>
    %219 = arith.addf %112, %218 : vector<1x1x2xf32>
    %c0_78 = arith.constant 0 : index
    %c0_79 = arith.constant 0 : index
    %c0_80 = arith.constant 0 : index
    %220 = vector.load %arg4[%c0_78, %c0_79, %c0_80] : memref<1x1x2xf32, #tpu.memory_space<vmem>>, vector<1x1x2xf32>
    tpu.vector_store %arg4[%c0_78, %c0_79, %c0_80], %219 {strides = array<i32>} : memref<1x1x2xf32, #tpu.memory_space<vmem>>, vector<1x1x2xf32>,
    return
  }
  func.func @transform_0(%arg0: i32) -> (i32, i32, i32) {
    %c0_i32 = arith.constant 0 : i32
    %c0_i32_0 = arith.constant 0 : i32
    %c0_i32_1 = arith.constant 0 : i32
    return %arg0, %c0_i32, %c0_i32_0 : i32, i32, i32
  }
  func.func @transform_1(%arg0: i32) -> (i32, i32, i32) {
    %c0_i32 = arith.constant 0 : i32
    %c0_i32_0 = arith.constant 0 : i32
    %c0_i32_1 = arith.constant 0 : i32
    return %arg0, %c0_i32, %c0_i32_0 : i32, i32, i32
  }
  func.func @transform_2(%arg0: i32) -> (i32, i32, i32) {
    %c0_i32 = arith.constant 0 : i32
    %c0_i32_0 = arith.constant 0 : i32
    %c0_i32_1 = arith.constant 0 : i32
    return %arg0, %c0_i32, %c0_i32_0 : i32, i32, i32
  }
  func.func @transform_3(%arg0: i32) -> (i32, i32, i32) {
    %c0_i32 = arith.constant 0 : i32
    %c0_i32_0 = arith.constant 0 : i32
    %c0_i32_1 = arith.constant 0 : i32
    return %arg0, %c0_i32, %c0_i32_0 : i32, i32, i32
  }
}

</mosaic_0001>

<llo_original>
// kernel: tpu_custom_call.1
$region0: #{tpu_custom_call.1}
  #allocation0 [shape = 'u32[]', space=smem, size = 0x4, offset = 0x4, fixed_abs, tag = 'smem constant byte address 0x4 - core index']
  #allocation1 [shape = 'u32[144,128]{1,0:T(1,128)}', space=vmem, size = 0x12000, scoped, tag = 'internal scratch']
  %s0 = inlined_call_operand.vmem [shape: f32[2,128,3], index: 0, kind: input, shape index: {}]
  %s1 = inlined_call_operand.vmem [shape: f32[2,3,128], index: 1, kind: input, shape index: {}]
  %s2 = inlined_call_operand.vmem [shape: f32[2,3,256], index: 2, kind: input, shape index: {}]
  %s3 = inlined_call_operand.hbm [shape: f32[1,1,2], index: 3, kind: output, shape index: {}]
  %s4 = sld [smem:[#allocation0]]
  $region22: #{tpu_custom_call.1} parent=0
    _
  %s6 = ssub.s32 1, %s4
  %s7 = scalar_select 0, %s6, %s4
  $region1: #{tpu_custom_call.1} parent=0
    #allocation2 [shape = 'u8[512]{0}', space=vmem, size = 0x400, scoped, tag = 'output window, operand 0, single buffered']
    #allocation3 [shape = 's32[1]{0}', space=sflag, size = 0x4, scoped, tag = 'scoped memory for tpu_custom_call.1']
    %8 = vsyncpa [#allocation3], 0
    // Predicated region
    $region2: #{tpu_custom_call.1} parent=1 // pred_check
      _
    $region3: #{tpu_custom_call.1} parent=1 // pred_check_branch
      %10 = sbr.rel (0) target = $region5
    $region4: #{tpu_custom_call.1} parent=1 // pred_region
      _
    $region5: #{tpu_custom_call.1} parent=1 // pred_fallthru
      _
    // Predicated region
    $region6: #{tpu_custom_call.1} parent=1 // pred_check
      _
    $region7: #{tpu_custom_call.1} parent=1 // pred_check_branch
      %12 = sbr.rel (0) target = $region9
    $region8: #{tpu_custom_call.1} parent=1 // pred_region
      _
    $region9: #{tpu_custom_call.1} parent=1 // pred_fallthru
      _
    // Predicated region
    $region10: #{tpu_custom_call.1} parent=1 // pred_check
      _
    $region11: #{tpu_custom_call.1} parent=1 // pred_check_branch
      %14 = sbr.rel (0) target = $region13
    $region12: #{tpu_custom_call.1} parent=1 // pred_region
      _
    $region13: #{tpu_custom_call.1} parent=1 // pred_fallthru
      _
    %v15 = vlaneseq
    %v16 = vshrl.u32 %v15, 7
    %v17 = vadd.s32 %v16, 8
    %v18 = vadd.s32 %v16, 16
    %v19 = vadd.s32 %v16, 24
    %v20 = vadd.s32 %v16, 32
    %v21 = vadd.s32 %v16, 40
    %v22 = vadd.s32 %v16, 48
    %v23 = vadd.s32 %v16, 56
    %v24 = vadd.s32 %v16, 64
    %v25 = vadd.s32 %v16, 72
    %v26 = vadd.s32 %v16, 80
    %v27 = vadd.s32 %v16, 88
    %v28 = vadd.s32 %v16, 96
    %v29 = vadd.s32 %v16, 104
    %v30 = vadd.s32 %v16, 112
    %v31 = vadd.s32 %v16, 120
    %v32 = vlaneseq
    %v33 = vand.u32 %v32, 127
    %v34 = vadd.s32 %v33, 128
    %vm35 = vcmp.eq.s32.totalorder %v33, 0
    %v36 = vld [vmem:[%s0] sm:$0xff]
    %v37 = vld [vmem:[%s0 + $0x8] sm:$0xff]
    %v38 = vld [vmem:[%s0 + $0x10] sm:$0xff]
    %v39 = vld [vmem:[%s0 + $0x18] sm:$0xff]
    %v40 = vld [vmem:[%s0 + $0x20] sm:$0xff]
    %v41 = vld [vmem:[%s0 + $0x28] sm:$0xff]
    %v42 = vld [vmem:[%s0 + $0x30] sm:$0xff]
    %v43 = vld [vmem:[%s0 + $0x38] sm:$0xff]
    %v44 = vld [vmem:[%s0 + $0x40] sm:$0xff]
    %v45 = vld [vmem:[%s0 + $0x48] sm:$0xff]
    %v46 = vld [vmem:[%s0 + $0x50] sm:$0xff]
    %v47 = vld [vmem:[%s0 + $0x58] sm:$0xff]
    %v48 = vld [vmem:[%s0 + $0x60] sm:$0xff]
    %v49 = vld [vmem:[%s0 + $0x68] sm:$0xff]
    %v50 = vld [vmem:[%s0 + $0x70] sm:$0xff]
    %v51 = vld [vmem:[%s0 + $0x78] sm:$0xff]
    %v52 = vld [vmem:[%s1] sm:$0x7]
    %v53 = vld [vmem:[%s2] sm:$0x77]
    %v54 = vmul.f32 %v36, %v36
    %v55 = vmul.f32 %v37, %v37
    %v56 = vmul.f32 %v38, %v38
    %v57 = vmul.f32 %v39, %v39
    %v58 = vmul.f32 %v40, %v40
    %v59 = vmul.f32 %v41, %v41
    %v60 = vmul.f32 %v42, %v42
    %v61 = vmul.f32 %v43, %v43
    %v62 = vmul.f32 %v44, %v44
    %v63 = vmul.f32 %v45, %v45
    %v64 = vmul.f32 %v46, %v46
    %v65 = vmul.f32 %v47, %v47
    %v66 = vmul.f32 %v48, %v48
    %v67 = vmul.f32 %v49, %v49
    %v68 = vmul.f32 %v50, %v50
    %v69 = vmul.f32 %v51, %v51
    %vm70 = vcmask 23552
    %v71 = vsel %vm70, %v54, 0.0
    %72 = vadd.xlane.f32.xlu0 %v71
    %v73 = vpop.xlane.xlu0 %72
    %v74 = vsel %vm70, %v55, 0.0
    %75 = vadd.xlane.f32.xlu0 %v74
    %v76 = vpop.xlane.xlu0 %75
    %v77 = vsel %vm70, %v56, 0.0
    %78 = vadd.xlane.f32.xlu0 %v77
    %v79 = vpop.xlane.xlu0 %78
    %v80 = vsel %vm70, %v57, 0.0
    %81 = vadd.xlane.f32.xlu0 %v80
    %v82 = vpop.xlane.xlu0 %81
    %v83 = vsel %vm70, %v58, 0.0
    %84 = vadd.xlane.f32.xlu0 %v83
    %v85 = vpop.xlane.xlu0 %84
    %v86 = vsel %vm70, %v59, 0.0
    %87 = vadd.xlane.f32.xlu0 %v86
    %v88 = vpop.xlane.xlu0 %87
    %v89 = vsel %vm70, %v60, 0.0
    %90 = vadd.xlane.f32.xlu0 %v89
    %v91 = vpop.xlane.xlu0 %90
    %v92 = vsel %vm70, %v61, 0.0
    %93 = vadd.xlane.f32.xlu0 %v92
    %v94 = vpop.xlane.xlu0 %93
    %v95 = vsel %vm70, %v62, 0.0
    %96 = vadd.xlane.f32.xlu0 %v95
    %v97 = vpop.xlane.xlu0 %96
    %v98 = vsel %vm70, %v63, 0.0
    %99 = vadd.xlane.f32.xlu0 %v98
    %v100 = vpop.xlane.xlu0 %99
    %v101 = vsel %vm70, %v64, 0.0
    %102 = vadd.xlane.f32.xlu0 %v101
    %v103 = vpop.xlane.xlu0 %102
    %v104 = vsel %vm70, %v65, 0.0
    %105 = vadd.xlane.f32.xlu0 %v104
    %v106 = vpop.xlane.xlu0 %105
    %v107 = vsel %vm70, %v66, 0.0
    %108 = vadd.xlane.f32.xlu0 %v107
    %v109 = vpop.xlane.xlu0 %108
    %v110 = vsel %vm70, %v67, 0.0
    %111 = vadd.xlane.f32.xlu0 %v110
    %v112 = vpop.xlane.xlu0 %111
    %v113 = vsel %vm70, %v68, 0.0
    %114 = vadd.xlane.f32.xlu0 %v113
    %v115 = vpop.xlane.xlu0 %114
    %v116 = vsel %vm70, %v69, 0.0
    %117 = vadd.xlane.f32.xlu0 %v116
    %v118 = vpop.xlane.xlu0 %117
    %v119 = vmul.f32 %v53, %v53
    %v121 = vcombine.high %v119, %v119
    %vm123 = vcmask 1042432
    %v124 = vsel %vm123, %v119, 0.0
    %v125 = vrot.slane %v124, 4
    %v126 = vadd.f32 %v124, %v125
    %v127 = vrot.slane %v126, 2
    %v128 = vadd.f32 %v126, %v127
    %v129 = vrot.slane %v128, 1
    %v130 = vadd.f32 %v128, %v129
    %v131 = vsel %vm123, %v121, 0.0
    %v132 = vrot.slane %v131, 4
    %v133 = vadd.f32 %v131, %v132
    %v134 = vrot.slane %v133, 2
    %v135 = vadd.f32 %v133, %v134
    %v136 = vrot.slane %v135, 1
    %v137 = vadd.f32 %v135, %v136
    %v139 = vcombine.high %v53, %v53
    %v141 = vsel %vm70, %v36, 0
    %v144 = vsel %vm70, %v37, 0
    %v147 = vsel %vm70, %v38, 0
    %v150 = vsel %vm70, %v39, 0
    %v153 = vsel %vm70, %v40, 0
    %v156 = vsel %vm70, %v41, 0
    %v159 = vsel %vm70, %v42, 0
    %v162 = vsel %vm70, %v43, 0
    %v165 = vsel %vm70, %v44, 0
    %v168 = vsel %vm70, %v45, 0
    %v171 = vsel %vm70, %v46, 0
    %v174 = vsel %vm70, %v47, 0
    %v177 = vsel %vm70, %v48, 0
    %v180 = vsel %vm70, %v49, 0
    %v183 = vsel %vm70, %v50, 0
    %v186 = vsel %vm70, %v51, 0
    %v188 = vsel %vm123, %v53, 0
    %v190 = vsel %vm123, %v139, 0
    %192 = vmatprep.subr.mxu0 0.0
    %193 = vmatpush1.msra.mxu0 0.0
    %194 = vmatprep.subr.mxu0 0.0
    %195 = vmatpush1.msra.mxu0 0.0
    %196 = vmatprep.subr.mxu0 0.0
    %197 = vmatpush1.msra.mxu0 0.0
    %198 = vmatprep.subr.mxu0 0.0
    %199 = vmatpush1.msra.mxu0 0.0
    %200 = vmatprep.subr.mxu0 0.0
    %201 = vmatpush1.msra.mxu0 0.0
    %202 = vmatprep.subr.mxu0 0.0
    %203 = vmatpush1.msra.mxu0 0.0
    %204 = vmatprep.subr.mxu0 0.0
    %205 = vmatpush1.msra.mxu0 0.0
    %206 = vmatprep.subr.mxu0 0.0
    %207 = vmatpush1.msra.mxu0 0.0
    %208 = vmatprep.subr.mxu0 0.0
    %209 = vmatpush1.msra.mxu0 0.0
    %210 = vmatprep.subr.mxu0 0.0
    %211 = vmatpush1.msra.mxu0 0.0
    %212 = vmatprep.subr.mxu0 0.0
    %213 = vmatpush1.msra.mxu0 0.0
    %214 = vmatprep.subr.mxu0 0.0
    %215 = vmatpush1.msra.mxu0 0.0
    %216 = vmatprep.subr.mxu0 0.0
    %217 = vmatpush1.msra.mxu0 0.0
    %218 = vmatprep.subr.mxu0 0.0
    %219 = vmatpush1.msra.mxu0 0.0
    %220 = vmatprep.subr.mxu0 0.0
    %221 = vmatpush1.msra.mxu0 0.0
    %222 = vmatprep.subr.mxu0 %v190
    %223 = vmatpush1.msra.mxu0 %v188
    %224 = vmatprep.subr.mxu0 0.0
    %225 = vmatpush2.msra.mxu0 0.0
    %226 = vmatprep.subr.mxu0 0.0
    %227 = vmatpush2.msra.mxu0 0.0
    %228 = vmatprep.subr.mxu0 0.0
    %229 = vmatpush2.msra.mxu0 0.0
    %230 = vmatprep.subr.mxu0 0.0
    %231 = vmatpush2.msra.mxu0 0.0
    %232 = vmatprep.subr.mxu0 0.0
    %233 = vmatpush2.msra.mxu0 0.0
    %234 = vmatprep.subr.mxu0 0.0
    %235 = vmatpush2.msra.mxu0 0.0
    %236 = vmatprep.subr.mxu0 0.0
    %237 = vmatpush2.msra.mxu0 0.0
    %238 = vmatprep.subr.mxu0 0.0
    %239 = vmatpush2.msra.mxu0 0.0
    %240 = vmatprep.subr.mxu0 0.0
    %241 = vmatpush2.msra.mxu0 0.0
    %242 = vmatprep.subr.mxu0 0.0
    %243 = vmatpush2.msra.mxu0 0.0
    %244 = vmatprep.subr.mxu0 0.0
    %245 = vmatpush2.msra.mxu0 0.0
    %246 = vmatprep.subr.mxu0 0.0
    %247 = vmatpush2.msra.mxu0 0.0
    %248 = vmatprep.subr.mxu0 0.0
    %249 = vmatpush2.msra.mxu0 0.0
    %250 = vmatprep.subr.mxu0 0.0
    %251 = vmatpush2.msra.mxu0 0.0
    %252 = vmatprep.subr.mxu0 0.0
    %253 = vmatpush2.msra.mxu0 0.0
    %254 = vmatprep.subr.mxu0 0.0
    %255 = vmatpush2.msra.mxu0 0.0
    %256 = vmatprep.mubr.f32.mxu0 0.0
    %257 = vmatmul.mubr.f32.gmra.mxu0 %v141
    %v258 = vpop.f32.mrf.mxu0
    %v259 = vadd.f32 0.0, %v258
    %v260 = vpop.f32.mrf.mxu0
    %v261 = vadd.f32 0.0, %v260
    %262 = vmatprep.mubr.f32.mxu0 0.0
    %263 = vmatmul.mubr.f32.gmra.mxu0 %v144
    %v264 = vpop.f32.mrf.mxu0
    %v265 = vadd.f32 0.0, %v264
    %v266 = vpop.f32.mrf.mxu0
    %v267 = vadd.f32 0.0, %v266
    %268 = vmatprep.mubr.f32.mxu0 0.0
    %269 = vmatmul.mubr.f32.gmra.mxu0 %v147
    %v270 = vpop.f32.mrf.mxu0
    %v271 = vadd.f32 0.0, %v270
    %v272 = vpop.f32.mrf.mxu0
    %v273 = vadd.f32 0.0, %v272
    %274 = vmatprep.mubr.f32.mxu0 0.0
    %275 = vmatmul.mubr.f32.gmra.mxu0 %v150
    %v276 = vpop.f32.mrf.mxu0
    %v277 = vadd.f32 0.0, %v276
    %v278 = vpop.f32.mrf.mxu0
    %v279 = vadd.f32 0.0, %v278
    %280 = vmatprep.mubr.f32.mxu0 0.0
    %281 = vmatmul.mubr.f32.gmra.mxu0 %v153
    %v282 = vpop.f32.mrf.mxu0
    %v283 = vadd.f32 0.0, %v282
    %v284 = vpop.f32.mrf.mxu0
    %v285 = vadd.f32 0.0, %v284
    %286 = vmatprep.mubr.f32.mxu0 0.0
    %287 = vmatmul.mubr.f32.gmra.mxu0 %v156
    %v288 = vpop.f32.mrf.mxu0
    %v289 = vadd.f32 0.0, %v288
    %v290 = vpop.f32.mrf.mxu0
    %v291 = vadd.f32 0.0, %v290
    %292 = vmatprep.mubr.f32.mxu0 0.0
    %293 = vmatmul.mubr.f32.gmra.mxu0 %v159
    %v294 = vpop.f32.mrf.mxu0
    %v295 = vadd.f32 0.0, %v294
    %v296 = vpop.f32.mrf.mxu0
    %v297 = vadd.f32 0.0, %v296
    %298 = vmatprep.mubr.f32.mxu0 0.0
    %299 = vmatmul.mubr.f32.gmra.mxu0 %v162
    %v300 = vpop.f32.mrf.mxu0
    %v301 = vadd.f32 0.0, %v300
    %v302 = vpop.f32.mrf.mxu0
    %v303 = vadd.f32 0.0, %v302
    %304 = vmatprep.mubr.f32.mxu0 0.0
    %305 = vmatmul.mubr.f32.gmra.mxu0 %v165
    %v306 = vpop.f32.mrf.mxu0
    %v307 = vadd.f32 0.0, %v306
    %v308 = vpop.f32.mrf.mxu0
    %v309 = vadd.f32 0.0, %v308
    %310 = vmatprep.mubr.f32.mxu0 0.0
    %311 = vmatmul.mubr.f32.gmra.mxu0 %v168
    %v312 = vpop.f32.mrf.mxu0
    %v313 = vadd.f32 0.0, %v312
    %v314 = vpop.f32.mrf.mxu0
    %v315 = vadd.f32 0.0, %v314
    %316 = vmatprep.mubr.f32.mxu0 0.0
    %317 = vmatmul.mubr.f32.gmra.mxu0 %v171
    %v318 = vpop.f32.mrf.mxu0
    %v319 = vadd.f32 0.0, %v318
    %v320 = vpop.f32.mrf.mxu0
    %v321 = vadd.f32 0.0, %v320
    %322 = vmatprep.mubr.f32.mxu0 0.0
    %323 = vmatmul.mubr.f32.gmra.mxu0 %v174
    %v324 = vpop.f32.mrf.mxu0
    %v325 = vadd.f32 0.0, %v324
    %v326 = vpop.f32.mrf.mxu0
    %v327 = vadd.f32 0.0, %v326
    %328 = vmatprep.mubr.f32.mxu0 0.0
    %329 = vmatmul.mubr.f32.gmra.mxu0 %v177
    %v330 = vpop.f32.mrf.mxu0
    %v331 = vadd.f32 0.0, %v330
    %v332 = vpop.f32.mrf.mxu0
    %v333 = vadd.f32 0.0, %v332
    %334 = vmatprep.mubr.f32.mxu0 0.0
    %335 = vmatmul.mubr.f32.gmra.mxu0 %v180
    %v336 = vpop.f32.mrf.mxu0
    %v337 = vadd.f32 0.0, %v336
    %v338 = vpop.f32.mrf.mxu0
    %v339 = vadd.f32 0.0, %v338
    %340 = vmatprep.mubr.f32.mxu0 0.0
    %341 = vmatmul.mubr.f32.gmra.mxu0 %v183
    %v342 = vpop.f32.mrf.mxu0
    %v343 = vadd.f32 0.0, %v342
    %v344 = vpop.f32.mrf.mxu0
    %v345 = vadd.f32 0.0, %v344
    %346 = vmatprep.mubr.f32.mxu0 0.0
    %347 = vmatmul.mubr.f32.gmra.mxu0 %v186
    %v348 = vpop.f32.mrf.mxu0
    %v349 = vadd.f32 0.0, %v348
    %v350 = vpop.f32.mrf.mxu0
    %v351 = vadd.f32 0.0, %v350
    %352 = vdwg.mxu0
    %v353 = vmul.f32 %v259, 2.0
    %v354 = vmul.f32 %v261, 2.0
    %v355 = vmul.f32 %v265, 2.0
    %v356 = vmul.f32 %v267, 2.0
    %v357 = vmul.f32 %v271, 2.0
    %v358 = vmul.f32 %v273, 2.0
    %v359 = vmul.f32 %v277, 2.0
    %v360 = vmul.f32 %v279, 2.0
    %v361 = vmul.f32 %v283, 2.0
    %v362 = vmul.f32 %v285, 2.0
    %v363 = vmul.f32 %v289, 2.0
    %v364 = vmul.f32 %v291, 2.0
    %v365 = vmul.f32 %v295, 2.0
    %v366 = vmul.f32 %v297, 2.0
    %v367 = vmul.f32 %v301, 2.0
    %v368 = vmul.f32 %v303, 2.0
    %v369 = vmul.f32 %v307, 2.0
    %v370 = vmul.f32 %v309, 2.0
    %v371 = vmul.f32 %v313, 2.0
    %v372 = vmul.f32 %v315, 2.0
    %v373 = vmul.f32 %v319, 2.0
    %v374 = vmul.f32 %v321, 2.0
    %v375 = vmul.f32 %v325, 2.0
    %v376 = vmul.f32 %v327, 2.0
    %v377 = vmul.f32 %v331, 2.0
    %v378 = vmul.f32 %v333, 2.0
    %v379 = vmul.f32 %v337, 2.0
    %v380 = vmul.f32 %v339, 2.0
    %v381 = vmul.f32 %v343, 2.0
    %v382 = vmul.f32 %v345, 2.0
    %v383 = vmul.f32 %v349, 2.0
    %v384 = vmul.f32 %v351, 2.0
    %v385 = vsub.f32 %v73, %v353
    %v386 = vsub.f32 %v73, %v354
    %v387 = vsub.f32 %v76, %v355
    %v388 = vsub.f32 %v76, %v356
    %v389 = vsub.f32 %v79, %v357
    %v390 = vsub.f32 %v79, %v358
    %v391 = vsub.f32 %v82, %v359
    %v392 = vsub.f32 %v82, %v360
    %v393 = vsub.f32 %v85, %v361
    %v394 = vsub.f32 %v85, %v362
    %v395 = vsub.f32 %v88, %v363
    %v396 = vsub.f32 %v88, %v364
    %v397 = vsub.f32 %v91, %v365
    %v398 = vsub.f32 %v91, %v366
    %v399 = vsub.f32 %v94, %v367
    %v400 = vsub.f32 %v94, %v368
    %v401 = vsub.f32 %v97, %v369
    %v402 = vsub.f32 %v97, %v370
    %v403 = vsub.f32 %v100, %v371
    %v404 = vsub.f32 %v100, %v372
    %v405 = vsub.f32 %v103, %v373
    %v406 = vsub.f32 %v103, %v374
    %v407 = vsub.f32 %v106, %v375
    %v408 = vsub.f32 %v106, %v376
    %v409 = vsub.f32 %v109, %v377
    %v410 = vsub.f32 %v109, %v378
    %v411 = vsub.f32 %v112, %v379
    %v412 = vsub.f32 %v112, %v380
    %v413 = vsub.f32 %v115, %v381
    %v414 = vsub.f32 %v115, %v382
    %v415 = vsub.f32 %v118, %v383
    %v416 = vsub.f32 %v118, %v384
    %v417 = vadd.f32 %v385, %v130
    %v418 = vadd.f32 %v386, %v137
    %v419 = vadd.f32 %v387, %v130
    %v420 = vadd.f32 %v388, %v137
    %v421 = vadd.f32 %v389, %v130
    %v422 = vadd.f32 %v390, %v137
    %v423 = vadd.f32 %v391, %v130
    %v424 = vadd.f32 %v392, %v137
    %v425 = vadd.f32 %v393, %v130
    %v426 = vadd.f32 %v394, %v137
    %v427 = vadd.f32 %v395, %v130
    %v428 = vadd.f32 %v396, %v137
    %v429 = vadd.f32 %v397, %v130
    %v430 = vadd.f32 %v398, %v137
    %v431 = vadd.f32 %v399, %v130
    %v432 = vadd.f32 %v400, %v137
    %v433 = vadd.f32 %v401, %v130
    %v434 = vadd.f32 %v402, %v137
    %v435 = vadd.f32 %v403, %v130
    %v436 = vadd.f32 %v404, %v137
    %v437 = vadd.f32 %v405, %v130
    %v438 = vadd.f32 %v406, %v137
    %v439 = vadd.f32 %v407, %v130
    %v440 = vadd.f32 %v408, %v137
    %v441 = vadd.f32 %v409, %v130
    %v442 = vadd.f32 %v410, %v137
    %v443 = vadd.f32 %v411, %v130
    %v444 = vadd.f32 %v412, %v137
    %v445 = vadd.f32 %v413, %v130
    %v446 = vadd.f32 %v414, %v137
    %v447 = vadd.f32 %v415, %v130
    %v448 = vadd.f32 %v416, %v137
    %v449 = vmin.f32 %v417, %v418
    %450 = vmin.xlane.f32.xlu0 %v449
    %v451 = vpop.xlane.xlu0 %450
    %v452 = vmin.f32 %v419, %v420
    %453 = vmin.xlane.f32.xlu0 %v452
    %v454 = vpop.xlane.xlu0 %453
    %v455 = vmin.f32 %v421, %v422
    %456 = vmin.xlane.f32.xlu0 %v455
    %v457 = vpop.xlane.xlu0 %456
    %v458 = vmin.f32 %v423, %v424
    %459 = vmin.xlane.f32.xlu0 %v458
    %v460 = vpop.xlane.xlu0 %459
    %v461 = vmin.f32 %v425, %v426
    %462 = vmin.xlane.f32.xlu0 %v461
    %v463 = vpop.xlane.xlu0 %462
    %v464 = vmin.f32 %v427, %v428
    %465 = vmin.xlane.f32.xlu0 %v464
    %v466 = vpop.xlane.xlu0 %465
    %v467 = vmin.f32 %v429, %v430
    %468 = vmin.xlane.f32.xlu0 %v467
    %v469 = vpop.xlane.xlu0 %468
    %v470 = vmin.f32 %v431, %v432
    %471 = vmin.xlane.f32.xlu0 %v470
    %v472 = vpop.xlane.xlu0 %471
    %v473 = vmin.f32 %v433, %v434
    %474 = vmin.xlane.f32.xlu0 %v473
    %v475 = vpop.xlane.xlu0 %474
    %v476 = vmin.f32 %v435, %v436
    %477 = vmin.xlane.f32.xlu0 %v476
    %v478 = vpop.xlane.xlu0 %477
    %v479 = vmin.f32 %v437, %v438
    %480 = vmin.xlane.f32.xlu0 %v479
    %v481 = vpop.xlane.xlu0 %480
    %v482 = vmin.f32 %v439, %v440
    %483 = vmin.xlane.f32.xlu0 %v482
    %v484 = vpop.xlane.xlu0 %483
    %v485 = vmin.f32 %v441, %v442
    %486 = vmin.xlane.f32.xlu0 %v485
    %v487 = vpop.xlane.xlu0 %486
    %v488 = vmin.f32 %v443, %v444
    %489 = vmin.xlane.f32.xlu0 %v488
    %v490 = vpop.xlane.xlu0 %489
    %v491 = vmin.f32 %v445, %v446
    %492 = vmin.xlane.f32.xlu0 %v491
    %v493 = vpop.xlane.xlu0 %492
    %v494 = vmin.f32 %v447, %v448
    %495 = vmin.xlane.f32.xlu0 %v494
    %v496 = vpop.xlane.xlu0 %495
    %vm497 = vcmp.eq.f32.partialorder %v417, %v451
    %vm498 = vcmp.eq.f32.partialorder %v418, %v451
    %vm499 = vcmp.eq.f32.partialorder %v419, %v454
    %vm500 = vcmp.eq.f32.partialorder %v420, %v454
    %vm501 = vcmp.eq.f32.partialorder %v421, %v457
    %vm502 = vcmp.eq.f32.partialorder %v422, %v457
    %vm503 = vcmp.eq.f32.partialorder %v423, %v460
    %vm504 = vcmp.eq.f32.partialorder %v424, %v460
    %vm505 = vcmp.eq.f32.partialorder %v425, %v463
    %vm506 = vcmp.eq.f32.partialorder %v426, %v463
    %vm507 = vcmp.eq.f32.partialorder %v427, %v466
    %vm508 = vcmp.eq.f32.partialorder %v428, %v466
    %vm509 = vcmp.eq.f32.partialorder %v429, %v469
    %vm510 = vcmp.eq.f32.partialorder %v430, %v469
    %vm511 = vcmp.eq.f32.partialorder %v431, %v472
    %vm512 = vcmp.eq.f32.partialorder %v432, %v472
    %vm513 = vcmp.eq.f32.partialorder %v433, %v475
    %vm514 = vcmp.eq.f32.partialorder %v434, %v475
    %vm515 = vcmp.eq.f32.partialorder %v435, %v478
    %vm516 = vcmp.eq.f32.partialorder %v436, %v478
    %vm517 = vcmp.eq.f32.partialorder %v437, %v481
    %vm518 = vcmp.eq.f32.partialorder %v438, %v481
    %vm519 = vcmp.eq.f32.partialorder %v439, %v484
    %vm520 = vcmp.eq.f32.partialorder %v440, %v484
    %vm521 = vcmp.eq.f32.partialorder %v441, %v487
    %vm522 = vcmp.eq.f32.partialorder %v442, %v487
    %vm523 = vcmp.eq.f32.partialorder %v443, %v490
    %vm524 = vcmp.eq.f32.partialorder %v444, %v490
    %vm525 = vcmp.eq.f32.partialorder %v445, %v493
    %vm526 = vcmp.eq.f32.partialorder %v446, %v493
    %vm527 = vcmp.eq.f32.partialorder %v447, %v496
    %vm528 = vcmp.eq.f32.partialorder %v448, %v496
    %v529 = vsel %vm497, %v33, 256
    %v530 = vsel %vm498, %v34, 256
    %v531 = vsel %vm499, %v33, 256
    %v532 = vsel %vm500, %v34, 256
    %v533 = vsel %vm501, %v33, 256
    %v534 = vsel %vm502, %v34, 256
    %v535 = vsel %vm503, %v33, 256
    %v536 = vsel %vm504, %v34, 256
    %v537 = vsel %vm505, %v33, 256
    %v538 = vsel %vm506, %v34, 256
    %v539 = vsel %vm507, %v33, 256
    %v540 = vsel %vm508, %v34, 256
    %v541 = vsel %vm509, %v33, 256
    %v542 = vsel %vm510, %v34, 256
    %v543 = vsel %vm511, %v33, 256
    %v544 = vsel %vm512, %v34, 256
    %v545 = vsel %vm513, %v33, 256
    %v546 = vsel %vm514, %v34, 256
    %v547 = vsel %vm515, %v33, 256
    %v548 = vsel %vm516, %v34, 256
    %v549 = vsel %vm517, %v33, 256
    %v550 = vsel %vm518, %v34, 256
    %v551 = vsel %vm519, %v33, 256
    %v552 = vsel %vm520, %v34, 256
    %v553 = vsel %vm521, %v33, 256
    %v554 = vsel %vm522, %v34, 256
    %v555 = vsel %vm523, %v33, 256
    %v556 = vsel %vm524, %v34, 256
    %v557 = vsel %vm525, %v33, 256
    %v558 = vsel %vm526, %v34, 256
    %v559 = vsel %vm527, %v33, 256
    %v560 = vsel %vm528, %v34, 256
    %vm561 = vcmp.lt.s32.totalorder %v529, %v530
    %v562 = vsel %vm561, %v529, %v530
    %v563 = vand.u32 %v562, 65535
    %v564 = vshra.s32 %v562, 16
    %v565 = vcvt.s32.f32 %v563
    %v566 = vcvt.s32.f32 %v564
    %567 = vmin.xlane.f32.xlu0 %v566
    %v568 = vpop.xlane.xlu0 %567
    %vm569 = vcmp.eq.f32.partialorder %v566, %v568
    %v570 = vsel %vm569, %v565, inf
    %571 = vmin.xlane.f32.xlu0 %v570
    %v572 = vpop.xlane.xlu0 %571
    %v573 = vcvt.f32.s32 %v572
    %v574 = vcvt.f32.s32 %v568
    %v575 = vshll.u32 %v574, 16
    %v576 = vadd.s32 %v575, %v573
    %vm577 = vcmp.lt.s32.totalorder %v531, %v532
    %v578 = vsel %vm577, %v531, %v532
    %v579 = vand.u32 %v578, 65535
    %v580 = vshra.s32 %v578, 16
    %v581 = vcvt.s32.f32 %v579
    %v582 = vcvt.s32.f32 %v580
    %583 = vmin.xlane.f32.xlu0 %v582
    %v584 = vpop.xlane.xlu0 %583
    %vm585 = vcmp.eq.f32.partialorder %v582, %v584
    %v586 = vsel %vm585, %v581, inf
    %587 = vmin.xlane.f32.xlu0 %v586
    %v588 = vpop.xlane.xlu0 %587
    %v589 = vcvt.f32.s32 %v588
    %v590 = vcvt.f32.s32 %v584
    %v591 = vshll.u32 %v590, 16
    %v592 = vadd.s32 %v591, %v589
    %vm593 = vcmp.lt.s32.totalorder %v533, %v534
    %v594 = vsel %vm593, %v533, %v534
    %v595 = vand.u32 %v594, 65535
    %v596 = vshra.s32 %v594, 16
    %v597 = vcvt.s32.f32 %v595
    %v598 = vcvt.s32.f32 %v596
    %599 = vmin.xlane.f32.xlu0 %v598
    %v600 = vpop.xlane.xlu0 %599
    %vm601 = vcmp.eq.f32.partialorder %v598, %v600
    %v602 = vsel %vm601, %v597, inf
    %603 = vmin.xlane.f32.xlu0 %v602
    %v604 = vpop.xlane.xlu0 %603
    %v605 = vcvt.f32.s32 %v604
    %v606 = vcvt.f32.s32 %v600
    %v607 = vshll.u32 %v606, 16
    %v608 = vadd.s32 %v607, %v605
    %vm609 = vcmp.lt.s32.totalorder %v535, %v536
    %v610 = vsel %vm609, %v535, %v536
    %v611 = vand.u32 %v610, 65535
    %v612 = vshra.s32 %v610, 16
    %v613 = vcvt.s32.f32 %v611
    %v614 = vcvt.s32.f32 %v612
    %615 = vmin.xlane.f32.xlu0 %v614
    %v616 = vpop.xlane.xlu0 %615
    %vm617 = vcmp.eq.f32.partialorder %v614, %v616
    %v618 = vsel %vm617, %v613, inf
    %619 = vmin.xlane.f32.xlu0 %v618
    %v620 = vpop.xlane.xlu0 %619
    %v621 = vcvt.f32.s32 %v620
    %v622 = vcvt.f32.s32 %v616
    %v623 = vshll.u32 %v622, 16
    %v624 = vadd.s32 %v623, %v621
    %vm625 = vcmp.lt.s32.totalorder %v537, %v538
    %v626 = vsel %vm625, %v537, %v538
    %v627 = vand.u32 %v626, 65535
    %v628 = vshra.s32 %v626, 16
    %v629 = vcvt.s32.f32 %v627
    %v630 = vcvt.s32.f32 %v628
    %631 = vmin.xlane.f32.xlu0 %v630
    %v632 = vpop.xlane.xlu0 %631
    %vm633 = vcmp.eq.f32.partialorder %v630, %v632
    %v634 = vsel %vm633, %v629, inf
    %635 = vmin.xlane.f32.xlu0 %v634
    %v636 = vpop.xlane.xlu0 %635
    %v637 = vcvt.f32.s32 %v636
    %v638 = vcvt.f32.s32 %v632
    %v639 = vshll.u32 %v638, 16
    %v640 = vadd.s32 %v639, %v637
    %vm641 = vcmp.lt.s32.totalorder %v539, %v540
    %v642 = vsel %vm641, %v539, %v540
    %v643 = vand.u32 %v642, 65535
    %v644 = vshra.s32 %v642, 16
    %v645 = vcvt.s32.f32 %v643
    %v646 = vcvt.s32.f32 %v644
    %647 = vmin.xlane.f32.xlu0 %v646
    %v648 = vpop.xlane.xlu0 %647
    %vm649 = vcmp.eq.f32.partialorder %v646, %v648
    %v650 = vsel %vm649, %v645, inf
    %651 = vmin.xlane.f32.xlu0 %v650
    %v652 = vpop.xlane.xlu0 %651
    %v653 = vcvt.f32.s32 %v652
    %v654 = vcvt.f32.s32 %v648
    %v655 = vshll.u32 %v654, 16
    %v656 = vadd.s32 %v655, %v653
    %vm657 = vcmp.lt.s32.totalorder %v541, %v542
    %v658 = vsel %vm657, %v541, %v542
    %v659 = vand.u32 %v658, 65535
    %v660 = vshra.s32 %v658, 16
    %v661 = vcvt.s32.f32 %v659
    %v662 = vcvt.s32.f32 %v660
    %663 = vmin.xlane.f32.xlu0 %v662
    %v664 = vpop.xlane.xlu0 %663
    %vm665 = vcmp.eq.f32.partialorder %v662, %v664
    %v666 = vsel %vm665, %v661, inf
    %667 = vmin.xlane.f32.xlu0 %v666
    %v668 = vpop.xlane.xlu0 %667
    %v669 = vcvt.f32.s32 %v668
    %v670 = vcvt.f32.s32 %v664
    %v671 = vshll.u32 %v670, 16
    %v672 = vadd.s32 %v671, %v669
    %vm673 = vcmp.lt.s32.totalorder %v543, %v544
    %v674 = vsel %vm673, %v543, %v544
    %v675 = vand.u32 %v674, 65535
    %v676 = vshra.s32 %v674, 16
    %v677 = vcvt.s32.f32 %v675
    %v678 = vcvt.s32.f32 %v676
    %679 = vmin.xlane.f32.xlu0 %v678
    %v680 = vpop.xlane.xlu0 %679
    %vm681 = vcmp.eq.f32.partialorder %v678, %v680
    %v682 = vsel %vm681, %v677, inf
    %683 = vmin.xlane.f32.xlu0 %v682
    %v684 = vpop.xlane.xlu0 %683
    %v685 = vcvt.f32.s32 %v684
    %v686 = vcvt.f32.s32 %v680
    %v687 = vshll.u32 %v686, 16
    %v688 = vadd.s32 %v687, %v685
    %vm689 = vcmp.lt.s32.totalorder %v545, %v546
    %v690 = vsel %vm689, %v545, %v546
    %v691 = vand.u32 %v690, 65535
    %v692 = vshra.s32 %v690, 16
    %v693 = vcvt.s32.f32 %v691
    %v694 = vcvt.s32.f32 %v692
    %695 = vmin.xlane.f32.xlu0 %v694
    %v696 = vpop.xlane.xlu0 %695
    %vm697 = vcmp.eq.f32.partialorder %v694, %v696
    %v698 = vsel %vm697, %v693, inf
    %699 = vmin.xlane.f32.xlu0 %v698
    %v700 = vpop.xlane.xlu0 %699
    %v701 = vcvt.f32.s32 %v700
    %v702 = vcvt.f32.s32 %v696
    %v703 = vshll.u32 %v702, 16
    %v704 = vadd.s32 %v703, %v701
    %vm705 = vcmp.lt.s32.totalorder %v547, %v548
    %v706 = vsel %vm705, %v547, %v548
    %v707 = vand.u32 %v706, 65535
    %v708 = vshra.s32 %v706, 16
    %v709 = vcvt.s32.f32 %v707
    %v710 = vcvt.s32.f32 %v708
    %711 = vmin.xlane.f32.xlu0 %v710
    %v712 = vpop.xlane.xlu0 %711
    %vm713 = vcmp.eq.f32.partialorder %v710, %v712
    %v714 = vsel %vm713, %v709, inf
    %715 = vmin.xlane.f32.xlu0 %v714
    %v716 = vpop.xlane.xlu0 %715
    %v717 = vcvt.f32.s32 %v716
    %v718 = vcvt.f32.s32 %v712
    %v719 = vshll.u32 %v718, 16
    %v720 = vadd.s32 %v719, %v717
    %vm721 = vcmp.lt.s32.totalorder %v549, %v550
    %v722 = vsel %vm721, %v549, %v550
    %v723 = vand.u32 %v722, 65535
    %v724 = vshra.s32 %v722, 16
    %v725 = vcvt.s32.f32 %v723
    %v726 = vcvt.s32.f32 %v724
    %727 = vmin.xlane.f32.xlu0 %v726
    %v728 = vpop.xlane.xlu0 %727
    %vm729 = vcmp.eq.f32.partialorder %v726, %v728
    %v730 = vsel %vm729, %v725, inf
    %731 = vmin.xlane.f32.xlu0 %v730
    %v732 = vpop.xlane.xlu0 %731
    %v733 = vcvt.f32.s32 %v732
    %v734 = vcvt.f32.s32 %v728
    %v735 = vshll.u32 %v734, 16
    %v736 = vadd.s32 %v735, %v733
    %vm737 = vcmp.lt.s32.totalorder %v551, %v552
    %v738 = vsel %vm737, %v551, %v552
    %v739 = vand.u32 %v738, 65535
    %v740 = vshra.s32 %v738, 16
    %v741 = vcvt.s32.f32 %v739
    %v742 = vcvt.s32.f32 %v740
    %743 = vmin.xlane.f32.xlu0 %v742
    %v744 = vpop.xlane.xlu0 %743
    %vm745 = vcmp.eq.f32.partialorder %v742, %v744
    %v746 = vsel %vm745, %v741, inf
    %747 = vmin.xlane.f32.xlu0 %v746
    %v748 = vpop.xlane.xlu0 %747
    %v749 = vcvt.f32.s32 %v748
    %v750 = vcvt.f32.s32 %v744
    %v751 = vshll.u32 %v750, 16
    %v752 = vadd.s32 %v751, %v749
    %vm753 = vcmp.lt.s32.totalorder %v553, %v554
    %v754 = vsel %vm753, %v553, %v554
    %v755 = vand.u32 %v754, 65535
    %v756 = vshra.s32 %v754, 16
    %v757 = vcvt.s32.f32 %v755
    %v758 = vcvt.s32.f32 %v756
    %759 = vmin.xlane.f32.xlu0 %v758
    %v760 = vpop.xlane.xlu0 %759
    %vm761 = vcmp.eq.f32.partialorder %v758, %v760
    %v762 = vsel %vm761, %v757, inf
    %763 = vmin.xlane.f32.xlu0 %v762
    %v764 = vpop.xlane.xlu0 %763
    %v765 = vcvt.f32.s32 %v764
    %v766 = vcvt.f32.s32 %v760
    %v767 = vshll.u32 %v766, 16
    %v768 = vadd.s32 %v767, %v765
    %vm769 = vcmp.lt.s32.totalorder %v555, %v556
    %v770 = vsel %vm769, %v555, %v556
    %v771 = vand.u32 %v770, 65535
    %v772 = vshra.s32 %v770, 16
    %v773 = vcvt.s32.f32 %v771
    %v774 = vcvt.s32.f32 %v772
    %775 = vmin.xlane.f32.xlu0 %v774
    %v776 = vpop.xlane.xlu0 %775
    %vm777 = vcmp.eq.f32.partialorder %v774, %v776
    %v778 = vsel %vm777, %v773, inf
    %779 = vmin.xlane.f32.xlu0 %v778
    %v780 = vpop.xlane.xlu0 %779
    %v781 = vcvt.f32.s32 %v780
    %v782 = vcvt.f32.s32 %v776
    %v783 = vshll.u32 %v782, 16
    %v784 = vadd.s32 %v783, %v781
    %vm785 = vcmp.lt.s32.totalorder %v557, %v558
    %v786 = vsel %vm785, %v557, %v558
    %v787 = vand.u32 %v786, 65535
    %v788 = vshra.s32 %v786, 16
    %v789 = vcvt.s32.f32 %v787
    %v790 = vcvt.s32.f32 %v788
    %791 = vmin.xlane.f32.xlu0 %v790
    %v792 = vpop.xlane.xlu0 %791
    %vm793 = vcmp.eq.f32.partialorder %v790, %v792
    %v794 = vsel %vm793, %v789, inf
    %795 = vmin.xlane.f32.xlu0 %v794
    %v796 = vpop.xlane.xlu0 %795
    %v797 = vcvt.f32.s32 %v796
    %v798 = vcvt.f32.s32 %v792
    %v799 = vshll.u32 %v798, 16
    %v800 = vadd.s32 %v799, %v797
    %vm801 = vcmp.lt.s32.totalorder %v559, %v560
    %v802 = vsel %vm801, %v559, %v560
    %v803 = vand.u32 %v802, 65535
    %v804 = vshra.s32 %v802, 16
    %v805 = vcvt.s32.f32 %v803
    %v806 = vcvt.s32.f32 %v804
    %807 = vmin.xlane.f32.xlu0 %v806
    %v808 = vpop.xlane.xlu0 %807
    %vm809 = vcmp.eq.f32.partialorder %v806, %v808
    %v810 = vsel %vm809, %v805, inf
    %811 = vmin.xlane.f32.xlu0 %v810
    %v812 = vpop.xlane.xlu0 %811
    %v813 = vcvt.f32.s32 %v812
    %v814 = vcvt.f32.s32 %v808
    %v815 = vshll.u32 %v814, 16
    %v816 = vadd.s32 %v815, %v813
    %v817 = vmin.f32 %v417, %v421
    %v818 = vmin.f32 %v419, %v423
    %v819 = vmin.f32 %v817, %v425
    %v820 = vmin.f32 %v818, %v427
    %v821 = vmin.f32 %v819, %v429
    %v822 = vmin.f32 %v820, %v431
    %v823 = vmin.f32 %v821, %v433
    %v824 = vmin.f32 %v822, %v435
    %v825 = vmin.f32 %v823, %v437
    %v826 = vmin.f32 %v824, %v439
    %v827 = vmin.f32 %v825, %v441
    %v828 = vmin.f32 %v826, %v443
    %v829 = vmin.f32 %v827, %v445
    %v830 = vmin.f32 %v828, %v447
    %v831 = vmin.f32 %v829, %v830
    %v832 = vrot.slane %v831, 4
    %v833 = vmin.f32 %v831, %v832
    %v834 = vrot.slane %v833, 2
    %v835 = vmin.f32 %v833, %v834
    %v836 = vrot.slane %v835, 1
    %v837 = vmin.f32 %v835, %v836
    %v838 = vmin.f32 %v418, %v422
    %v839 = vmin.f32 %v420, %v424
    %v840 = vmin.f32 %v838, %v426
    %v841 = vmin.f32 %v839, %v428
    %v842 = vmin.f32 %v840, %v430
    %v843 = vmin.f32 %v841, %v432
    %v844 = vmin.f32 %v842, %v434
    %v845 = vmin.f32 %v843, %v436
    %v846 = vmin.f32 %v844, %v438
    %v847 = vmin.f32 %v845, %v440
    %v848 = vmin.f32 %v846, %v442
    %v849 = vmin.f32 %v847, %v444
    %v850 = vmin.f32 %v848, %v446
    %v851 = vmin.f32 %v849, %v448
    %v852 = vmin.f32 %v850, %v851
    %v853 = vrot.slane %v852, 4
    %v854 = vmin.f32 %v852, %v853
    %v855 = vrot.slane %v854, 2
    %v856 = vmin.f32 %v854, %v855
    %v857 = vrot.slane %v856, 1
    %v858 = vmin.f32 %v856, %v857
    %vm859 = vcmp.eq.f32.partialorder %v417, %v837
    %vm860 = vcmp.eq.f32.partialorder %v418, %v858
    %vm861 = vcmp.eq.f32.partialorder %v419, %v837
    %vm862 = vcmp.eq.f32.partialorder %v420, %v858
    %vm863 = vcmp.eq.f32.partialorder %v421, %v837
    %vm864 = vcmp.eq.f32.partialorder %v422, %v858
    %vm865 = vcmp.eq.f32.partialorder %v423, %v837
    %vm866 = vcmp.eq.f32.partialorder %v424, %v858
    %vm867 = vcmp.eq.f32.partialorder %v425, %v837
    %vm868 = vcmp.eq.f32.partialorder %v426, %v858
    %vm869 = vcmp.eq.f32.partialorder %v427, %v837
    %vm870 = vcmp.eq.f32.partialorder %v428, %v858
    %vm871 = vcmp.eq.f32.partialorder %v429, %v837
    %vm872 = vcmp.eq.f32.partialorder %v430, %v858
    %vm873 = vcmp.eq.f32.partialorder %v431, %v837
    %vm874 = vcmp.eq.f32.partialorder %v432, %v858
    %vm875 = vcmp.eq.f32.partialorder %v433, %v837
    %vm876 = vcmp.eq.f32.partialorder %v434, %v858
    %vm877 = vcmp.eq.f32.partialorder %v435, %v837
    %vm878 = vcmp.eq.f32.partialorder %v436, %v858
    %vm879 = vcmp.eq.f32.partialorder %v437, %v837
    %vm880 = vcmp.eq.f32.partialorder %v438, %v858
    %vm881 = vcmp.eq.f32.partialorder %v439, %v837
    %vm882 = vcmp.eq.f32.partialorder %v440, %v858
    %vm883 = vcmp.eq.f32.partialorder %v441, %v837
    %vm884 = vcmp.eq.f32.partialorder %v442, %v858
    %vm885 = vcmp.eq.f32.partialorder %v443, %v837
    %vm886 = vcmp.eq.f32.partialorder %v444, %v858
    %vm887 = vcmp.eq.f32.partialorder %v445, %v837
    %vm888 = vcmp.eq.f32.partialorder %v446, %v858
    %vm889 = vcmp.eq.f32.partialorder %v447, %v837
    %vm890 = vcmp.eq.f32.partialorder %v448, %v858
    %v891 = vsel %vm859, %v16, 128
    %v892 = vsel %vm860, %v16, 128
    %v893 = vsel %vm861, %v17, 128
    %v894 = vsel %vm862, %v17, 128
    %v895 = vsel %vm863, %v18, 128
    %v896 = vsel %vm864, %v18, 128
    %v897 = vsel %vm865, %v19, 128
    %v898 = vsel %vm866, %v19, 128
    %v899 = vsel %vm867, %v20, 128
    %v900 = vsel %vm868, %v20, 128
    %v901 = vsel %vm869, %v21, 128
    %v902 = vsel %vm870, %v21, 128
    %v903 = vsel %vm871, %v22, 128
    %v904 = vsel %vm872, %v22, 128
    %v905 = vsel %vm873, %v23, 128
    %v906 = vsel %vm874, %v23, 128
    %v907 = vsel %vm875, %v24, 128
    %v908 = vsel %vm876, %v24, 128
    %v909 = vsel %vm877, %v25, 128
    %v910 = vsel %vm878, %v25, 128
    %v911 = vsel %vm879, %v26, 128
    %v912 = vsel %vm880, %v26, 128
    %v913 = vsel %vm881, %v27, 128
    %v914 = vsel %vm882, %v27, 128
    %v915 = vsel %vm883, %v28, 128
    %v916 = vsel %vm884, %v28, 128
    %v917 = vsel %vm885, %v29, 128
    %v918 = vsel %vm886, %v29, 128
    %v919 = vsel %vm887, %v30, 128
    %v920 = vsel %vm888, %v30, 128
    %v921 = vsel %vm889, %v31, 128
    %v922 = vsel %vm890, %v31, 128
    %vm923 = vcmp.lt.s32.totalorder %v891, %v895
    %v924 = vsel %vm923, %v891, %v895
    %vm925 = vcmp.lt.s32.totalorder %v893, %v897
    %v926 = vsel %vm925, %v893, %v897
    %vm927 = vcmp.lt.s32.totalorder %v924, %v899
    %v928 = vsel %vm927, %v924, %v899
    %vm929 = vcmp.lt.s32.totalorder %v926, %v901
    %v930 = vsel %vm929, %v926, %v901
    %vm931 = vcmp.lt.s32.totalorder %v928, %v903
    %v932 = vsel %vm931, %v928, %v903
    %vm933 = vcmp.lt.s32.totalorder %v930, %v905
    %v934 = vsel %vm933, %v930, %v905
    %vm935 = vcmp.lt.s32.totalorder %v932, %v907
    %v936 = vsel %vm935, %v932, %v907
    %vm937 = vcmp.lt.s32.totalorder %v934, %v909
    %v938 = vsel %vm937, %v934, %v909
    %vm939 = vcmp.lt.s32.totalorder %v936, %v911
    %v940 = vsel %vm939, %v936, %v911
    %vm941 = vcmp.lt.s32.totalorder %v938, %v913
    %v942 = vsel %vm941, %v938, %v913
    %vm943 = vcmp.lt.s32.totalorder %v940, %v915
    %v944 = vsel %vm943, %v940, %v915
    %vm945 = vcmp.lt.s32.totalorder %v942, %v917
    %v946 = vsel %vm945, %v942, %v917
    %vm947 = vcmp.lt.s32.totalorder %v944, %v919
    %v948 = vsel %vm947, %v944, %v919
    %vm949 = vcmp.lt.s32.totalorder %v946, %v921
    %v950 = vsel %vm949, %v946, %v921
    %vm951 = vcmp.lt.s32.totalorder %v948, %v950
    %v952 = vsel %vm951, %v948, %v950
    %v953 = vrot.slane %v952, 4
    %vm954 = vcmp.lt.s32.totalorder %v952, %v953
    %v955 = vsel %vm954, %v952, %v953
    %v956 = vrot.slane %v955, 2
    %vm957 = vcmp.lt.s32.totalorder %v955, %v956
    %v958 = vsel %vm957, %v955, %v956
    %v959 = vrot.slane %v958, 1
    %vm960 = vcmp.lt.s32.totalorder %v958, %v959
    %v961 = vsel %vm960, %v958, %v959
    %vm962 = vcmp.lt.s32.totalorder %v892, %v896
    %v963 = vsel %vm962, %v892, %v896
    %vm964 = vcmp.lt.s32.totalorder %v894, %v898
    %v965 = vsel %vm964, %v894, %v898
    %vm966 = vcmp.lt.s32.totalorder %v963, %v900
    %v967 = vsel %vm966, %v963, %v900
    %vm968 = vcmp.lt.s32.totalorder %v965, %v902
    %v969 = vsel %vm968, %v965, %v902
    %vm970 = vcmp.lt.s32.totalorder %v967, %v904
    %v971 = vsel %vm970, %v967, %v904
    %vm972 = vcmp.lt.s32.totalorder %v969, %v906
    %v973 = vsel %vm972, %v969, %v906
    %vm974 = vcmp.lt.s32.totalorder %v971, %v908
    %v975 = vsel %vm974, %v971, %v908
    %vm976 = vcmp.lt.s32.totalorder %v973, %v910
    %v977 = vsel %vm976, %v973, %v910
    %vm978 = vcmp.lt.s32.totalorder %v975, %v912
    %v979 = vsel %vm978, %v975, %v912
    %vm980 = vcmp.lt.s32.totalorder %v977, %v914
    %v981 = vsel %vm980, %v977, %v914
    %vm982 = vcmp.lt.s32.totalorder %v979, %v916
    %v983 = vsel %vm982, %v979, %v916
    %vm984 = vcmp.lt.s32.totalorder %v981, %v918
    %v985 = vsel %vm984, %v981, %v918
    %vm986 = vcmp.lt.s32.totalorder %v983, %v920
    %v987 = vsel %vm986, %v983, %v920
    %vm988 = vcmp.lt.s32.totalorder %v985, %v922
    %v989 = vsel %vm988, %v985, %v922
    %vm990 = vcmp.lt.s32.totalorder %v987, %v989
    %v991 = vsel %vm990, %v987, %v989
    %v992 = vrot.slane %v991, 4
    %vm993 = vcmp.lt.s32.totalorder %v991, %v992
    %v994 = vsel %vm993, %v991, %v992
    %v995 = vrot.slane %v994, 2
    %vm996 = vcmp.lt.s32.totalorder %v994, %v995
    %v997 = vsel %vm996, %v994, %v995
    %v998 = vrot.slane %v997, 1
    %vm999 = vcmp.lt.s32.totalorder %v997, %v998
    %v1000 = vsel %vm999, %v997, %v998
    %vm1001 = vcmp.eq.s32.totalorder %v16, %v961
    %vm1002 = vcmp.eq.s32.totalorder %v16, %v1000
    %vm1003 = vcmp.eq.s32.totalorder %v17, %v961
    %vm1004 = vcmp.eq.s32.totalorder %v17, %v1000
    %vm1005 = vcmp.eq.s32.totalorder %v18, %v961
    %vm1006 = vcmp.eq.s32.totalorder %v18, %v1000
    %vm1007 = vcmp.eq.s32.totalorder %v19, %v961
    %vm1008 = vcmp.eq.s32.totalorder %v19, %v1000
    %vm1009 = vcmp.eq.s32.totalorder %v20, %v961
    %vm1010 = vcmp.eq.s32.totalorder %v20, %v1000
    %vm1011 = vcmp.eq.s32.totalorder %v21, %v961
    %vm1012 = vcmp.eq.s32.totalorder %v21, %v1000
    %vm1013 = vcmp.eq.s32.totalorder %v22, %v961
    %vm1014 = vcmp.eq.s32.totalorder %v22, %v1000
    %vm1015 = vcmp.eq.s32.totalorder %v23, %v961
    %vm1016 = vcmp.eq.s32.totalorder %v23, %v1000
    %vm1017 = vcmp.eq.s32.totalorder %v24, %v961
    %vm1018 = vcmp.eq.s32.totalorder %v24, %v1000
    %vm1019 = vcmp.eq.s32.totalorder %v25, %v961
    %vm1020 = vcmp.eq.s32.totalorder %v25, %v1000
    %vm1021 = vcmp.eq.s32.totalorder %v26, %v961
    %vm1022 = vcmp.eq.s32.totalorder %v26, %v1000
    %vm1023 = vcmp.eq.s32.totalorder %v27, %v961
    %vm1024 = vcmp.eq.s32.totalorder %v27, %v1000
    %vm1025 = vcmp.eq.s32.totalorder %v28, %v961
    %vm1026 = vcmp.eq.s32.totalorder %v28, %v1000
    %vm1027 = vcmp.eq.s32.totalorder %v29, %v961
    %vm1028 = vcmp.eq.s32.totalorder %v29, %v1000
    %vm1029 = vcmp.eq.s32.totalorder %v30, %v961
    %vm1030 = vcmp.eq.s32.totalorder %v30, %v1000
    %vm1031 = vcmp.eq.s32.totalorder %v31, %v961
    %vm1032 = vcmp.eq.s32.totalorder %v31, %v1000
    %v1033 = vsel %vm1001, 1, 0
    %v1034 = vsel %vm1002, 1, 0
    %v1035 = vsel %vm1003, 1, 0
    %v1036 = vsel %vm1004, 1, 0
    %v1037 = vsel %vm1005, 1, 0
    %v1038 = vsel %vm1006, 1, 0
    %v1039 = vsel %vm1007, 1, 0
    %v1040 = vsel %vm1008, 1, 0
    %v1041 = vsel %vm1009, 1, 0
    %v1042 = vsel %vm1010, 1, 0
    %v1043 = vsel %vm1011, 1, 0
    %v1044 = vsel %vm1012, 1, 0
    %v1045 = vsel %vm1013, 1, 0
    %v1046 = vsel %vm1014, 1, 0
    %v1047 = vsel %vm1015, 1, 0
    %v1048 = vsel %vm1016, 1, 0
    %v1049 = vsel %vm1017, 1, 0
    %v1050 = vsel %vm1018, 1, 0
    %v1051 = vsel %vm1019, 1, 0
    %v1052 = vsel %vm1020, 1, 0
    %v1053 = vsel %vm1021, 1, 0
    %v1054 = vsel %vm1022, 1, 0
    %v1055 = vsel %vm1023, 1, 0
    %v1056 = vsel %vm1024, 1, 0
    %v1057 = vsel %vm1025, 1, 0
    %v1058 = vsel %vm1026, 1, 0
    %v1059 = vsel %vm1027, 1, 0
    %v1060 = vsel %vm1028, 1, 0
    %v1061 = vsel %vm1029, 1, 0
    %v1062 = vsel %vm1030, 1, 0
    %v1063 = vsel %vm1031, 1, 0
    %v1064 = vsel %vm1032, 1, 0
    %v1065 = vcvt.s32.f32 %v1033
    %v1066 = vcvt.s32.f32 %v1034
    %v1067 = vcvt.s32.f32 %v1035
    %v1068 = vcvt.s32.f32 %v1036
    %v1069 = vcvt.s32.f32 %v1037
    %v1070 = vcvt.s32.f32 %v1038
    %v1071 = vcvt.s32.f32 %v1039
    %v1072 = vcvt.s32.f32 %v1040
    %v1073 = vcvt.s32.f32 %v1041
    %v1074 = vcvt.s32.f32 %v1042
    %v1075 = vcvt.s32.f32 %v1043
    %v1076 = vcvt.s32.f32 %v1044
    %v1077 = vcvt.s32.f32 %v1045
    %v1078 = vcvt.s32.f32 %v1046
    %v1079 = vcvt.s32.f32 %v1047
    %v1080 = vcvt.s32.f32 %v1048
    %v1081 = vcvt.s32.f32 %v1049
    %v1082 = vcvt.s32.f32 %v1050
    %v1083 = vcvt.s32.f32 %v1051
    %v1084 = vcvt.s32.f32 %v1052
    %v1085 = vcvt.s32.f32 %v1053
    %v1086 = vcvt.s32.f32 %v1054
    %v1087 = vcvt.s32.f32 %v1055
    %v1088 = vcvt.s32.f32 %v1056
    %v1089 = vcvt.s32.f32 %v1057
    %v1090 = vcvt.s32.f32 %v1058
    %v1091 = vcvt.s32.f32 %v1059
    %v1092 = vcvt.s32.f32 %v1060
    %v1093 = vcvt.s32.f32 %v1061
    %v1094 = vcvt.s32.f32 %v1062
    %v1095 = vcvt.s32.f32 %v1063
    %v1096 = vcvt.s32.f32 %v1064
    %1097 = vmatprep.subr.mxu0 %v1096
    %1098 = vmatpush1.xpose.msra.mxu0 %v1095
    %1099 = vmatprep.subr.mxu0 %v1094
    %1100 = vmatpush1.xpose.msra.mxu0 %v1093
    %1101 = vmatprep.subr.mxu0 %v1092
    %1102 = vmatpush1.xpose.msra.mxu0 %v1091
    %1103 = vmatprep.subr.mxu0 %v1090
    %1104 = vmatpush1.xpose.msra.mxu0 %v1089
    %1105 = vmatprep.subr.mxu0 %v1088
    %1106 = vmatpush1.xpose.msra.mxu0 %v1087
    %1107 = vmatprep.subr.mxu0 %v1086
    %1108 = vmatpush1.xpose.msra.mxu0 %v1085
    %1109 = vmatprep.subr.mxu0 %v1084
    %1110 = vmatpush1.xpose.msra.mxu0 %v1083
    %1111 = vmatprep.subr.mxu0 %v1082
    %1112 = vmatpush1.xpose.msra.mxu0 %v1081
    %1113 = vmatprep.subr.mxu0 %v1080
    %1114 = vmatpush1.xpose.msra.mxu0 %v1079
    %1115 = vmatprep.subr.mxu0 %v1078
    %1116 = vmatpush1.xpose.msra.mxu0 %v1077
    %1117 = vmatprep.subr.mxu0 %v1076
    %1118 = vmatpush1.xpose.msra.mxu0 %v1075
    %1119 = vmatprep.subr.mxu0 %v1074
    %1120 = vmatpush1.xpose.msra.mxu0 %v1073
    %1121 = vmatprep.subr.mxu0 %v1072
    %1122 = vmatpush1.xpose.msra.mxu0 %v1071
    %1123 = vmatprep.subr.mxu0 %v1070
    %1124 = vmatpush1.xpose.msra.mxu0 %v1069
    %1125 = vmatprep.subr.mxu0 %v1068
    %1126 = vmatpush1.xpose.msra.mxu0 %v1067
    %1127 = vmatprep.subr.mxu0 %v1066
    %1128 = vmatpush1.xpose.msra.mxu0 %v1065
    %1129 = vmatprep.subr.mxu0 0.0
    %1130 = vmatpush2.xpose.msra.mxu0 0.0
    %1131 = vmatprep.subr.mxu0 0.0
    %1132 = vmatpush2.xpose.msra.mxu0 0.0
    %1133 = vmatprep.subr.mxu0 0.0
    %1134 = vmatpush2.xpose.msra.mxu0 0.0
    %1135 = vmatprep.subr.mxu0 0.0
    %1136 = vmatpush2.xpose.msra.mxu0 0.0
    %1137 = vmatprep.subr.mxu0 0.0
    %1138 = vmatpush2.xpose.msra.mxu0 0.0
    %1139 = vmatprep.subr.mxu0 0.0
    %1140 = vmatpush2.xpose.msra.mxu0 0.0
    %1141 = vmatprep.subr.mxu0 0.0
    %1142 = vmatpush2.xpose.msra.mxu0 0.0
    %1143 = vmatprep.subr.mxu0 0.0
    %1144 = vmatpush2.xpose.msra.mxu0 0.0
    %1145 = vmatprep.subr.mxu0 0.0
    %1146 = vmatpush2.xpose.msra.mxu0 0.0
    %1147 = vmatprep.subr.mxu0 0.0
    %1148 = vmatpush2.xpose.msra.mxu0 0.0
    %1149 = vmatprep.subr.mxu0 0.0
    %1150 = vmatpush2.xpose.msra.mxu0 0.0
    %1151 = vmatprep.subr.mxu0 0.0
    %1152 = vmatpush2.xpose.msra.mxu0 0.0
    %1153 = vmatprep.subr.mxu0 0.0
    %1154 = vmatpush2.xpose.msra.mxu0 0.0
    %1155 = vmatprep.subr.mxu0 0.0
    %1156 = vmatpush2.xpose.msra.mxu0 0.0
    %1157 = vmatprep.subr.mxu0 0.0
    %1158 = vmatpush2.xpose.msra.mxu0 0.0
    %1159 = vmatprep.subr.mxu0 0.0
    %1160 = vmatpush2.xpose.msra.mxu0 0.0
    %1161 = vmatprep.mubr.f32.mxu0 1.0
    %1162 = vmatmul.mubr.f32.gmra.mxu0 1.0
    %v1163 = vpop.f32.mrf.mxu0
    %v1164 = vadd.f32 0.0, %v1163
    %v1165 = vpop.f32.mrf.mxu0
    %1166 = vdwg.mxu0
    %v1168 = vrot.slane %v52, 7
    %vm1170 = vcmask 1040384
    %v1171 = vsel %vm1170, %v1164, %v1168
    %1172 = vmatprep.subr.mxu0 %v1096
    %1173 = vmatpush1.msra.mxu0 %v1095
    %1174 = vmatprep.subr.mxu0 %v1094
    %1175 = vmatpush1.msra.mxu0 %v1093
    %1176 = vmatprep.subr.mxu0 %v1092
    %1177 = vmatpush1.msra.mxu0 %v1091
    %1178 = vmatprep.subr.mxu0 %v1090
    %1179 = vmatpush1.msra.mxu0 %v1089
    %1180 = vmatprep.subr.mxu0 %v1088
    %1181 = vmatpush1.msra.mxu0 %v1087
    %1182 = vmatprep.subr.mxu0 %v1086
    %1183 = vmatpush1.msra.mxu0 %v1085
    %1184 = vmatprep.subr.mxu0 %v1084
    %1185 = vmatpush1.msra.mxu0 %v1083
    %1186 = vmatprep.subr.mxu0 %v1082
    %1187 = vmatpush1.msra.mxu0 %v1081
    %1188 = vmatprep.subr.mxu0 %v1080
    %1189 = vmatpush1.msra.mxu0 %v1079
    %1190 = vmatprep.subr.mxu0 %v1078
    %1191 = vmatpush1.msra.mxu0 %v1077
    %1192 = vmatprep.subr.mxu0 %v1076
    %1193 = vmatpush1.msra.mxu0 %v1075
    %1194 = vmatprep.subr.mxu0 %v1074
    %1195 = vmatpush1.msra.mxu0 %v1073
    %1196 = vmatprep.subr.mxu0 %v1072
    %1197 = vmatpush1.msra.mxu0 %v1071
    %1198 = vmatprep.subr.mxu0 %v1070
    %1199 = vmatpush1.msra.mxu0 %v1069
    %1200 = vmatprep.subr.mxu0 %v1068
    %1201 = vmatpush1.msra.mxu0 %v1067
    %1202 = vmatprep.subr.mxu0 %v1066
    %1203 = vmatpush1.msra.mxu0 %v1065
    %1204 = vmatprep.subr.mxu0 0.0
    %1205 = vmatpush2.msra.mxu0 0.0
    %1206 = vmatprep.subr.mxu0 0.0
    %1207 = vmatpush2.msra.mxu0 0.0
    %1208 = vmatprep.subr.mxu0 0.0
    %1209 = vmatpush2.msra.mxu0 0.0
    %1210 = vmatprep.subr.mxu0 0.0
    %1211 = vmatpush2.msra.mxu0 0.0
    %1212 = vmatprep.subr.mxu0 0.0
    %1213 = vmatpush2.msra.mxu0 0.0
    %1214 = vmatprep.subr.mxu0 0.0
    %1215 = vmatpush2.msra.mxu0 0.0
    %1216 = vmatprep.subr.mxu0 0.0
    %1217 = vmatpush2.msra.mxu0 0.0
    %1218 = vmatprep.subr.mxu0 0.0
    %1219 = vmatpush2.msra.mxu0 0.0
    %1220 = vmatprep.subr.mxu0 0.0
    %1221 = vmatpush2.msra.mxu0 0.0
    %1222 = vmatprep.subr.mxu0 0.0
    %1223 = vmatpush2.msra.mxu0 0.0
    %1224 = vmatprep.subr.mxu0 0.0
    %1225 = vmatpush2.msra.mxu0 0.0
    %1226 = vmatprep.subr.mxu0 0.0
    %1227 = vmatpush2.msra.mxu0 0.0
    %1228 = vmatprep.subr.mxu0 0.0
    %1229 = vmatpush2.msra.mxu0 0.0
    %1230 = vmatprep.subr.mxu0 0.0
    %1231 = vmatpush2.msra.mxu0 0.0
    %1232 = vmatprep.subr.mxu0 0.0
    %1233 = vmatpush2.msra.mxu0 0.0
    %1234 = vmatprep.subr.mxu0 0.0
    %1235 = vmatpush2.msra.mxu0 0.0
    %1236 = vmatprep.mubr.f32.mxu0 0.0
    %1237 = vmatmul.mubr.f32.gmra.mxu0 %v1171
    %v1238 = vpop.f32.mrf.mxu0
    %v1239 = vadd.f32 0.0, %v1238
    %v1240 = vpop.f32.mrf.mxu0
    %v1241 = vadd.f32 0.0, %v1240
    %1242 = vdwg.mxu0
    %v1245 = vcombine.low %v1239, %v1241
    %v1246 = vrot.slane %v1245, 5
    %v1247 = vrot.slane %v1246, 4
    %v1249 = vsub.f32 %v53, %v1247
    %v1250 = vmul.f32 %v1249, %v1249
    %v1252 = vcombine.high %v1250, %v1250
    %v1254 = vsel %vm123, %v1250, 0.0
    %v1255 = vrot.slane %v1254, 4
    %v1256 = vadd.f32 %v1254, %v1255
    %v1257 = vrot.slane %v1256, 2
    %v1258 = vadd.f32 %v1256, %v1257
    %v1259 = vrot.slane %v1258, 1
    %v1260 = vadd.f32 %v1258, %v1259
    %v1261 = vsel %vm123, %v1252, 0.0
    %v1262 = vrot.slane %v1261, 4
    %v1263 = vadd.f32 %v1261, %v1262
    %v1264 = vrot.slane %v1263, 2
    %v1265 = vadd.f32 %v1263, %v1264
    %v1266 = vrot.slane %v1265, 1
    %v1267 = vadd.f32 %v1265, %v1266
    %v1268 = vmul.f32 %v1260, -1000.0
    %v1269 = vmul.f32 %v1267, -1000.0
    %v1270 = vmul.f32 %v1268, 1.442695
    %v1271 = vpow.pop %v1270
    %v1272 = vmul.f32 %v1269, 1.442695
    %v1273 = vpow.pop %v1272
    %v1274 = vmul.f32 %v1239, 0.5
    %v1275 = vmul.f32 %v1241, 0.5
    %v1276 = vmin.f32 %v1274, 1.0
    %v1277 = vmin.f32 %v1275, 1.0
    %v1278 = vmul.f32 %v1271, %v1276
    %v1279 = vmul.f32 %v1273, %v1277
    %v1280 = vsub.f32 1.0, %v1278
    %v1281 = vsub.f32 1.0, %v1279
    %v1282 = vsel %vm1170, %v1280, 0.0
    %v1283 = vsel %vm1170, %v1281, 0.0
    %v1284 = vadd.f32 %v1282, %v1283
    %1285 = vadd.xlane.f32.xlu0 %v1284
    %v1286 = vpop.xlane.xlu0 %1285
    %v1287 = vrot.slane %v1286, 4
    %v1288 = vadd.f32 %v1286, %v1287
    %v1289 = vrot.slane %v1288, 2
    %v1290 = vadd.f32 %v1288, %v1289
    %v1291 = vrot.slane %v1290, 1
    %v1292 = vadd.f32 %v1290, %v1291
    %s1293 = vtos %v1292
    %v1294 = vrcp.pop 256.0
    %s1295 = vtos %v1294
    %s1296 = smul.f32 %s1293, %s1295
    %vm1297 = vcmp.eq.s32.totalorder %v33, %v576
    %vm1298 = vcmp.eq.s32.totalorder %v34, %v576
    %vm1299 = vcmp.eq.s32.totalorder %v33, %v592
    %vm1300 = vcmp.eq.s32.totalorder %v34, %v592
    %vm1301 = vcmp.eq.s32.totalorder %v33, %v608
    %vm1302 = vcmp.eq.s32.totalorder %v34, %v608
    %vm1303 = vcmp.eq.s32.totalorder %v33, %v624
    %vm1304 = vcmp.eq.s32.totalorder %v34, %v624
    %vm1305 = vcmp.eq.s32.totalorder %v33, %v640
    %vm1306 = vcmp.eq.s32.totalorder %v34, %v640
    %vm1307 = vcmp.eq.s32.totalorder %v33, %v656
    %vm1308 = vcmp.eq.s32.totalorder %v34, %v656
    %vm1309 = vcmp.eq.s32.totalorder %v33, %v672
    %vm1310 = vcmp.eq.s32.totalorder %v34, %v672
    %vm1311 = vcmp.eq.s32.totalorder %v33, %v688
    %vm1312 = vcmp.eq.s32.totalorder %v34, %v688
    %vm1313 = vcmp.eq.s32.totalorder %v33, %v704
    %vm1314 = vcmp.eq.s32.totalorder %v34, %v704
    %vm1315 = vcmp.eq.s32.totalorder %v33, %v720
    %vm1316 = vcmp.eq.s32.totalorder %v34, %v720
    %vm1317 = vcmp.eq.s32.totalorder %v33, %v736
    %vm1318 = vcmp.eq.s32.totalorder %v34, %v736
    %vm1319 = vcmp.eq.s32.totalorder %v33, %v752
    %vm1320 = vcmp.eq.s32.totalorder %v34, %v752
    %vm1321 = vcmp.eq.s32.totalorder %v33, %v768
    %vm1322 = vcmp.eq.s32.totalorder %v34, %v768
    %vm1323 = vcmp.eq.s32.totalorder %v33, %v784
    %vm1324 = vcmp.eq.s32.totalorder %v34, %v784
    %vm1325 = vcmp.eq.s32.totalorder %v33, %v800
    %vm1326 = vcmp.eq.s32.totalorder %v34, %v800
    %vm1327 = vcmp.eq.s32.totalorder %v33, %v816
    %vm1328 = vcmp.eq.s32.totalorder %v34, %v816
    %v1329 = vsel %vm1297, 1, 0
    %v1330 = vsel %vm1298, 1, 0
    %v1331 = vsel %vm1299, 1, 0
    %v1332 = vsel %vm1300, 1, 0
    %v1333 = vsel %vm1301, 1, 0
    %v1334 = vsel %vm1302, 1, 0
    %v1335 = vsel %vm1303, 1, 0
    %v1336 = vsel %vm1304, 1, 0
    %v1337 = vsel %vm1305, 1, 0
    %v1338 = vsel %vm1306, 1, 0
    %v1339 = vsel %vm1307, 1, 0
    %v1340 = vsel %vm1308, 1, 0
    %v1341 = vsel %vm1309, 1, 0
    %v1342 = vsel %vm1310, 1, 0
    %v1343 = vsel %vm1311, 1, 0
    %v1344 = vsel %vm1312, 1, 0
    %v1345 = vsel %vm1313, 1, 0
    %v1346 = vsel %vm1314, 1, 0
    %v1347 = vsel %vm1315, 1, 0
    %v1348 = vsel %vm1316, 1, 0
    %v1349 = vsel %vm1317, 1, 0
    %v1350 = vsel %vm1318, 1, 0
    %v1351 = vsel %vm1319, 1, 0
    %v1352 = vsel %vm1320, 1, 0
    %v1353 = vsel %vm1321, 1, 0
    %v1354 = vsel %vm1322, 1, 0
    %v1355 = vsel %vm1323, 1, 0
    %v1356 = vsel %vm1324, 1, 0
    %v1357 = vsel %vm1325, 1, 0
    %v1358 = vsel %vm1326, 1, 0
    %v1359 = vsel %vm1327, 1, 0
    %v1360 = vsel %vm1328, 1, 0
    %v1361 = vcvt.s32.f32 %v1329
    %v1362 = vcvt.s32.f32 %v1330
    %v1363 = vcvt.s32.f32 %v1331
    %v1364 = vcvt.s32.f32 %v1332
    %v1365 = vcvt.s32.f32 %v1333
    %v1366 = vcvt.s32.f32 %v1334
    %v1367 = vcvt.s32.f32 %v1335
    %v1368 = vcvt.s32.f32 %v1336
    %v1369 = vcvt.s32.f32 %v1337
    %v1370 = vcvt.s32.f32 %v1338
    %v1371 = vcvt.s32.f32 %v1339
    %v1372 = vcvt.s32.f32 %v1340
    %v1373 = vcvt.s32.f32 %v1341
    %v1374 = vcvt.s32.f32 %v1342
    %v1375 = vcvt.s32.f32 %v1343
    %v1376 = vcvt.s32.f32 %v1344
    %v1377 = vcvt.s32.f32 %v1345
    %v1378 = vcvt.s32.f32 %v1346
    %v1379 = vcvt.s32.f32 %v1347
    %v1380 = vcvt.s32.f32 %v1348
    %v1381 = vcvt.s32.f32 %v1349
    %v1382 = vcvt.s32.f32 %v1350
    %v1383 = vcvt.s32.f32 %v1351
    %v1384 = vcvt.s32.f32 %v1352
    %v1385 = vcvt.s32.f32 %v1353
    %v1386 = vcvt.s32.f32 %v1354
    %v1387 = vcvt.s32.f32 %v1355
    %v1388 = vcvt.s32.f32 %v1356
    %v1389 = vcvt.s32.f32 %v1357
    %v1390 = vcvt.s32.f32 %v1358
    %v1391 = vcvt.s32.f32 %v1359
    %v1392 = vcvt.s32.f32 %v1360
    %1393 = vmatprep.subr.mxu0 %v1392
    %1394 = vmatpush1.msra.mxu0 %v1391
    %1395 = vmatprep.subr.mxu0 %v1390
    %1396 = vmatpush1.msra.mxu0 %v1389
    %1397 = vmatprep.subr.mxu0 %v1388
    %1398 = vmatpush1.msra.mxu0 %v1387
    %1399 = vmatprep.subr.mxu0 %v1386
    %1400 = vmatpush1.msra.mxu0 %v1385
    %1401 = vmatprep.subr.mxu0 %v1384
    %1402 = vmatpush1.msra.mxu0 %v1383
    %1403 = vmatprep.subr.mxu0 %v1382
    %1404 = vmatpush1.msra.mxu0 %v1381
    %1405 = vmatprep.subr.mxu0 %v1380
    %1406 = vmatpush1.msra.mxu0 %v1379
    %1407 = vmatprep.subr.mxu0 %v1378
    %1408 = vmatpush1.msra.mxu0 %v1377
    %1409 = vmatprep.subr.mxu0 %v1376
    %1410 = vmatpush1.msra.mxu0 %v1375
    %1411 = vmatprep.subr.mxu0 %v1374
    %1412 = vmatpush1.msra.mxu0 %v1373
    %1413 = vmatprep.subr.mxu0 %v1372
    %1414 = vmatpush1.msra.mxu0 %v1371
    %1415 = vmatprep.subr.mxu0 %v1370
    %1416 = vmatpush1.msra.mxu0 %v1369
    %1417 = vmatprep.subr.mxu0 %v1368
    %1418 = vmatpush1.msra.mxu0 %v1367
    %1419 = vmatprep.subr.mxu0 %v1366
    %1420 = vmatpush1.msra.mxu0 %v1365
    %1421 = vmatprep.subr.mxu0 %v1364
    %1422 = vmatpush1.msra.mxu0 %v1363
    %1423 = vmatprep.subr.mxu0 %v1362
    %1424 = vmatpush1.msra.mxu0 %v1361
    %1425 = vmatprep.subr.mxu0 0.0
    %1426 = vmatpush2.msra.mxu0 0.0
    %1427 = vmatprep.subr.mxu0 0.0
    %1428 = vmatpush2.msra.mxu0 0.0
    %1429 = vmatprep.subr.mxu0 0.0
    %1430 = vmatpush2.msra.mxu0 0.0
    %1431 = vmatprep.subr.mxu0 0.0
    %1432 = vmatpush2.msra.mxu0 0.0
    %1433 = vmatprep.subr.mxu0 0.0
    %1434 = vmatpush2.msra.mxu0 0.0
    %1435 = vmatprep.subr.mxu0 0.0
    %1436 = vmatpush2.msra.mxu0 0.0
    %1437 = vmatprep.subr.mxu0 0.0
    %1438 = vmatpush2.msra.mxu0 0.0
    %1439 = vmatprep.subr.mxu0 0.0
    %1440 = vmatpush2.msra.mxu0 0.0
    %1441 = vmatprep.subr.mxu0 0.0
    %1442 = vmatpush2.msra.mxu0 0.0
    %1443 = vmatprep.subr.mxu0 0.0
    %1444 = vmatpush2.msra.mxu0 0.0
    %1445 = vmatprep.subr.mxu0 0.0
    %1446 = vmatpush2.msra.mxu0 0.0
    %1447 = vmatprep.subr.mxu0 0.0
    %1448 = vmatpush2.msra.mxu0 0.0
    %1449 = vmatprep.subr.mxu0 0.0
    %1450 = vmatpush2.msra.mxu0 0.0
    %1451 = vmatprep.subr.mxu0 0.0
    %1452 = vmatpush2.msra.mxu0 0.0
    %1453 = vmatprep.subr.mxu0 0.0
    %1454 = vmatpush2.msra.mxu0 0.0
    %1455 = vmatprep.subr.mxu0 0.0
    %1456 = vmatpush2.msra.mxu0 0.0
    %1457 = vmatprep.mubr.f32.mxu0 0.0
    %1458 = vmatmul.mubr.f32.gmra.mxu0 1.0
    %v1459 = vpop.f32.mrf.mxu0
    %v1460 = vadd.f32 0.0, %v1459
    %v1461 = vpop.f32.mrf.mxu0
    %v1462 = vadd.f32 0.0, %v1461
    %1463 = vdwg.mxu0
    %v1464 = vrot.slane %v53, 7
    %v1465 = vrot.slane %v139, 7
    %v1468 = vsel %vm1170, %v1460, %v1464
    %v1469 = vsel %vm1170, %v1462, %v1465
    %1470 = vmatprep.subr.mxu0 %v1392
    %1471 = vmatpush1.xpose.msra.mxu0 %v1391
    %1472 = vmatprep.subr.mxu0 %v1390
    %1473 = vmatpush1.xpose.msra.mxu0 %v1389
    %1474 = vmatprep.subr.mxu0 %v1388
    %1475 = vmatpush1.xpose.msra.mxu0 %v1387
    %1476 = vmatprep.subr.mxu0 %v1386
    %1477 = vmatpush1.xpose.msra.mxu0 %v1385
    %1478 = vmatprep.subr.mxu0 %v1384
    %1479 = vmatpush1.xpose.msra.mxu0 %v1383
    %1480 = vmatprep.subr.mxu0 %v1382
    %1481 = vmatpush1.xpose.msra.mxu0 %v1381
    %1482 = vmatprep.subr.mxu0 %v1380
    %1483 = vmatpush1.xpose.msra.mxu0 %v1379
    %1484 = vmatprep.subr.mxu0 %v1378
    %1485 = vmatpush1.xpose.msra.mxu0 %v1377
    %1486 = vmatprep.subr.mxu0 %v1376
    %1487 = vmatpush1.xpose.msra.mxu0 %v1375
    %1488 = vmatprep.subr.mxu0 %v1374
    %1489 = vmatpush1.xpose.msra.mxu0 %v1373
    %1490 = vmatprep.subr.mxu0 %v1372
    %1491 = vmatpush1.xpose.msra.mxu0 %v1371
    %1492 = vmatprep.subr.mxu0 %v1370
    %1493 = vmatpush1.xpose.msra.mxu0 %v1369
    %1494 = vmatprep.subr.mxu0 %v1368
    %1495 = vmatpush1.xpose.msra.mxu0 %v1367
    %1496 = vmatprep.subr.mxu0 %v1366
    %1497 = vmatpush1.xpose.msra.mxu0 %v1365
    %1498 = vmatprep.subr.mxu0 %v1364
    %1499 = vmatpush1.xpose.msra.mxu0 %v1363
    %1500 = vmatprep.subr.mxu0 %v1362
    %1501 = vmatpush1.xpose.msra.mxu0 %v1361
    %1502 = vmatprep.subr.mxu0 0.0
    %1503 = vmatpush2.xpose.msra.mxu0 0.0
    %1504 = vmatprep.subr.mxu0 0.0
    %1505 = vmatpush2.xpose.msra.mxu0 0.0
    %1506 = vmatprep.subr.mxu0 0.0
    %1507 = vmatpush2.xpose.msra.mxu0 0.0
    %1508 = vmatprep.subr.mxu0 0.0
    %1509 = vmatpush2.xpose.msra.mxu0 0.0
    %1510 = vmatprep.subr.mxu0 0.0
    %1511 = vmatpush2.xpose.msra.mxu0 0.0
    %1512 = vmatprep.subr.mxu0 0.0
    %1513 = vmatpush2.xpose.msra.mxu0 0.0
    %1514 = vmatprep.subr.mxu0 0.0
    %1515 = vmatpush2.xpose.msra.mxu0 0.0
    %1516 = vmatprep.subr.mxu0 0.0
    %1517 = vmatpush2.xpose.msra.mxu0 0.0
    %1518 = vmatprep.subr.mxu0 0.0
    %1519 = vmatpush2.xpose.msra.mxu0 0.0
    %1520 = vmatprep.subr.mxu0 0.0
    %1521 = vmatpush2.xpose.msra.mxu0 0.0
    %1522 = vmatprep.subr.mxu0 0.0
    %1523 = vmatpush2.xpose.msra.mxu0 0.0
    %1524 = vmatprep.subr.mxu0 0.0
    %1525 = vmatpush2.xpose.msra.mxu0 0.0
    %1526 = vmatprep.subr.mxu0 0.0
    %1527 = vmatpush2.xpose.msra.mxu0 0.0
    %1528 = vmatprep.subr.mxu0 0.0
    %1529 = vmatpush2.xpose.msra.mxu0 0.0
    %1530 = vmatprep.subr.mxu0 0.0
    %1531 = vmatpush2.xpose.msra.mxu0 0.0
    %1532 = vmatprep.subr.mxu0 0.0
    %1533 = vmatpush2.xpose.msra.mxu0 0.0
    %1534 = vmatprep.mubr.f32.mxu0 %v1469
    %1535 = vmatmul.mubr.f32.gmra.mxu0 %v1468
    %v1536 = vpop.f32.mrf.mxu0
    %v1537 = vadd.f32 0.0, %v1536
    %v1538 = vpop.f32.mrf.mxu0
    %1539 = vdwg.mxu0
    %v1541 = vrot.slane %v1537, 1
    %v1543 = vsub.f32 %v52, %v1541
    %v1544 = vmul.f32 %v1543, %v1543
    %v1545 = vsel %vm123, %v1544, 0.0
    %v1546 = vrot.slane %v1545, 4
    %v1547 = vadd.f32 %v1545, %v1546
    %v1548 = vrot.slane %v1547, 2
    %v1549 = vadd.f32 %v1547, %v1548
    %v1550 = vrot.slane %v1549, 1
    %v1551 = vadd.f32 %v1549, %v1550
    %v1552 = vmul.f32 %v1551, -1000.0
    %v1553 = vmul.f32 %v1552, 1.442695
    %v1554 = vpow.pop %v1553
    %v1555 = vmul.f32 %v1537, 2.0
    %v1556 = vadd.f32 %v1555, 1e-06
    %v1557 = vrcp.pop %v1556
    %v1558 = vmul.f32 1.0, %v1557
    %v1559 = vmul.f32 %v1554, %v1558
    %v1560 = vsub.f32 1.0, %v1559
    %v1561 = vsel %vm1170, %v1560, 0.0
    %1562 = vadd.xlane.f32.xlu0 %v1561
    %v1563 = vpop.xlane.xlu0 %1562
    %v1564 = vrot.slane %v1563, 4
    %v1565 = vadd.f32 %v1563, %v1564
    %v1566 = vrot.slane %v1565, 2
    %v1567 = vadd.f32 %v1565, %v1566
    %v1568 = vrot.slane %v1567, 1
    %v1569 = vadd.f32 %v1567, %v1568
    %s1570 = vtos %v1569
    %v1571 = vrcp.pop 128.0
    %s1572 = vtos %v1571
    %s1573 = smul.f32 %s1570, %s1572
    %s1574 = sadd.f32 %s1296, %s1573
    %s1575 = smul.f32 %s1574, 0.5
    %v1576 = vstv %s1575
    %v1577 = vsel %vm35, %v1576, 0.0
    %v1578 = vadd.f32 %v1577, 0.0
    %vm1579 = vcmp.eq.s32.totalorder %v33, 1
    %s1580 = scalar_lea.vmem %s0, 128
    %v1581 = vld [vmem:[%s1580] sm:$0xff]
    %v1582 = vld [vmem:[%s1580 + $0x8] sm:$0xff]
    %v1583 = vld [vmem:[%s1580 + $0x10] sm:$0xff]
    %v1584 = vld [vmem:[%s1580 + $0x18] sm:$0xff]
    %v1585 = vld [vmem:[%s1580 + $0x20] sm:$0xff]
    %v1586 = vld [vmem:[%s1580 + $0x28] sm:$0xff]
    %v1587 = vld [vmem:[%s1580 + $0x30] sm:$0xff]
    %v1588 = vld [vmem:[%s1580 + $0x38] sm:$0xff]
    %v1589 = vld [vmem:[%s1580 + $0x40] sm:$0xff]
    %v1590 = vld [vmem:[%s1580 + $0x48] sm:$0xff]
    %v1591 = vld [vmem:[%s1580 + $0x50] sm:$0xff]
    %v1592 = vld [vmem:[%s1580 + $0x58] sm:$0xff]
    %v1593 = vld [vmem:[%s1580 + $0x60] sm:$0xff]
    %v1594 = vld [vmem:[%s1580 + $0x68] sm:$0xff]
    %v1595 = vld [vmem:[%s1580 + $0x70] sm:$0xff]
    %v1596 = vld [vmem:[%s1580 + $0x78] sm:$0xff]
    %s1597 = scalar_lea.vmem %s1, 4
    %v1598 = vld [vmem:[%s1597] sm:$0x7]
    %s1599 = scalar_lea.vmem %s2, 8
    %v1600 = vld [vmem:[%s1599] sm:$0x77]
    %v1601 = vmul.f32 %v1581, %v1581
    %v1602 = vmul.f32 %v1582, %v1582
    %v1603 = vmul.f32 %v1583, %v1583
    %v1604 = vmul.f32 %v1584, %v1584
    %v1605 = vmul.f32 %v1585, %v1585
    %v1606 = vmul.f32 %v1586, %v1586
    %v1607 = vmul.f32 %v1587, %v1587
    %v1608 = vmul.f32 %v1588, %v1588
    %v1609 = vmul.f32 %v1589, %v1589
    %v1610 = vmul.f32 %v1590, %v1590
    %v1611 = vmul.f32 %v1591, %v1591
    %v1612 = vmul.f32 %v1592, %v1592
    %v1613 = vmul.f32 %v1593, %v1593
    %v1614 = vmul.f32 %v1594, %v1594
    %v1615 = vmul.f32 %v1595, %v1595
    %v1616 = vmul.f32 %v1596, %v1596
    %v1617 = vsel %vm70, %v1601, 0.0
    %1618 = vadd.xlane.f32.xlu0 %v1617
    %v1619 = vpop.xlane.xlu0 %1618
    %v1620 = vsel %vm70, %v1602, 0.0
    %1621 = vadd.xlane.f32.xlu0 %v1620
    %v1622 = vpop.xlane.xlu0 %1621
    %v1623 = vsel %vm70, %v1603, 0.0
    %1624 = vadd.xlane.f32.xlu0 %v1623
    %v1625 = vpop.xlane.xlu0 %1624
    %v1626 = vsel %vm70, %v1604, 0.0
    %1627 = vadd.xlane.f32.xlu0 %v1626
    %v1628 = vpop.xlane.xlu0 %1627
    %v1629 = vsel %vm70, %v1605, 0.0
    %1630 = vadd.xlane.f32.xlu0 %v1629
    %v1631 = vpop.xlane.xlu0 %1630
    %v1632 = vsel %vm70, %v1606, 0.0
    %1633 = vadd.xlane.f32.xlu0 %v1632
    %v1634 = vpop.xlane.xlu0 %1633
    %v1635 = vsel %vm70, %v1607, 0.0
    %1636 = vadd.xlane.f32.xlu0 %v1635
    %v1637 = vpop.xlane.xlu0 %1636
    %v1638 = vsel %vm70, %v1608, 0.0
    %1639 = vadd.xlane.f32.xlu0 %v1638
    %v1640 = vpop.xlane.xlu0 %1639
    %v1641 = vsel %vm70, %v1609, 0.0
    %1642 = vadd.xlane.f32.xlu0 %v1641
    %v1643 = vpop.xlane.xlu0 %1642
    %v1644 = vsel %vm70, %v1610, 0.0
    %1645 = vadd.xlane.f32.xlu0 %v1644
    %v1646 = vpop.xlane.xlu0 %1645
    %v1647 = vsel %vm70, %v1611, 0.0
    %1648 = vadd.xlane.f32.xlu0 %v1647
    %v1649 = vpop.xlane.xlu0 %1648
    %v1650 = vsel %vm70, %v1612, 0.0
    %1651 = vadd.xlane.f32.xlu0 %v1650
    %v1652 = vpop.xlane.xlu0 %1651
    %v1653 = vsel %vm70, %v1613, 0.0
    %1654 = vadd.xlane.f32.xlu0 %v1653
    %v1655 = vpop.xlane.xlu0 %1654
    %v1656 = vsel %vm70, %v1614, 0.0
    %1657 = vadd.xlane.f32.xlu0 %v1656
    %v1658 = vpop.xlane.xlu0 %1657
    %v1659 = vsel %vm70, %v1615, 0.0
    %1660 = vadd.xlane.f32.xlu0 %v1659
    %v1661 = vpop.xlane.xlu0 %1660
    %v1662 = vsel %vm70, %v1616, 0.0
    %1663 = vadd.xlane.f32.xlu0 %v1662
    %v1664 = vpop.xlane.xlu0 %1663
    %v1665 = vmul.f32 %v1600, %v1600
    %v1667 = vcombine.high %v1665, %v1665
    %v1669 = vsel %vm123, %v1665, 0.0
    %v1670 = vrot.slane %v1669, 4
    %v1671 = vadd.f32 %v1669, %v1670
    %v1672 = vrot.slane %v1671, 2
    %v1673 = vadd.f32 %v1671, %v1672
    %v1674 = vrot.slane %v1673, 1
    %v1675 = vadd.f32 %v1673, %v1674
    %v1676 = vsel %vm123, %v1667, 0.0
    %v1677 = vrot.slane %v1676, 4
    %v1678 = vadd.f32 %v1676, %v1677
    %v1679 = vrot.slane %v1678, 2
    %v1680 = vadd.f32 %v1678, %v1679
    %v1681 = vrot.slane %v1680, 1
    %v1682 = vadd.f32 %v1680, %v1681
    %v1684 = vcombine.high %v1600, %v1600
    %v1686 = vsel %vm70, %v1581, 0
    %v1689 = vsel %vm70, %v1582, 0
    %v1692 = vsel %vm70, %v1583, 0
    %v1695 = vsel %vm70, %v1584, 0
    %v1698 = vsel %vm70, %v1585, 0
    %v1701 = vsel %vm70, %v1586, 0
    %v1704 = vsel %vm70, %v1587, 0
    %v1707 = vsel %vm70, %v1588, 0
    %v1710 = vsel %vm70, %v1589, 0
    %v1713 = vsel %vm70, %v1590, 0
    %v1716 = vsel %vm70, %v1591, 0
    %v1719 = vsel %vm70, %v1592, 0
    %v1722 = vsel %vm70, %v1593, 0
    %v1725 = vsel %vm70, %v1594, 0
    %v1728 = vsel %vm70, %v1595, 0
    %v1731 = vsel %vm70, %v1596, 0
    %v1733 = vsel %vm123, %v1600, 0
    %v1735 = vsel %vm123, %v1684, 0
    %1737 = vmatprep.subr.mxu0 0.0
    %1738 = vmatpush1.msra.mxu0 0.0
    %1739 = vmatprep.subr.mxu0 0.0
    %1740 = vmatpush1.msra.mxu0 0.0
    %1741 = vmatprep.subr.mxu0 0.0
    %1742 = vmatpush1.msra.mxu0 0.0
    %1743 = vmatprep.subr.mxu0 0.0
    %1744 = vmatpush1.msra.mxu0 0.0
    %1745 = vmatprep.subr.mxu0 0.0
    %1746 = vmatpush1.msra.mxu0 0.0
    %1747 = vmatprep.subr.mxu0 0.0
    %1748 = vmatpush1.msra.mxu0 0.0
    %1749 = vmatprep.subr.mxu0 0.0
    %1750 = vmatpush1.msra.mxu0 0.0
    %1751 = vmatprep.subr.mxu0 0.0
    %1752 = vmatpush1.msra.mxu0 0.0
    %1753 = vmatprep.subr.mxu0 0.0
    %1754 = vmatpush1.msra.mxu0 0.0
    %1755 = vmatprep.subr.mxu0 0.0
    %1756 = vmatpush1.msra.mxu0 0.0
    %1757 = vmatprep.subr.mxu0 0.0
    %1758 = vmatpush1.msra.mxu0 0.0
    %1759 = vmatprep.subr.mxu0 0.0
    %1760 = vmatpush1.msra.mxu0 0.0
    %1761 = vmatprep.subr.mxu0 0.0
    %1762 = vmatpush1.msra.mxu0 0.0
    %1763 = vmatprep.subr.mxu0 0.0
    %1764 = vmatpush1.msra.mxu0 0.0
    %1765 = vmatprep.subr.mxu0 0.0
    %1766 = vmatpush1.msra.mxu0 0.0
    %1767 = vmatprep.subr.mxu0 %v1735
    %1768 = vmatpush1.msra.mxu0 %v1733
    %1769 = vmatprep.subr.mxu0 0.0
    %1770 = vmatpush2.msra.mxu0 0.0
    %1771 = vmatprep.subr.mxu0 0.0
    %1772 = vmatpush2.msra.mxu0 0.0
    %1773 = vmatprep.subr.mxu0 0.0
    %1774 = vmatpush2.msra.mxu0 0.0
    %1775 = vmatprep.subr.mxu0 0.0
    %1776 = vmatpush2.msra.mxu0 0.0
    %1777 = vmatprep.subr.mxu0 0.0
    %1778 = vmatpush2.msra.mxu0 0.0
    %1779 = vmatprep.subr.mxu0 0.0
    %1780 = vmatpush2.msra.mxu0 0.0
    %1781 = vmatprep.subr.mxu0 0.0
    %1782 = vmatpush2.msra.mxu0 0.0
    %1783 = vmatprep.subr.mxu0 0.0
    %1784 = vmatpush2.msra.mxu0 0.0
    %1785 = vmatprep.subr.mxu0 0.0
    %1786 = vmatpush2.msra.mxu0 0.0
    %1787 = vmatprep.subr.mxu0 0.0
    %1788 = vmatpush2.msra.mxu0 0.0
    %1789 = vmatprep.subr.mxu0 0.0
    %1790 = vmatpush2.msra.mxu0 0.0
    %1791 = vmatprep.subr.mxu0 0.0
    %1792 = vmatpush2.msra.mxu0 0.0
    %1793 = vmatprep.subr.mxu0 0.0
    %1794 = vmatpush2.msra.mxu0 0.0
    %1795 = vmatprep.subr.mxu0 0.0
    %1796 = vmatpush2.msra.mxu0 0.0
    %1797 = vmatprep.subr.mxu0 0.0
    %1798 = vmatpush2.msra.mxu0 0.0
    %1799 = vmatprep.subr.mxu0 0.0
    %1800 = vmatpush2.msra.mxu0 0.0
    %1801 = vmatprep.mubr.f32.mxu0 0.0
    %1802 = vmatmul.mubr.f32.gmra.mxu0 %v1686
    %v1803 = vpop.f32.mrf.mxu0
    %v1804 = vadd.f32 0.0, %v1803
    %v1805 = vpop.f32.mrf.mxu0
    %v1806 = vadd.f32 0.0, %v1805
    %1807 = vmatprep.mubr.f32.mxu0 0.0
    %1808 = vmatmul.mubr.f32.gmra.mxu0 %v1689
    %v1809 = vpop.f32.mrf.mxu0
    %v1810 = vadd.f32 0.0, %v1809
    %v1811 = vpop.f32.mrf.mxu0
    %v1812 = vadd.f32 0.0, %v1811
    %1813 = vmatprep.mubr.f32.mxu0 0.0
    %1814 = vmatmul.mubr.f32.gmra.mxu0 %v1692
    %v1815 = vpop.f32.mrf.mxu0
    %v1816 = vadd.f32 0.0, %v1815
    %v1817 = vpop.f32.mrf.mxu0
    %v1818 = vadd.f32 0.0, %v1817
    %1819 = vmatprep.mubr.f32.mxu0 0.0
    %1820 = vmatmul.mubr.f32.gmra.mxu0 %v1695
    %v1821 = vpop.f32.mrf.mxu0
    %v1822 = vadd.f32 0.0, %v1821
    %v1823 = vpop.f32.mrf.mxu0
    %v1824 = vadd.f32 0.0, %v1823
    %1825 = vmatprep.mubr.f32.mxu0 0.0
    %1826 = vmatmul.mubr.f32.gmra.mxu0 %v1698
    %v1827 = vpop.f32.mrf.mxu0
    %v1828 = vadd.f32 0.0, %v1827
    %v1829 = vpop.f32.mrf.mxu0
    %v1830 = vadd.f32 0.0, %v1829
    %1831 = vmatprep.mubr.f32.mxu0 0.0
    %1832 = vmatmul.mubr.f32.gmra.mxu0 %v1701
    %v1833 = vpop.f32.mrf.mxu0
    %v1834 = vadd.f32 0.0, %v1833
    %v1835 = vpop.f32.mrf.mxu0
    %v1836 = vadd.f32 0.0, %v1835
    %1837 = vmatprep.mubr.f32.mxu0 0.0
    %1838 = vmatmul.mubr.f32.gmra.mxu0 %v1704
    %v1839 = vpop.f32.mrf.mxu0
    %v1840 = vadd.f32 0.0, %v1839
    %v1841 = vpop.f32.mrf.mxu0
    %v1842 = vadd.f32 0.0, %v1841
    %1843 = vmatprep.mubr.f32.mxu0 0.0
    %1844 = vmatmul.mubr.f32.gmra.mxu0 %v1707
    %v1845 = vpop.f32.mrf.mxu0
    %v1846 = vadd.f32 0.0, %v1845
    %v1847 = vpop.f32.mrf.mxu0
    %v1848 = vadd.f32 0.0, %v1847
    %1849 = vmatprep.mubr.f32.mxu0 0.0
    %1850 = vmatmul.mubr.f32.gmra.mxu0 %v1710
    %v1851 = vpop.f32.mrf.mxu0
    %v1852 = vadd.f32 0.0, %v1851
    %v1853 = vpop.f32.mrf.mxu0
    %v1854 = vadd.f32 0.0, %v1853
    %1855 = vmatprep.mubr.f32.mxu0 0.0
    %1856 = vmatmul.mubr.f32.gmra.mxu0 %v1713
    %v1857 = vpop.f32.mrf.mxu0
    %v1858 = vadd.f32 0.0, %v1857
    %v1859 = vpop.f32.mrf.mxu0
    %v1860 = vadd.f32 0.0, %v1859
    %1861 = vmatprep.mubr.f32.mxu0 0.0
    %1862 = vmatmul.mubr.f32.gmra.mxu0 %v1716
    %v1863 = vpop.f32.mrf.mxu0
    %v1864 = vadd.f32 0.0, %v1863
    %v1865 = vpop.f32.mrf.mxu0
    %v1866 = vadd.f32 0.0, %v1865
    %1867 = vmatprep.mubr.f32.mxu0 0.0
    %1868 = vmatmul.mubr.f32.gmra.mxu0 %v1719
    %v1869 = vpop.f32.mrf.mxu0
    %v1870 = vadd.f32 0.0, %v1869
    %v1871 = vpop.f32.mrf.mxu0
    %v1872 = vadd.f32 0.0, %v1871
    %1873 = vmatprep.mubr.f32.mxu0 0.0
    %1874 = vmatmul.mubr.f32.gmra.mxu0 %v1722
    %v1875 = vpop.f32.mrf.mxu0
    %v1876 = vadd.f32 0.0, %v1875
    %v1877 = vpop.f32.mrf.mxu0
    %v1878 = vadd.f32 0.0, %v1877
    %1879 = vmatprep.mubr.f32.mxu0 0.0
    %1880 = vmatmul.mubr.f32.gmra.mxu0 %v1725
    %v1881 = vpop.f32.mrf.mxu0
    %v1882 = vadd.f32 0.0, %v1881
    %v1883 = vpop.f32.mrf.mxu0
    %v1884 = vadd.f32 0.0, %v1883
    %1885 = vmatprep.mubr.f32.mxu0 0.0
    %1886 = vmatmul.mubr.f32.gmra.mxu0 %v1728
    %v1887 = vpop.f32.mrf.mxu0
    %v1888 = vadd.f32 0.0, %v1887
    %v1889 = vpop.f32.mrf.mxu0
    %v1890 = vadd.f32 0.0, %v1889
    %1891 = vmatprep.mubr.f32.mxu0 0.0
    %1892 = vmatmul.mubr.f32.gmra.mxu0 %v1731
    %v1893 = vpop.f32.mrf.mxu0
    %v1894 = vadd.f32 0.0, %v1893
    %v1895 = vpop.f32.mrf.mxu0
    %v1896 = vadd.f32 0.0, %v1895
    %1897 = vdwg.mxu0
    %v1898 = vmul.f32 %v1804, 2.0
    %v1899 = vmul.f32 %v1806, 2.0
    %v1900 = vmul.f32 %v1810, 2.0
    %v1901 = vmul.f32 %v1812, 2.0
    %v1902 = vmul.f32 %v1816, 2.0
    %v1903 = vmul.f32 %v1818, 2.0
    %v1904 = vmul.f32 %v1822, 2.0
    %v1905 = vmul.f32 %v1824, 2.0
    %v1906 = vmul.f32 %v1828, 2.0
    %v1907 = vmul.f32 %v1830, 2.0
    %v1908 = vmul.f32 %v1834, 2.0
    %v1909 = vmul.f32 %v1836, 2.0
    %v1910 = vmul.f32 %v1840, 2.0
    %v1911 = vmul.f32 %v1842, 2.0
    %v1912 = vmul.f32 %v1846, 2.0
    %v1913 = vmul.f32 %v1848, 2.0
    %v1914 = vmul.f32 %v1852, 2.0
    %v1915 = vmul.f32 %v1854, 2.0
    %v1916 = vmul.f32 %v1858, 2.0
    %v1917 = vmul.f32 %v1860, 2.0
    %v1918 = vmul.f32 %v1864, 2.0
    %v1919 = vmul.f32 %v1866, 2.0
    %v1920 = vmul.f32 %v1870, 2.0
    %v1921 = vmul.f32 %v1872, 2.0
    %v1922 = vmul.f32 %v1876, 2.0
    %v1923 = vmul.f32 %v1878, 2.0
    %v1924 = vmul.f32 %v1882, 2.0
    %v1925 = vmul.f32 %v1884, 2.0
    %v1926 = vmul.f32 %v1888, 2.0
    %v1927 = vmul.f32 %v1890, 2.0
    %v1928 = vmul.f32 %v1894, 2.0
    %v1929 = vmul.f32 %v1896, 2.0
    %v1930 = vsub.f32 %v1619, %v1898
    %v1931 = vsub.f32 %v1619, %v1899
    %v1932 = vsub.f32 %v1622, %v1900
    %v1933 = vsub.f32 %v1622, %v1901
    %v1934 = vsub.f32 %v1625, %v1902
    %v1935 = vsub.f32 %v1625, %v1903
    %v1936 = vsub.f32 %v1628, %v1904
    %v1937 = vsub.f32 %v1628, %v1905
    %v1938 = vsub.f32 %v1631, %v1906
    %v1939 = vsub.f32 %v1631, %v1907
    %v1940 = vsub.f32 %v1634, %v1908
    %v1941 = vsub.f32 %v1634, %v1909
    %v1942 = vsub.f32 %v1637, %v1910
    %v1943 = vsub.f32 %v1637, %v1911
    %v1944 = vsub.f32 %v1640, %v1912
    %v1945 = vsub.f32 %v1640, %v1913
    %v1946 = vsub.f32 %v1643, %v1914
    %v1947 = vsub.f32 %v1643, %v1915
    %v1948 = vsub.f32 %v1646, %v1916
    %v1949 = vsub.f32 %v1646, %v1917
    %v1950 = vsub.f32 %v1649, %v1918
    %v1951 = vsub.f32 %v1649, %v1919
    %v1952 = vsub.f32 %v1652, %v1920
    %v1953 = vsub.f32 %v1652, %v1921
    %v1954 = vsub.f32 %v1655, %v1922
    %v1955 = vsub.f32 %v1655, %v1923
    %v1956 = vsub.f32 %v1658, %v1924
    %v1957 = vsub.f32 %v1658, %v1925
    %v1958 = vsub.f32 %v1661, %v1926
    %v1959 = vsub.f32 %v1661, %v1927
    %v1960 = vsub.f32 %v1664, %v1928
    %v1961 = vsub.f32 %v1664, %v1929
    %v1962 = vadd.f32 %v1930, %v1675
    %v1963 = vadd.f32 %v1931, %v1682
    %v1964 = vadd.f32 %v1932, %v1675
    %v1965 = vadd.f32 %v1933, %v1682
    %v1966 = vadd.f32 %v1934, %v1675
    %v1967 = vadd.f32 %v1935, %v1682
    %v1968 = vadd.f32 %v1936, %v1675
    %v1969 = vadd.f32 %v1937, %v1682
    %v1970 = vadd.f32 %v1938, %v1675
    %v1971 = vadd.f32 %v1939, %v1682
    %v1972 = vadd.f32 %v1940, %v1675
    %v1973 = vadd.f32 %v1941, %v1682
    %v1974 = vadd.f32 %v1942, %v1675
    %v1975 = vadd.f32 %v1943, %v1682
    %v1976 = vadd.f32 %v1944, %v1675
    %v1977 = vadd.f32 %v1945, %v1682
    %v1978 = vadd.f32 %v1946, %v1675
    %v1979 = vadd.f32 %v1947, %v1682
    %v1980 = vadd.f32 %v1948, %v1675
    %v1981 = vadd.f32 %v1949, %v1682
    %v1982 = vadd.f32 %v1950, %v1675
    %v1983 = vadd.f32 %v1951, %v1682
    %v1984 = vadd.f32 %v1952, %v1675
    %v1985 = vadd.f32 %v1953, %v1682
    %v1986 = vadd.f32 %v1954, %v1675
    %v1987 = vadd.f32 %v1955, %v1682
    %v1988 = vadd.f32 %v1956, %v1675
    %v1989 = vadd.f32 %v1957, %v1682
    %v1990 = vadd.f32 %v1958, %v1675
    %v1991 = vadd.f32 %v1959, %v1682
    %v1992 = vadd.f32 %v1960, %v1675
    %v1993 = vadd.f32 %v1961, %v1682
    %v1994 = vmin.f32 %v1962, %v1963
    %1995 = vmin.xlane.f32.xlu0 %v1994
    %v1996 = vpop.xlane.xlu0 %1995
    %v1997 = vmin.f32 %v1964, %v1965
    %1998 = vmin.xlane.f32.xlu0 %v1997
    %v1999 = vpop.xlane.xlu0 %1998
    %v2000 = vmin.f32 %v1966, %v1967
    %2001 = vmin.xlane.f32.xlu0 %v2000
    %v2002 = vpop.xlane.xlu0 %2001
    %v2003 = vmin.f32 %v1968, %v1969
    %2004 = vmin.xlane.f32.xlu0 %v2003
    %v2005 = vpop.xlane.xlu0 %2004
    %v2006 = vmin.f32 %v1970, %v1971
    %2007 = vmin.xlane.f32.xlu0 %v2006
    %v2008 = vpop.xlane.xlu0 %2007
    %v2009 = vmin.f32 %v1972, %v1973
    %2010 = vmin.xlane.f32.xlu0 %v2009
    %v2011 = vpop.xlane.xlu0 %2010
    %v2012 = vmin.f32 %v1974, %v1975
    %2013 = vmin.xlane.f32.xlu0 %v2012
    %v2014 = vpop.xlane.xlu0 %2013
    %v2015 = vmin.f32 %v1976, %v1977
    %2016 = vmin.xlane.f32.xlu0 %v2015
    %v2017 = vpop.xlane.xlu0 %2016
    %v2018 = vmin.f32 %v1978, %v1979
    %2019 = vmin.xlane.f32.xlu0 %v2018
    %v2020 = vpop.xlane.xlu0 %2019
    %v2021 = vmin.f32 %v1980, %v1981
    %2022 = vmin.xlane.f32.xlu0 %v2021
    %v2023 = vpop.xlane.xlu0 %2022
    %v2024 = vmin.f32 %v1982, %v1983
    %2025 = vmin.xlane.f32.xlu0 %v2024
    %v2026 = vpop.xlane.xlu0 %2025
    %v2027 = vmin.f32 %v1984, %v1985
    %2028 = vmin.xlane.f32.xlu0 %v2027
    %v2029 = vpop.xlane.xlu0 %2028
    %v2030 = vmin.f32 %v1986, %v1987
    %2031 = vmin.xlane.f32.xlu0 %v2030
    %v2032 = vpop.xlane.xlu0 %2031
    %v2033 = vmin.f32 %v1988, %v1989
    %2034 = vmin.xlane.f32.xlu0 %v2033
    %v2035 = vpop.xlane.xlu0 %2034
    %v2036 = vmin.f32 %v1990, %v1991
    %2037 = vmin.xlane.f32.xlu0 %v2036
    %v2038 = vpop.xlane.xlu0 %2037
    %v2039 = vmin.f32 %v1992, %v1993
    %2040 = vmin.xlane.f32.xlu0 %v2039
    %v2041 = vpop.xlane.xlu0 %2040
    %vm2042 = vcmp.eq.f32.partialorder %v1962, %v1996
    %vm2043 = vcmp.eq.f32.partialorder %v1963, %v1996
    %vm2044 = vcmp.eq.f32.partialorder %v1964, %v1999
    %vm2045 = vcmp.eq.f32.partialorder %v1965, %v1999
    %vm2046 = vcmp.eq.f32.partialorder %v1966, %v2002
    %vm2047 = vcmp.eq.f32.partialorder %v1967, %v2002
    %vm2048 = vcmp.eq.f32.partialorder %v1968, %v2005
    %vm2049 = vcmp.eq.f32.partialorder %v1969, %v2005
    %vm2050 = vcmp.eq.f32.partialorder %v1970, %v2008
    %vm2051 = vcmp.eq.f32.partialorder %v1971, %v2008
    %vm2052 = vcmp.eq.f32.partialorder %v1972, %v2011
    %vm2053 = vcmp.eq.f32.partialorder %v1973, %v2011
    %vm2054 = vcmp.eq.f32.partialorder %v1974, %v2014
    %vm2055 = vcmp.eq.f32.partialorder %v1975, %v2014
    %vm2056 = vcmp.eq.f32.partialorder %v1976, %v2017
    %vm2057 = vcmp.eq.f32.partialorder %v1977, %v2017
    %vm2058 = vcmp.eq.f32.partialorder %v1978, %v2020
    %vm2059 = vcmp.eq.f32.partialorder %v1979, %v2020
    %vm2060 = vcmp.eq.f32.partialorder %v1980, %v2023
    %vm2061 = vcmp.eq.f32.partialorder %v1981, %v2023
    %vm2062 = vcmp.eq.f32.partialorder %v1982, %v2026
    %vm2063 = vcmp.eq.f32.partialorder %v1983, %v2026
    %vm2064 = vcmp.eq.f32.partialorder %v1984, %v2029
    %vm2065 = vcmp.eq.f32.partialorder %v1985, %v2029
    %vm2066 = vcmp.eq.f32.partialorder %v1986, %v2032
    %vm2067 = vcmp.eq.f32.partialorder %v1987, %v2032
    %vm2068 = vcmp.eq.f32.partialorder %v1988, %v2035
    %vm2069 = vcmp.eq.f32.partialorder %v1989, %v2035
    %vm2070 = vcmp.eq.f32.partialorder %v1990, %v2038
    %vm2071 = vcmp.eq.f32.partialorder %v1991, %v2038
    %vm2072 = vcmp.eq.f32.partialorder %v1992, %v2041
    %vm2073 = vcmp.eq.f32.partialorder %v1993, %v2041
    %v2074 = vsel %vm2042, %v33, 256
    %v2075 = vsel %vm2043, %v34, 256
    %v2076 = vsel %vm2044, %v33, 256
    %v2077 = vsel %vm2045, %v34, 256
    %v2078 = vsel %vm2046, %v33, 256
    %v2079 = vsel %vm2047, %v34, 256
    %v2080 = vsel %vm2048, %v33, 256
    %v2081 = vsel %vm2049, %v34, 256
    %v2082 = vsel %vm2050, %v33, 256
    %v2083 = vsel %vm2051, %v34, 256
    %v2084 = vsel %vm2052, %v33, 256
    %v2085 = vsel %vm2053, %v34, 256
    %v2086 = vsel %vm2054, %v33, 256
    %v2087 = vsel %vm2055, %v34, 256
    %v2088 = vsel %vm2056, %v33, 256
    %v2089 = vsel %vm2057, %v34, 256
    %v2090 = vsel %vm2058, %v33, 256
    %v2091 = vsel %vm2059, %v34, 256
    %v2092 = vsel %vm2060, %v33, 256
    %v2093 = vsel %vm2061, %v34, 256
    %v2094 = vsel %vm2062, %v33, 256
    %v2095 = vsel %vm2063, %v34, 256
    %v2096 = vsel %vm2064, %v33, 256
    %v2097 = vsel %vm2065, %v34, 256
    %v2098 = vsel %vm2066, %v33, 256
    %v2099 = vsel %vm2067, %v34, 256
    %v2100 = vsel %vm2068, %v33, 256
    %v2101 = vsel %vm2069, %v34, 256
    %v2102 = vsel %vm2070, %v33, 256
    %v2103 = vsel %vm2071, %v34, 256
    %v2104 = vsel %vm2072, %v33, 256
    %v2105 = vsel %vm2073, %v34, 256
    %vm2106 = vcmp.lt.s32.totalorder %v2074, %v2075
    %v2107 = vsel %vm2106, %v2074, %v2075
    %v2108 = vand.u32 %v2107, 65535
    %v2109 = vshra.s32 %v2107, 16
    %v2110 = vcvt.s32.f32 %v2108
    %v2111 = vcvt.s32.f32 %v2109
    %2112 = vmin.xlane.f32.xlu0 %v2111
    %v2113 = vpop.xlane.xlu0 %2112
    %vm2114 = vcmp.eq.f32.partialorder %v2111, %v2113
    %v2115 = vsel %vm2114, %v2110, inf
    %2116 = vmin.xlane.f32.xlu0 %v2115
    %v2117 = vpop.xlane.xlu0 %2116
    %v2118 = vcvt.f32.s32 %v2117
    %v2119 = vcvt.f32.s32 %v2113
    %v2120 = vshll.u32 %v2119, 16
    %v2121 = vadd.s32 %v2120, %v2118
    %vm2122 = vcmp.lt.s32.totalorder %v2076, %v2077
    %v2123 = vsel %vm2122, %v2076, %v2077
    %v2124 = vand.u32 %v2123, 65535
    %v2125 = vshra.s32 %v2123, 16
    %v2126 = vcvt.s32.f32 %v2124
    %v2127 = vcvt.s32.f32 %v2125
    %2128 = vmin.xlane.f32.xlu0 %v2127
    %v2129 = vpop.xlane.xlu0 %2128
    %vm2130 = vcmp.eq.f32.partialorder %v2127, %v2129
    %v2131 = vsel %vm2130, %v2126, inf
    %2132 = vmin.xlane.f32.xlu0 %v2131
    %v2133 = vpop.xlane.xlu0 %2132
    %v2134 = vcvt.f32.s32 %v2133
    %v2135 = vcvt.f32.s32 %v2129
    %v2136 = vshll.u32 %v2135, 16
    %v2137 = vadd.s32 %v2136, %v2134
    %vm2138 = vcmp.lt.s32.totalorder %v2078, %v2079
    %v2139 = vsel %vm2138, %v2078, %v2079
    %v2140 = vand.u32 %v2139, 65535
    %v2141 = vshra.s32 %v2139, 16
    %v2142 = vcvt.s32.f32 %v2140
    %v2143 = vcvt.s32.f32 %v2141
    %2144 = vmin.xlane.f32.xlu0 %v2143
    %v2145 = vpop.xlane.xlu0 %2144
    %vm2146 = vcmp.eq.f32.partialorder %v2143, %v2145
    %v2147 = vsel %vm2146, %v2142, inf
    %2148 = vmin.xlane.f32.xlu0 %v2147
    %v2149 = vpop.xlane.xlu0 %2148
    %v2150 = vcvt.f32.s32 %v2149
    %v2151 = vcvt.f32.s32 %v2145
    %v2152 = vshll.u32 %v2151, 16
    %v2153 = vadd.s32 %v2152, %v2150
    %vm2154 = vcmp.lt.s32.totalorder %v2080, %v2081
    %v2155 = vsel %vm2154, %v2080, %v2081
    %v2156 = vand.u32 %v2155, 65535
    %v2157 = vshra.s32 %v2155, 16
    %v2158 = vcvt.s32.f32 %v2156
    %v2159 = vcvt.s32.f32 %v2157
    %2160 = vmin.xlane.f32.xlu0 %v2159
    %v2161 = vpop.xlane.xlu0 %2160
    %vm2162 = vcmp.eq.f32.partialorder %v2159, %v2161
    %v2163 = vsel %vm2162, %v2158, inf
    %2164 = vmin.xlane.f32.xlu0 %v2163
    %v2165 = vpop.xlane.xlu0 %2164
    %v2166 = vcvt.f32.s32 %v2165
    %v2167 = vcvt.f32.s32 %v2161
    %v2168 = vshll.u32 %v2167, 16
    %v2169 = vadd.s32 %v2168, %v2166
    %vm2170 = vcmp.lt.s32.totalorder %v2082, %v2083
    %v2171 = vsel %vm2170, %v2082, %v2083
    %v2172 = vand.u32 %v2171, 65535
    %v2173 = vshra.s32 %v2171, 16
    %v2174 = vcvt.s32.f32 %v2172
    %v2175 = vcvt.s32.f32 %v2173
    %2176 = vmin.xlane.f32.xlu0 %v2175
    %v2177 = vpop.xlane.xlu0 %2176
    %vm2178 = vcmp.eq.f32.partialorder %v2175, %v2177
    %v2179 = vsel %vm2178, %v2174, inf
    %2180 = vmin.xlane.f32.xlu0 %v2179
    %v2181 = vpop.xlane.xlu0 %2180
    %v2182 = vcvt.f32.s32 %v2181
    %v2183 = vcvt.f32.s32 %v2177
    %v2184 = vshll.u32 %v2183, 16
    %v2185 = vadd.s32 %v2184, %v2182
    %vm2186 = vcmp.lt.s32.totalorder %v2084, %v2085
    %v2187 = vsel %vm2186, %v2084, %v2085
    %v2188 = vand.u32 %v2187, 65535
    %v2189 = vshra.s32 %v2187, 16
    %v2190 = vcvt.s32.f32 %v2188
    %v2191 = vcvt.s32.f32 %v2189
    %2192 = vmin.xlane.f32.xlu0 %v2191
    %v2193 = vpop.xlane.xlu0 %2192
    %vm2194 = vcmp.eq.f32.partialorder %v2191, %v2193
    %v2195 = vsel %vm2194, %v2190, inf
    %2196 = vmin.xlane.f32.xlu0 %v2195
    %v2197 = vpop.xlane.xlu0 %2196
    %v2198 = vcvt.f32.s32 %v2197
    %v2199 = vcvt.f32.s32 %v2193
    %v2200 = vshll.u32 %v2199, 16
    %v2201 = vadd.s32 %v2200, %v2198
    %vm2202 = vcmp.lt.s32.totalorder %v2086, %v2087
    %v2203 = vsel %vm2202, %v2086, %v2087
    %v2204 = vand.u32 %v2203, 65535
    %v2205 = vshra.s32 %v2203, 16
    %v2206 = vcvt.s32.f32 %v2204
    %v2207 = vcvt.s32.f32 %v2205
    %2208 = vmin.xlane.f32.xlu0 %v2207
    %v2209 = vpop.xlane.xlu0 %2208
    %vm2210 = vcmp.eq.f32.partialorder %v2207, %v2209
    %v2211 = vsel %vm2210, %v2206, inf
    %2212 = vmin.xlane.f32.xlu0 %v2211
    %v2213 = vpop.xlane.xlu0 %2212
    %v2214 = vcvt.f32.s32 %v2213
    %v2215 = vcvt.f32.s32 %v2209
    %v2216 = vshll.u32 %v2215, 16
    %v2217 = vadd.s32 %v2216, %v2214
    %vm2218 = vcmp.lt.s32.totalorder %v2088, %v2089
    %v2219 = vsel %vm2218, %v2088, %v2089
    %v2220 = vand.u32 %v2219, 65535
    %v2221 = vshra.s32 %v2219, 16
    %v2222 = vcvt.s32.f32 %v2220
    %v2223 = vcvt.s32.f32 %v2221
    %2224 = vmin.xlane.f32.xlu0 %v2223
    %v2225 = vpop.xlane.xlu0 %2224
    %vm2226 = vcmp.eq.f32.partialorder %v2223, %v2225
    %v2227 = vsel %vm2226, %v2222, inf
    %2228 = vmin.xlane.f32.xlu0 %v2227
    %v2229 = vpop.xlane.xlu0 %2228
    %v2230 = vcvt.f32.s32 %v2229
    %v2231 = vcvt.f32.s32 %v2225
    %v2232 = vshll.u32 %v2231, 16
    %v2233 = vadd.s32 %v2232, %v2230
    %vm2234 = vcmp.lt.s32.totalorder %v2090, %v2091
    %v2235 = vsel %vm2234, %v2090, %v2091
    %v2236 = vand.u32 %v2235, 65535
    %v2237 = vshra.s32 %v2235, 16
    %v2238 = vcvt.s32.f32 %v2236
    %v2239 = vcvt.s32.f32 %v2237
    %2240 = vmin.xlane.f32.xlu0 %v2239
    %v2241 = vpop.xlane.xlu0 %2240
    %vm2242 = vcmp.eq.f32.partialorder %v2239, %v2241
    %v2243 = vsel %vm2242, %v2238, inf
    %2244 = vmin.xlane.f32.xlu0 %v2243
    %v2245 = vpop.xlane.xlu0 %2244
    %v2246 = vcvt.f32.s32 %v2245
    %v2247 = vcvt.f32.s32 %v2241
    %v2248 = vshll.u32 %v2247, 16
    %v2249 = vadd.s32 %v2248, %v2246
    %vm2250 = vcmp.lt.s32.totalorder %v2092, %v2093
    %v2251 = vsel %vm2250, %v2092, %v2093
    %v2252 = vand.u32 %v2251, 65535
    %v2253 = vshra.s32 %v2251, 16
    %v2254 = vcvt.s32.f32 %v2252
    %v2255 = vcvt.s32.f32 %v2253
    %2256 = vmin.xlane.f32.xlu0 %v2255
    %v2257 = vpop.xlane.xlu0 %2256
    %vm2258 = vcmp.eq.f32.partialorder %v2255, %v2257
    %v2259 = vsel %vm2258, %v2254, inf
    %2260 = vmin.xlane.f32.xlu0 %v2259
    %v2261 = vpop.xlane.xlu0 %2260
    %v2262 = vcvt.f32.s32 %v2261
    %v2263 = vcvt.f32.s32 %v2257
    %v2264 = vshll.u32 %v2263, 16
    %v2265 = vadd.s32 %v2264, %v2262
    %vm2266 = vcmp.lt.s32.totalorder %v2094, %v2095
    %v2267 = vsel %vm2266, %v2094, %v2095
    %v2268 = vand.u32 %v2267, 65535
    %v2269 = vshra.s32 %v2267, 16
    %v2270 = vcvt.s32.f32 %v2268
    %v2271 = vcvt.s32.f32 %v2269
    %2272 = vmin.xlane.f32.xlu0 %v2271
    %v2273 = vpop.xlane.xlu0 %2272
    %vm2274 = vcmp.eq.f32.partialorder %v2271, %v2273
    %v2275 = vsel %vm2274, %v2270, inf
    %2276 = vmin.xlane.f32.xlu0 %v2275
    %v2277 = vpop.xlane.xlu0 %2276
    %v2278 = vcvt.f32.s32 %v2277
    %v2279 = vcvt.f32.s32 %v2273
    %v2280 = vshll.u32 %v2279, 16
    %v2281 = vadd.s32 %v2280, %v2278
    %vm2282 = vcmp.lt.s32.totalorder %v2096, %v2097
    %v2283 = vsel %vm2282, %v2096, %v2097
    %v2284 = vand.u32 %v2283, 65535
    %v2285 = vshra.s32 %v2283, 16
    %v2286 = vcvt.s32.f32 %v2284
    %v2287 = vcvt.s32.f32 %v2285
    %2288 = vmin.xlane.f32.xlu0 %v2287
    %v2289 = vpop.xlane.xlu0 %2288
    %vm2290 = vcmp.eq.f32.partialorder %v2287, %v2289
    %v2291 = vsel %vm2290, %v2286, inf
    %2292 = vmin.xlane.f32.xlu0 %v2291
    %v2293 = vpop.xlane.xlu0 %2292
    %v2294 = vcvt.f32.s32 %v2293
    %v2295 = vcvt.f32.s32 %v2289
    %v2296 = vshll.u32 %v2295, 16
    %v2297 = vadd.s32 %v2296, %v2294
    %vm2298 = vcmp.lt.s32.totalorder %v2098, %v2099
    %v2299 = vsel %vm2298, %v2098, %v2099
    %v2300 = vand.u32 %v2299, 65535
    %v2301 = vshra.s32 %v2299, 16
    %v2302 = vcvt.s32.f32 %v2300
    %v2303 = vcvt.s32.f32 %v2301
    %2304 = vmin.xlane.f32.xlu0 %v2303
    %v2305 = vpop.xlane.xlu0 %2304
    %vm2306 = vcmp.eq.f32.partialorder %v2303, %v2305
    %v2307 = vsel %vm2306, %v2302, inf
    %2308 = vmin.xlane.f32.xlu0 %v2307
    %v2309 = vpop.xlane.xlu0 %2308
    %v2310 = vcvt.f32.s32 %v2309
    %v2311 = vcvt.f32.s32 %v2305
    %v2312 = vshll.u32 %v2311, 16
    %v2313 = vadd.s32 %v2312, %v2310
    %vm2314 = vcmp.lt.s32.totalorder %v2100, %v2101
    %v2315 = vsel %vm2314, %v2100, %v2101
    %v2316 = vand.u32 %v2315, 65535
    %v2317 = vshra.s32 %v2315, 16
    %v2318 = vcvt.s32.f32 %v2316
    %v2319 = vcvt.s32.f32 %v2317
    %2320 = vmin.xlane.f32.xlu0 %v2319
    %v2321 = vpop.xlane.xlu0 %2320
    %vm2322 = vcmp.eq.f32.partialorder %v2319, %v2321
    %v2323 = vsel %vm2322, %v2318, inf
    %2324 = vmin.xlane.f32.xlu0 %v2323
    %v2325 = vpop.xlane.xlu0 %2324
    %v2326 = vcvt.f32.s32 %v2325
    %v2327 = vcvt.f32.s32 %v2321
    %v2328 = vshll.u32 %v2327, 16
    %v2329 = vadd.s32 %v2328, %v2326
    %vm2330 = vcmp.lt.s32.totalorder %v2102, %v2103
    %v2331 = vsel %vm2330, %v2102, %v2103
    %v2332 = vand.u32 %v2331, 65535
    %v2333 = vshra.s32 %v2331, 16
    %v2334 = vcvt.s32.f32 %v2332
    %v2335 = vcvt.s32.f32 %v2333
    %2336 = vmin.xlane.f32.xlu0 %v2335
    %v2337 = vpop.xlane.xlu0 %2336
    %vm2338 = vcmp.eq.f32.partialorder %v2335, %v2337
    %v2339 = vsel %vm2338, %v2334, inf
    %2340 = vmin.xlane.f32.xlu0 %v2339
    %v2341 = vpop.xlane.xlu0 %2340
    %v2342 = vcvt.f32.s32 %v2341
    %v2343 = vcvt.f32.s32 %v2337
    %v2344 = vshll.u32 %v2343, 16
    %v2345 = vadd.s32 %v2344, %v2342
    %vm2346 = vcmp.lt.s32.totalorder %v2104, %v2105
    %v2347 = vsel %vm2346, %v2104, %v2105
    %v2348 = vand.u32 %v2347, 65535
    %v2349 = vshra.s32 %v2347, 16
    %v2350 = vcvt.s32.f32 %v2348
    %v2351 = vcvt.s32.f32 %v2349
    %2352 = vmin.xlane.f32.xlu0 %v2351
    %v2353 = vpop.xlane.xlu0 %2352
    %vm2354 = vcmp.eq.f32.partialorder %v2351, %v2353
    %v2355 = vsel %vm2354, %v2350, inf
    %2356 = vmin.xlane.f32.xlu0 %v2355
    %v2357 = vpop.xlane.xlu0 %2356
    %v2358 = vcvt.f32.s32 %v2357
    %v2359 = vcvt.f32.s32 %v2353
    %v2360 = vshll.u32 %v2359, 16
    %v2361 = vadd.s32 %v2360, %v2358
    %v2362 = vmin.f32 %v1962, %v1966
    %v2363 = vmin.f32 %v1964, %v1968
    %v2364 = vmin.f32 %v2362, %v1970
    %v2365 = vmin.f32 %v2363, %v1972
    %v2366 = vmin.f32 %v2364, %v1974
    %v2367 = vmin.f32 %v2365, %v1976
    %v2368 = vmin.f32 %v2366, %v1978
    %v2369 = vmin.f32 %v2367, %v1980
    %v2370 = vmin.f32 %v2368, %v1982
    %v2371 = vmin.f32 %v2369, %v1984
    %v2372 = vmin.f32 %v2370, %v1986
    %v2373 = vmin.f32 %v2371, %v1988
    %v2374 = vmin.f32 %v2372, %v1990
    %v2375 = vmin.f32 %v2373, %v1992
    %v2376 = vmin.f32 %v2374, %v2375
    %v2377 = vrot.slane %v2376, 4
    %v2378 = vmin.f32 %v2376, %v2377
    %v2379 = vrot.slane %v2378, 2
    %v2380 = vmin.f32 %v2378, %v2379
    %v2381 = vrot.slane %v2380, 1
    %v2382 = vmin.f32 %v2380, %v2381
    %v2383 = vmin.f32 %v1963, %v1967
    %v2384 = vmin.f32 %v1965, %v1969
    %v2385 = vmin.f32 %v2383, %v1971
    %v2386 = vmin.f32 %v2384, %v1973
    %v2387 = vmin.f32 %v2385, %v1975
    %v2388 = vmin.f32 %v2386, %v1977
    %v2389 = vmin.f32 %v2387, %v1979
    %v2390 = vmin.f32 %v2388, %v1981
    %v2391 = vmin.f32 %v2389, %v1983
    %v2392 = vmin.f32 %v2390, %v1985
    %v2393 = vmin.f32 %v2391, %v1987
    %v2394 = vmin.f32 %v2392, %v1989
    %v2395 = vmin.f32 %v2393, %v1991
    %v2396 = vmin.f32 %v2394, %v1993
    %v2397 = vmin.f32 %v2395, %v2396
    %v2398 = vrot.slane %v2397, 4
    %v2399 = vmin.f32 %v2397, %v2398
    %v2400 = vrot.slane %v2399, 2
    %v2401 = vmin.f32 %v2399, %v2400
    %v2402 = vrot.slane %v2401, 1
    %v2403 = vmin.f32 %v2401, %v2402
    %vm2404 = vcmp.eq.f32.partialorder %v1962, %v2382
    %vm2405 = vcmp.eq.f32.partialorder %v1963, %v2403
    %vm2406 = vcmp.eq.f32.partialorder %v1964, %v2382
    %vm2407 = vcmp.eq.f32.partialorder %v1965, %v2403
    %vm2408 = vcmp.eq.f32.partialorder %v1966, %v2382
    %vm2409 = vcmp.eq.f32.partialorder %v1967, %v2403
    %vm2410 = vcmp.eq.f32.partialorder %v1968, %v2382
    %vm2411 = vcmp.eq.f32.partialorder %v1969, %v2403
    %vm2412 = vcmp.eq.f32.partialorder %v1970, %v2382
    %vm2413 = vcmp.eq.f32.partialorder %v1971, %v2403
    %vm2414 = vcmp.eq.f32.partialorder %v1972, %v2382
    %vm2415 = vcmp.eq.f32.partialorder %v1973, %v2403
    %vm2416 = vcmp.eq.f32.partialorder %v1974, %v2382
    %vm2417 = vcmp.eq.f32.partialorder %v1975, %v2403
    %vm2418 = vcmp.eq.f32.partialorder %v1976, %v2382
    %vm2419 = vcmp.eq.f32.partialorder %v1977, %v2403
    %vm2420 = vcmp.eq.f32.partialorder %v1978, %v2382
    %vm2421 = vcmp.eq.f32.partialorder %v1979, %v2403
    %vm2422 = vcmp.eq.f32.partialorder %v1980, %v2382
    %vm2423 = vcmp.eq.f32.partialorder %v1981, %v2403
    %vm2424 = vcmp.eq.f32.partialorder %v1982, %v2382
    %vm2425 = vcmp.eq.f32.partialorder %v1983, %v2403
    %vm2426 = vcmp.eq.f32.partialorder %v1984, %v2382
    %vm2427 = vcmp.eq.f32.partialorder %v1985, %v2403
    %vm2428 = vcmp.eq.f32.partialorder %v1986, %v2382
    %vm2429 = vcmp.eq.f32.partialorder %v1987, %v2403
    %vm2430 = vcmp.eq.f32.partialorder %v1988, %v2382
    %vm2431 = vcmp.eq.f32.partialorder %v1989, %v2403
    %vm2432 = vcmp.eq.f32.partialorder %v1990, %v2382
    %vm2433 = vcmp.eq.f32.partialorder %v1991, %v2403
    %vm2434 = vcmp.eq.f32.partialorder %v1992, %v2382
    %vm2435 = vcmp.eq.f32.partialorder %v1993, %v2403
    %v2436 = vsel %vm2404, %v16, 128
    %v2437 = vsel %vm2405, %v16, 128
    %v2438 = vsel %vm2406, %v17, 128
    %v2439 = vsel %vm2407, %v17, 128
    %v2440 = vsel %vm2408, %v18, 128
    %v2441 = vsel %vm2409, %v18, 128
    %v2442 = vsel %vm2410, %v19, 128
    %v2443 = vsel %vm2411, %v19, 128
    %v2444 = vsel %vm2412, %v20, 128
    %v2445 = vsel %vm2413, %v20, 128
    %v2446 = vsel %vm2414, %v21, 128
    %v2447 = vsel %vm2415, %v21, 128
    %v2448 = vsel %vm2416, %v22, 128
    %v2449 = vsel %vm2417, %v22, 128
    %v2450 = vsel %vm2418, %v23, 128
    %v2451 = vsel %vm2419, %v23, 128
    %v2452 = vsel %vm2420, %v24, 128
    %v2453 = vsel %vm2421, %v24, 128
    %v2454 = vsel %vm2422, %v25, 128
    %v2455 = vsel %vm2423, %v25, 128
    %v2456 = vsel %vm2424, %v26, 128
    %v2457 = vsel %vm2425, %v26, 128
    %v2458 = vsel %vm2426, %v27, 128
    %v2459 = vsel %vm2427, %v27, 128
    %v2460 = vsel %vm2428, %v28, 128
    %v2461 = vsel %vm2429, %v28, 128
    %v2462 = vsel %vm2430, %v29, 128
    %v2463 = vsel %vm2431, %v29, 128
    %v2464 = vsel %vm2432, %v30, 128
    %v2465 = vsel %vm2433, %v30, 128
    %v2466 = vsel %vm2434, %v31, 128
    %v2467 = vsel %vm2435, %v31, 128
    %vm2468 = vcmp.lt.s32.totalorder %v2436, %v2440
    %v2469 = vsel %vm2468, %v2436, %v2440
    %vm2470 = vcmp.lt.s32.totalorder %v2438, %v2442
    %v2471 = vsel %vm2470, %v2438, %v2442
    %vm2472 = vcmp.lt.s32.totalorder %v2469, %v2444
    %v2473 = vsel %vm2472, %v2469, %v2444
    %vm2474 = vcmp.lt.s32.totalorder %v2471, %v2446
    %v2475 = vsel %vm2474, %v2471, %v2446
    %vm2476 = vcmp.lt.s32.totalorder %v2473, %v2448
    %v2477 = vsel %vm2476, %v2473, %v2448
    %vm2478 = vcmp.lt.s32.totalorder %v2475, %v2450
    %v2479 = vsel %vm2478, %v2475, %v2450
    %vm2480 = vcmp.lt.s32.totalorder %v2477, %v2452
    %v2481 = vsel %vm2480, %v2477, %v2452
    %vm2482 = vcmp.lt.s32.totalorder %v2479, %v2454
    %v2483 = vsel %vm2482, %v2479, %v2454
    %vm2484 = vcmp.lt.s32.totalorder %v2481, %v2456
    %v2485 = vsel %vm2484, %v2481, %v2456
    %vm2486 = vcmp.lt.s32.totalorder %v2483, %v2458
    %v2487 = vsel %vm2486, %v2483, %v2458
    %vm2488 = vcmp.lt.s32.totalorder %v2485, %v2460
    %v2489 = vsel %vm2488, %v2485, %v2460
    %vm2490 = vcmp.lt.s32.totalorder %v2487, %v2462
    %v2491 = vsel %vm2490, %v2487, %v2462
    %vm2492 = vcmp.lt.s32.totalorder %v2489, %v2464
    %v2493 = vsel %vm2492, %v2489, %v2464
    %vm2494 = vcmp.lt.s32.totalorder %v2491, %v2466
    %v2495 = vsel %vm2494, %v2491, %v2466
    %vm2496 = vcmp.lt.s32.totalorder %v2493, %v2495
    %v2497 = vsel %vm2496, %v2493, %v2495
    %v2498 = vrot.slane %v2497, 4
    %vm2499 = vcmp.lt.s32.totalorder %v2497, %v2498
    %v2500 = vsel %vm2499, %v2497, %v2498
    %v2501 = vrot.slane %v2500, 2
    %vm2502 = vcmp.lt.s32.totalorder %v2500, %v2501
    %v2503 = vsel %vm2502, %v2500, %v2501
    %v2504 = vrot.slane %v2503, 1
    %vm2505 = vcmp.lt.s32.totalorder %v2503, %v2504
    %v2506 = vsel %vm2505, %v2503, %v2504
    %vm2507 = vcmp.lt.s32.totalorder %v2437, %v2441
    %v2508 = vsel %vm2507, %v2437, %v2441
    %vm2509 = vcmp.lt.s32.totalorder %v2439, %v2443
    %v2510 = vsel %vm2509, %v2439, %v2443
    %vm2511 = vcmp.lt.s32.totalorder %v2508, %v2445
    %v2512 = vsel %vm2511, %v2508, %v2445
    %vm2513 = vcmp.lt.s32.totalorder %v2510, %v2447
    %v2514 = vsel %vm2513, %v2510, %v2447
    %vm2515 = vcmp.lt.s32.totalorder %v2512, %v2449
    %v2516 = vsel %vm2515, %v2512, %v2449
    %vm2517 = vcmp.lt.s32.totalorder %v2514, %v2451
    %v2518 = vsel %vm2517, %v2514, %v2451
    %vm2519 = vcmp.lt.s32.totalorder %v2516, %v2453
    %v2520 = vsel %vm2519, %v2516, %v2453
    %vm2521 = vcmp.lt.s32.totalorder %v2518, %v2455
    %v2522 = vsel %vm2521, %v2518, %v2455
    %vm2523 = vcmp.lt.s32.totalorder %v2520, %v2457
    %v2524 = vsel %vm2523, %v2520, %v2457
    %vm2525 = vcmp.lt.s32.totalorder %v2522, %v2459
    %v2526 = vsel %vm2525, %v2522, %v2459
    %vm2527 = vcmp.lt.s32.totalorder %v2524, %v2461
    %v2528 = vsel %vm2527, %v2524, %v2461
    %vm2529 = vcmp.lt.s32.totalorder %v2526, %v2463
    %v2530 = vsel %vm2529, %v2526, %v2463
    %vm2531 = vcmp.lt.s32.totalorder %v2528, %v2465
    %v2532 = vsel %vm2531, %v2528, %v2465
    %vm2533 = vcmp.lt.s32.totalorder %v2530, %v2467
    %v2534 = vsel %vm2533, %v2530, %v2467
    %vm2535 = vcmp.lt.s32.totalorder %v2532, %v2534
    %v2536 = vsel %vm2535, %v2532, %v2534
    %v2537 = vrot.slane %v2536, 4
    %vm2538 = vcmp.lt.s32.totalorder %v2536, %v2537
    %v2539 = vsel %vm2538, %v2536, %v2537
    %v2540 = vrot.slane %v2539, 2
    %vm2541 = vcmp.lt.s32.totalorder %v2539, %v2540
    %v2542 = vsel %vm2541, %v2539, %v2540
    %v2543 = vrot.slane %v2542, 1
    %vm2544 = vcmp.lt.s32.totalorder %v2542, %v2543
    %v2545 = vsel %vm2544, %v2542, %v2543
    %vm2546 = vcmp.eq.s32.totalorder %v16, %v2506
    %vm2547 = vcmp.eq.s32.totalorder %v16, %v2545
    %vm2548 = vcmp.eq.s32.totalorder %v17, %v2506
    %vm2549 = vcmp.eq.s32.totalorder %v17, %v2545
    %vm2550 = vcmp.eq.s32.totalorder %v18, %v2506
    %vm2551 = vcmp.eq.s32.totalorder %v18, %v2545
    %vm2552 = vcmp.eq.s32.totalorder %v19, %v2506
    %vm2553 = vcmp.eq.s32.totalorder %v19, %v2545
    %vm2554 = vcmp.eq.s32.totalorder %v20, %v2506
    %vm2555 = vcmp.eq.s32.totalorder %v20, %v2545
    %vm2556 = vcmp.eq.s32.totalorder %v21, %v2506
    %vm2557 = vcmp.eq.s32.totalorder %v21, %v2545
    %vm2558 = vcmp.eq.s32.totalorder %v22, %v2506
    %vm2559 = vcmp.eq.s32.totalorder %v22, %v2545
    %vm2560 = vcmp.eq.s32.totalorder %v23, %v2506
    %vm2561 = vcmp.eq.s32.totalorder %v23, %v2545
    %vm2562 = vcmp.eq.s32.totalorder %v24, %v2506
    %vm2563 = vcmp.eq.s32.totalorder %v24, %v2545
    %vm2564 = vcmp.eq.s32.totalorder %v25, %v2506
    %vm2565 = vcmp.eq.s32.totalorder %v25, %v2545
    %vm2566 = vcmp.eq.s32.totalorder %v26, %v2506
    %vm2567 = vcmp.eq.s32.totalorder %v26, %v2545
    %vm2568 = vcmp.eq.s32.totalorder %v27, %v2506
    %vm2569 = vcmp.eq.s32.totalorder %v27, %v2545
    %vm2570 = vcmp.eq.s32.totalorder %v28, %v2506
    %vm2571 = vcmp.eq.s32.totalorder %v28, %v2545
    %vm2572 = vcmp.eq.s32.totalorder %v29, %v2506
    %vm2573 = vcmp.eq.s32.totalorder %v29, %v2545
    %vm2574 = vcmp.eq.s32.totalorder %v30, %v2506
    %vm2575 = vcmp.eq.s32.totalorder %v30, %v2545
    %vm2576 = vcmp.eq.s32.totalorder %v31, %v2506
    %vm2577 = vcmp.eq.s32.totalorder %v31, %v2545
    %v2578 = vsel %vm2546, 1, 0
    %v2579 = vsel %vm2547, 1, 0
    %v2580 = vsel %vm2548, 1, 0
    %v2581 = vsel %vm2549, 1, 0
    %v2582 = vsel %vm2550, 1, 0
    %v2583 = vsel %vm2551, 1, 0
    %v2584 = vsel %vm2552, 1, 0
    %v2585 = vsel %vm2553, 1, 0
    %v2586 = vsel %vm2554, 1, 0
    %v2587 = vsel %vm2555, 1, 0
    %v2588 = vsel %vm2556, 1, 0
    %v2589 = vsel %vm2557, 1, 0
    %v2590 = vsel %vm2558, 1, 0
    %v2591 = vsel %vm2559, 1, 0
    %v2592 = vsel %vm2560, 1, 0
    %v2593 = vsel %vm2561, 1, 0
    %v2594 = vsel %vm2562, 1, 0
    %v2595 = vsel %vm2563, 1, 0
    %v2596 = vsel %vm2564, 1, 0
    %v2597 = vsel %vm2565, 1, 0
    %v2598 = vsel %vm2566, 1, 0
    %v2599 = vsel %vm2567, 1, 0
    %v2600 = vsel %vm2568, 1, 0
    %v2601 = vsel %vm2569, 1, 0
    %v2602 = vsel %vm2570, 1, 0
    %v2603 = vsel %vm2571, 1, 0
    %v2604 = vsel %vm2572, 1, 0
    %v2605 = vsel %vm2573, 1, 0
    %v2606 = vsel %vm2574, 1, 0
    %v2607 = vsel %vm2575, 1, 0
    %v2608 = vsel %vm2576, 1, 0
    %v2609 = vsel %vm2577, 1, 0
    %v2610 = vcvt.s32.f32 %v2578
    %v2611 = vcvt.s32.f32 %v2579
    %v2612 = vcvt.s32.f32 %v2580
    %v2613 = vcvt.s32.f32 %v2581
    %v2614 = vcvt.s32.f32 %v2582
    %v2615 = vcvt.s32.f32 %v2583
    %v2616 = vcvt.s32.f32 %v2584
    %v2617 = vcvt.s32.f32 %v2585
    %v2618 = vcvt.s32.f32 %v2586
    %v2619 = vcvt.s32.f32 %v2587
    %v2620 = vcvt.s32.f32 %v2588
    %v2621 = vcvt.s32.f32 %v2589
    %v2622 = vcvt.s32.f32 %v2590
    %v2623 = vcvt.s32.f32 %v2591
    %v2624 = vcvt.s32.f32 %v2592
    %v2625 = vcvt.s32.f32 %v2593
    %v2626 = vcvt.s32.f32 %v2594
    %v2627 = vcvt.s32.f32 %v2595
    %v2628 = vcvt.s32.f32 %v2596
    %v2629 = vcvt.s32.f32 %v2597
    %v2630 = vcvt.s32.f32 %v2598
    %v2631 = vcvt.s32.f32 %v2599
    %v2632 = vcvt.s32.f32 %v2600
    %v2633 = vcvt.s32.f32 %v2601
    %v2634 = vcvt.s32.f32 %v2602
    %v2635 = vcvt.s32.f32 %v2603
    %v2636 = vcvt.s32.f32 %v2604
    %v2637 = vcvt.s32.f32 %v2605
    %v2638 = vcvt.s32.f32 %v2606
    %v2639 = vcvt.s32.f32 %v2607
    %v2640 = vcvt.s32.f32 %v2608
    %v2641 = vcvt.s32.f32 %v2609
    %2642 = vmatprep.subr.mxu0 %v2641
    %2643 = vmatpush1.xpose.msra.mxu0 %v2640
    %2644 = vmatprep.subr.mxu0 %v2639
    %2645 = vmatpush1.xpose.msra.mxu0 %v2638
    %2646 = vmatprep.subr.mxu0 %v2637
    %2647 = vmatpush1.xpose.msra.mxu0 %v2636
    %2648 = vmatprep.subr.mxu0 %v2635
    %2649 = vmatpush1.xpose.msra.mxu0 %v2634
    %2650 = vmatprep.subr.mxu0 %v2633
    %2651 = vmatpush1.xpose.msra.mxu0 %v2632
    %2652 = vmatprep.subr.mxu0 %v2631
    %2653 = vmatpush1.xpose.msra.mxu0 %v2630
    %2654 = vmatprep.subr.mxu0 %v2629
    %2655 = vmatpush1.xpose.msra.mxu0 %v2628
    %2656 = vmatprep.subr.mxu0 %v2627
    %2657 = vmatpush1.xpose.msra.mxu0 %v2626
    %2658 = vmatprep.subr.mxu0 %v2625
    %2659 = vmatpush1.xpose.msra.mxu0 %v2624
    %2660 = vmatprep.subr.mxu0 %v2623
    %2661 = vmatpush1.xpose.msra.mxu0 %v2622
    %2662 = vmatprep.subr.mxu0 %v2621
    %2663 = vmatpush1.xpose.msra.mxu0 %v2620
    %2664 = vmatprep.subr.mxu0 %v2619
    %2665 = vmatpush1.xpose.msra.mxu0 %v2618
    %2666 = vmatprep.subr.mxu0 %v2617
    %2667 = vmatpush1.xpose.msra.mxu0 %v2616
    %2668 = vmatprep.subr.mxu0 %v2615
    %2669 = vmatpush1.xpose.msra.mxu0 %v2614
    %2670 = vmatprep.subr.mxu0 %v2613
    %2671 = vmatpush1.xpose.msra.mxu0 %v2612
    %2672 = vmatprep.subr.mxu0 %v2611
    %2673 = vmatpush1.xpose.msra.mxu0 %v2610
    %2674 = vmatprep.subr.mxu0 0.0
    %2675 = vmatpush2.xpose.msra.mxu0 0.0
    %2676 = vmatprep.subr.mxu0 0.0
    %2677 = vmatpush2.xpose.msra.mxu0 0.0
    %2678 = vmatprep.subr.mxu0 0.0
    %2679 = vmatpush2.xpose.msra.mxu0 0.0
    %2680 = vmatprep.subr.mxu0 0.0
    %2681 = vmatpush2.xpose.msra.mxu0 0.0
    %2682 = vmatprep.subr.mxu0 0.0
    %2683 = vmatpush2.xpose.msra.mxu0 0.0
    %2684 = vmatprep.subr.mxu0 0.0
    %2685 = vmatpush2.xpose.msra.mxu0 0.0
    %2686 = vmatprep.subr.mxu0 0.0
    %2687 = vmatpush2.xpose.msra.mxu0 0.0
    %2688 = vmatprep.subr.mxu0 0.0
    %2689 = vmatpush2.xpose.msra.mxu0 0.0
    %2690 = vmatprep.subr.mxu0 0.0
    %2691 = vmatpush2.xpose.msra.mxu0 0.0
    %2692 = vmatprep.subr.mxu0 0.0
    %2693 = vmatpush2.xpose.msra.mxu0 0.0
    %2694 = vmatprep.subr.mxu0 0.0
    %2695 = vmatpush2.xpose.msra.mxu0 0.0
    %2696 = vmatprep.subr.mxu0 0.0
    %2697 = vmatpush2.xpose.msra.mxu0 0.0
    %2698 = vmatprep.subr.mxu0 0.0
    %2699 = vmatpush2.xpose.msra.mxu0 0.0
    %2700 = vmatprep.subr.mxu0 0.0
    %2701 = vmatpush2.xpose.msra.mxu0 0.0
    %2702 = vmatprep.subr.mxu0 0.0
    %2703 = vmatpush2.xpose.msra.mxu0 0.0
    %2704 = vmatprep.subr.mxu0 0.0
    %2705 = vmatpush2.xpose.msra.mxu0 0.0
    %2706 = vmatprep.mubr.f32.mxu0 1.0
    %2707 = vmatmul.mubr.f32.gmra.mxu0 1.0
    %v2708 = vpop.f32.mrf.mxu0
    %v2709 = vadd.f32 0.0, %v2708
    %v2710 = vpop.f32.mrf.mxu0
    %2711 = vdwg.mxu0
    %v2713 = vrot.slane %v1598, 7
    %v2715 = vsel %vm1170, %v2709, %v2713
    %2716 = vmatprep.subr.mxu0 %v2641
    %2717 = vmatpush1.msra.mxu0 %v2640
    %2718 = vmatprep.subr.mxu0 %v2639
    %2719 = vmatpush1.msra.mxu0 %v2638
    %2720 = vmatprep.subr.mxu0 %v2637
    %2721 = vmatpush1.msra.mxu0 %v2636
    %2722 = vmatprep.subr.mxu0 %v2635
    %2723 = vmatpush1.msra.mxu0 %v2634
    %2724 = vmatprep.subr.mxu0 %v2633
    %2725 = vmatpush1.msra.mxu0 %v2632
    %2726 = vmatprep.subr.mxu0 %v2631
    %2727 = vmatpush1.msra.mxu0 %v2630
    %2728 = vmatprep.subr.mxu0 %v2629
    %2729 = vmatpush1.msra.mxu0 %v2628
    %2730 = vmatprep.subr.mxu0 %v2627
    %2731 = vmatpush1.msra.mxu0 %v2626
    %2732 = vmatprep.subr.mxu0 %v2625
    %2733 = vmatpush1.msra.mxu0 %v2624
    %2734 = vmatprep.subr.mxu0 %v2623
    %2735 = vmatpush1.msra.mxu0 %v2622
    %2736 = vmatprep.subr.mxu0 %v2621
    %2737 = vmatpush1.msra.mxu0 %v2620
    %2738 = vmatprep.subr.mxu0 %v2619
    %2739 = vmatpush1.msra.mxu0 %v2618
    %2740 = vmatprep.subr.mxu0 %v2617
    %2741 = vmatpush1.msra.mxu0 %v2616
    %2742 = vmatprep.subr.mxu0 %v2615
    %2743 = vmatpush1.msra.mxu0 %v2614
    %2744 = vmatprep.subr.mxu0 %v2613
    %2745 = vmatpush1.msra.mxu0 %v2612
    %2746 = vmatprep.subr.mxu0 %v2611
    %2747 = vmatpush1.msra.mxu0 %v2610
    %2748 = vmatprep.subr.mxu0 0.0
    %2749 = vmatpush2.msra.mxu0 0.0
    %2750 = vmatprep.subr.mxu0 0.0
    %2751 = vmatpush2.msra.mxu0 0.0
    %2752 = vmatprep.subr.mxu0 0.0
    %2753 = vmatpush2.msra.mxu0 0.0
    %2754 = vmatprep.subr.mxu0 0.0
    %2755 = vmatpush2.msra.mxu0 0.0
    %2756 = vmatprep.subr.mxu0 0.0
    %2757 = vmatpush2.msra.mxu0 0.0
    %2758 = vmatprep.subr.mxu0 0.0
    %2759 = vmatpush2.msra.mxu0 0.0
    %2760 = vmatprep.subr.mxu0 0.0
    %2761 = vmatpush2.msra.mxu0 0.0
    %2762 = vmatprep.subr.mxu0 0.0
    %2763 = vmatpush2.msra.mxu0 0.0
    %2764 = vmatprep.subr.mxu0 0.0
    %2765 = vmatpush2.msra.mxu0 0.0
    %2766 = vmatprep.subr.mxu0 0.0
    %2767 = vmatpush2.msra.mxu0 0.0
    %2768 = vmatprep.subr.mxu0 0.0
    %2769 = vmatpush2.msra.mxu0 0.0
    %2770 = vmatprep.subr.mxu0 0.0
    %2771 = vmatpush2.msra.mxu0 0.0
    %2772 = vmatprep.subr.mxu0 0.0
    %2773 = vmatpush2.msra.mxu0 0.0
    %2774 = vmatprep.subr.mxu0 0.0
    %2775 = vmatpush2.msra.mxu0 0.0
    %2776 = vmatprep.subr.mxu0 0.0
    %2777 = vmatpush2.msra.mxu0 0.0
    %2778 = vmatprep.subr.mxu0 0.0
    %2779 = vmatpush2.msra.mxu0 0.0
    %2780 = vmatprep.mubr.f32.mxu0 0.0
    %2781 = vmatmul.mubr.f32.gmra.mxu0 %v2715
    %v2782 = vpop.f32.mrf.mxu0
    %v2783 = vadd.f32 0.0, %v2782
    %v2784 = vpop.f32.mrf.mxu0
    %v2785 = vadd.f32 0.0, %v2784
    %2786 = vdwg.mxu0
    %v2789 = vcombine.low %v2783, %v2785
    %v2790 = vrot.slane %v2789, 5
    %v2791 = vrot.slane %v2790, 4
    %v2793 = vsub.f32 %v1600, %v2791
    %v2794 = vmul.f32 %v2793, %v2793
    %v2796 = vcombine.high %v2794, %v2794
    %v2798 = vsel %vm123, %v2794, 0.0
    %v2799 = vrot.slane %v2798, 4
    %v2800 = vadd.f32 %v2798, %v2799
    %v2801 = vrot.slane %v2800, 2
    %v2802 = vadd.f32 %v2800, %v2801
    %v2803 = vrot.slane %v2802, 1
    %v2804 = vadd.f32 %v2802, %v2803
    %v2805 = vsel %vm123, %v2796, 0.0
    %v2806 = vrot.slane %v2805, 4
    %v2807 = vadd.f32 %v2805, %v2806
    %v2808 = vrot.slane %v2807, 2
    %v2809 = vadd.f32 %v2807, %v2808
    %v2810 = vrot.slane %v2809, 1
    %v2811 = vadd.f32 %v2809, %v2810
    %v2812 = vmul.f32 %v2804, -1000.0
    %v2813 = vmul.f32 %v2811, -1000.0
    %v2814 = vmul.f32 %v2812, 1.442695
    %v2815 = vpow.pop %v2814
    %v2816 = vmul.f32 %v2813, 1.442695
    %v2817 = vpow.pop %v2816
    %v2818 = vmul.f32 %v2783, 0.5
    %v2819 = vmul.f32 %v2785, 0.5
    %v2820 = vmin.f32 %v2818, 1.0
    %v2821 = vmin.f32 %v2819, 1.0
    %v2822 = vmul.f32 %v2815, %v2820
    %v2823 = vmul.f32 %v2817, %v2821
    %v2824 = vsub.f32 1.0, %v2822
    %v2825 = vsub.f32 1.0, %v2823
    %v2826 = vsel %vm1170, %v2824, 0.0
    %v2827 = vsel %vm1170, %v2825, 0.0
    %v2828 = vadd.f32 %v2826, %v2827
    %2829 = vadd.xlane.f32.xlu0 %v2828
    %v2830 = vpop.xlane.xlu0 %2829
    %v2831 = vrot.slane %v2830, 4
    %v2832 = vadd.f32 %v2830, %v2831
    %v2833 = vrot.slane %v2832, 2
    %v2834 = vadd.f32 %v2832, %v2833
    %v2835 = vrot.slane %v2834, 1
    %v2836 = vadd.f32 %v2834, %v2835
    %s2837 = vtos %v2836
    %v2838 = vrcp.pop 256.0
    %s2839 = vtos %v2838
    %s2840 = smul.f32 %s2837, %s2839
    %vm2841 = vcmp.eq.s32.totalorder %v33, %v2121
    %vm2842 = vcmp.eq.s32.totalorder %v34, %v2121
    %vm2843 = vcmp.eq.s32.totalorder %v33, %v2137
    %vm2844 = vcmp.eq.s32.totalorder %v34, %v2137
    %vm2845 = vcmp.eq.s32.totalorder %v33, %v2153
    %vm2846 = vcmp.eq.s32.totalorder %v34, %v2153
    %vm2847 = vcmp.eq.s32.totalorder %v33, %v2169
    %vm2848 = vcmp.eq.s32.totalorder %v34, %v2169
    %vm2849 = vcmp.eq.s32.totalorder %v33, %v2185
    %vm2850 = vcmp.eq.s32.totalorder %v34, %v2185
    %vm2851 = vcmp.eq.s32.totalorder %v33, %v2201
    %vm2852 = vcmp.eq.s32.totalorder %v34, %v2201
    %vm2853 = vcmp.eq.s32.totalorder %v33, %v2217
    %vm2854 = vcmp.eq.s32.totalorder %v34, %v2217
    %vm2855 = vcmp.eq.s32.totalorder %v33, %v2233
    %vm2856 = vcmp.eq.s32.totalorder %v34, %v2233
    %vm2857 = vcmp.eq.s32.totalorder %v33, %v2249
    %vm2858 = vcmp.eq.s32.totalorder %v34, %v2249
    %vm2859 = vcmp.eq.s32.totalorder %v33, %v2265
    %vm2860 = vcmp.eq.s32.totalorder %v34, %v2265
    %vm2861 = vcmp.eq.s32.totalorder %v33, %v2281
    %vm2862 = vcmp.eq.s32.totalorder %v34, %v2281
    %vm2863 = vcmp.eq.s32.totalorder %v33, %v2297
    %vm2864 = vcmp.eq.s32.totalorder %v34, %v2297
    %vm2865 = vcmp.eq.s32.totalorder %v33, %v2313
    %vm2866 = vcmp.eq.s32.totalorder %v34, %v2313
    %vm2867 = vcmp.eq.s32.totalorder %v33, %v2329
    %vm2868 = vcmp.eq.s32.totalorder %v34, %v2329
    %vm2869 = vcmp.eq.s32.totalorder %v33, %v2345
    %vm2870 = vcmp.eq.s32.totalorder %v34, %v2345
    %vm2871 = vcmp.eq.s32.totalorder %v33, %v2361
    %vm2872 = vcmp.eq.s32.totalorder %v34, %v2361
    %v2873 = vsel %vm2841, 1, 0
    %v2874 = vsel %vm2842, 1, 0
    %v2875 = vsel %vm2843, 1, 0
    %v2876 = vsel %vm2844, 1, 0
    %v2877 = vsel %vm2845, 1, 0
    %v2878 = vsel %vm2846, 1, 0
    %v2879 = vsel %vm2847, 1, 0
    %v2880 = vsel %vm2848, 1, 0
    %v2881 = vsel %vm2849, 1, 0
    %v2882 = vsel %vm2850, 1, 0
    %v2883 = vsel %vm2851, 1, 0
    %v2884 = vsel %vm2852, 1, 0
    %v2885 = vsel %vm2853, 1, 0
    %v2886 = vsel %vm2854, 1, 0
    %v2887 = vsel %vm2855, 1, 0
    %v2888 = vsel %vm2856, 1, 0
    %v2889 = vsel %vm2857, 1, 0
    %v2890 = vsel %vm2858, 1, 0
    %v2891 = vsel %vm2859, 1, 0
    %v2892 = vsel %vm2860, 1, 0
    %v2893 = vsel %vm2861, 1, 0
    %v2894 = vsel %vm2862, 1, 0
    %v2895 = vsel %vm2863, 1, 0
    %v2896 = vsel %vm2864, 1, 0
    %v2897 = vsel %vm2865, 1, 0
    %v2898 = vsel %vm2866, 1, 0
    %v2899 = vsel %vm2867, 1, 0
    %v2900 = vsel %vm2868, 1, 0
    %v2901 = vsel %vm2869, 1, 0
    %v2902 = vsel %vm2870, 1, 0
    %v2903 = vsel %vm2871, 1, 0
    %v2904 = vsel %vm2872, 1, 0
    %v2905 = vcvt.s32.f32 %v2873
    %v2906 = vcvt.s32.f32 %v2874
    %v2907 = vcvt.s32.f32 %v2875
    %v2908 = vcvt.s32.f32 %v2876
    %v2909 = vcvt.s32.f32 %v2877
    %v2910 = vcvt.s32.f32 %v2878
    %v2911 = vcvt.s32.f32 %v2879
    %v2912 = vcvt.s32.f32 %v2880
    %v2913 = vcvt.s32.f32 %v2881
    %v2914 = vcvt.s32.f32 %v2882
    %v2915 = vcvt.s32.f32 %v2883
    %v2916 = vcvt.s32.f32 %v2884
    %v2917 = vcvt.s32.f32 %v2885
    %v2918 = vcvt.s32.f32 %v2886
    %v2919 = vcvt.s32.f32 %v2887
    %v2920 = vcvt.s32.f32 %v2888
    %v2921 = vcvt.s32.f32 %v2889
    %v2922 = vcvt.s32.f32 %v2890
    %v2923 = vcvt.s32.f32 %v2891
    %v2924 = vcvt.s32.f32 %v2892
    %v2925 = vcvt.s32.f32 %v2893
    %v2926 = vcvt.s32.f32 %v2894
    %v2927 = vcvt.s32.f32 %v2895
    %v2928 = vcvt.s32.f32 %v2896
    %v2929 = vcvt.s32.f32 %v2897
    %v2930 = vcvt.s32.f32 %v2898
    %v2931 = vcvt.s32.f32 %v2899
    %v2932 = vcvt.s32.f32 %v2900
    %v2933 = vcvt.s32.f32 %v2901
    %v2934 = vcvt.s32.f32 %v2902
    %v2935 = vcvt.s32.f32 %v2903
    %v2936 = vcvt.s32.f32 %v2904
    %2937 = vmatprep.subr.mxu0 %v2936
    %2938 = vmatpush1.msra.mxu0 %v2935
    %2939 = vmatprep.subr.mxu0 %v2934
    %2940 = vmatpush1.msra.mxu0 %v2933
    %2941 = vmatprep.subr.mxu0 %v2932
    %2942 = vmatpush1.msra.mxu0 %v2931
    %2943 = vmatprep.subr.mxu0 %v2930
    %2944 = vmatpush1.msra.mxu0 %v2929
    %2945 = vmatprep.subr.mxu0 %v2928
    %2946 = vmatpush1.msra.mxu0 %v2927
    %2947 = vmatprep.subr.mxu0 %v2926
    %2948 = vmatpush1.msra.mxu0 %v2925
    %2949 = vmatprep.subr.mxu0 %v2924
    %2950 = vmatpush1.msra.mxu0 %v2923
    %2951 = vmatprep.subr.mxu0 %v2922
    %2952 = vmatpush1.msra.mxu0 %v2921
    %2953 = vmatprep.subr.mxu0 %v2920
    %2954 = vmatpush1.msra.mxu0 %v2919
    %2955 = vmatprep.subr.mxu0 %v2918
    %2956 = vmatpush1.msra.mxu0 %v2917
    %2957 = vmatprep.subr.mxu0 %v2916
    %2958 = vmatpush1.msra.mxu0 %v2915
    %2959 = vmatprep.subr.mxu0 %v2914
    %2960 = vmatpush1.msra.mxu0 %v2913
    %2961 = vmatprep.subr.mxu0 %v2912
    %2962 = vmatpush1.msra.mxu0 %v2911
    %2963 = vmatprep.subr.mxu0 %v2910
    %2964 = vmatpush1.msra.mxu0 %v2909
    %2965 = vmatprep.subr.mxu0 %v2908
    %2966 = vmatpush1.msra.mxu0 %v2907
    %2967 = vmatprep.subr.mxu0 %v2906
    %2968 = vmatpush1.msra.mxu0 %v2905
    %2969 = vmatprep.subr.mxu0 0.0
    %2970 = vmatpush2.msra.mxu0 0.0
    %2971 = vmatprep.subr.mxu0 0.0
    %2972 = vmatpush2.msra.mxu0 0.0
    %2973 = vmatprep.subr.mxu0 0.0
    %2974 = vmatpush2.msra.mxu0 0.0
    %2975 = vmatprep.subr.mxu0 0.0
    %2976 = vmatpush2.msra.mxu0 0.0
    %2977 = vmatprep.subr.mxu0 0.0
    %2978 = vmatpush2.msra.mxu0 0.0
    %2979 = vmatprep.subr.mxu0 0.0
    %2980 = vmatpush2.msra.mxu0 0.0
    %2981 = vmatprep.subr.mxu0 0.0
    %2982 = vmatpush2.msra.mxu0 0.0
    %2983 = vmatprep.subr.mxu0 0.0
    %2984 = vmatpush2.msra.mxu0 0.0
    %2985 = vmatprep.subr.mxu0 0.0
    %2986 = vmatpush2.msra.mxu0 0.0
    %2987 = vmatprep.subr.mxu0 0.0
    %2988 = vmatpush2.msra.mxu0 0.0
    %2989 = vmatprep.subr.mxu0 0.0
    %2990 = vmatpush2.msra.mxu0 0.0
    %2991 = vmatprep.subr.mxu0 0.0
    %2992 = vmatpush2.msra.mxu0 0.0
    %2993 = vmatprep.subr.mxu0 0.0
    %2994 = vmatpush2.msra.mxu0 0.0
    %2995 = vmatprep.subr.mxu0 0.0
    %2996 = vmatpush2.msra.mxu0 0.0
    %2997 = vmatprep.subr.mxu0 0.0
    %2998 = vmatpush2.msra.mxu0 0.0
    %2999 = vmatprep.subr.mxu0 0.0
    %3000 = vmatpush2.msra.mxu0 0.0
    %3001 = vmatprep.mubr.f32.mxu0 0.0
    %3002 = vmatmul.mubr.f32.gmra.mxu0 1.0
    %v3003 = vpop.f32.mrf.mxu0
    %v3004 = vadd.f32 0.0, %v3003
    %v3005 = vpop.f32.mrf.mxu0
    %v3006 = vadd.f32 0.0, %v3005
    %3007 = vdwg.mxu0
    %v3008 = vrot.slane %v1600, 7
    %v3009 = vrot.slane %v1684, 7
    %v3012 = vsel %vm1170, %v3004, %v3008
    %v3013 = vsel %vm1170, %v3006, %v3009
    %3014 = vmatprep.subr.mxu0 %v2936
    %3015 = vmatpush1.xpose.msra.mxu0 %v2935
    %3016 = vmatprep.subr.mxu0 %v2934
    %3017 = vmatpush1.xpose.msra.mxu0 %v2933
    %3018 = vmatprep.subr.mxu0 %v2932
    %3019 = vmatpush1.xpose.msra.mxu0 %v2931
    %3020 = vmatprep.subr.mxu0 %v2930
    %3021 = vmatpush1.xpose.msra.mxu0 %v2929
    %3022 = vmatprep.subr.mxu0 %v2928
    %3023 = vmatpush1.xpose.msra.mxu0 %v2927
    %3024 = vmatprep.subr.mxu0 %v2926
    %3025 = vmatpush1.xpose.msra.mxu0 %v2925
    %3026 = vmatprep.subr.mxu0 %v2924
    %3027 = vmatpush1.xpose.msra.mxu0 %v2923
    %3028 = vmatprep.subr.mxu0 %v2922
    %3029 = vmatpush1.xpose.msra.mxu0 %v2921
    %3030 = vmatprep.subr.mxu0 %v2920
    %3031 = vmatpush1.xpose.msra.mxu0 %v2919
    %3032 = vmatprep.subr.mxu0 %v2918
    %3033 = vmatpush1.xpose.msra.mxu0 %v2917
    %3034 = vmatprep.subr.mxu0 %v2916
    %3035 = vmatpush1.xpose.msra.mxu0 %v2915
    %3036 = vmatprep.subr.mxu0 %v2914
    %3037 = vmatpush1.xpose.msra.mxu0 %v2913
    %3038 = vmatprep.subr.mxu0 %v2912
    %3039 = vmatpush1.xpose.msra.mxu0 %v2911
    %3040 = vmatprep.subr.mxu0 %v2910
    %3041 = vmatpush1.xpose.msra.mxu0 %v2909
    %3042 = vmatprep.subr.mxu0 %v2908
    %3043 = vmatpush1.xpose.msra.mxu0 %v2907
    %3044 = vmatprep.subr.mxu0 %v2906
    %3045 = vmatpush1.xpose.msra.mxu0 %v2905
    %3046 = vmatprep.subr.mxu0 0.0
    %3047 = vmatpush2.xpose.msra.mxu0 0.0
    %3048 = vmatprep.subr.mxu0 0.0
    %3049 = vmatpush2.xpose.msra.mxu0 0.0
    %3050 = vmatprep.subr.mxu0 0.0
    %3051 = vmatpush2.xpose.msra.mxu0 0.0
    %3052 = vmatprep.subr.mxu0 0.0
    %3053 = vmatpush2.xpose.msra.mxu0 0.0
    %3054 = vmatprep.subr.mxu0 0.0
    %3055 = vmatpush2.xpose.msra.mxu0 0.0
    %3056 = vmatprep.subr.mxu0 0.0
    %3057 = vmatpush2.xpose.msra.mxu0 0.0
    %3058 = vmatprep.subr.mxu0 0.0
    %3059 = vmatpush2.xpose.msra.mxu0 0.0
    %3060 = vmatprep.subr.mxu0 0.0
    %3061 = vmatpush2.xpose.msra.mxu0 0.0
    %3062 = vmatprep.subr.mxu0 0.0
    %3063 = vmatpush2.xpose.msra.mxu0 0.0
    %3064 = vmatprep.subr.mxu0 0.0
    %3065 = vmatpush2.xpose.msra.mxu0 0.0
    %3066 = vmatprep.subr.mxu0 0.0
    %3067 = vmatpush2.xpose.msra.mxu0 0.0
    %3068 = vmatprep.subr.mxu0 0.0
    %3069 = vmatpush2.xpose.msra.mxu0 0.0
    %3070 = vmatprep.subr.mxu0 0.0
    %3071 = vmatpush2.xpose.msra.mxu0 0.0
    %3072 = vmatprep.subr.mxu0 0.0
    %3073 = vmatpush2.xpose.msra.mxu0 0.0
    %3074 = vmatprep.subr.mxu0 0.0
    %3075 = vmatpush2.xpose.msra.mxu0 0.0
    %3076 = vmatprep.subr.mxu0 0.0
    %3077 = vmatpush2.xpose.msra.mxu0 0.0
    %3078 = vmatprep.mubr.f32.mxu0 %v3013
    %3079 = vmatmul.mubr.f32.gmra.mxu0 %v3012
    %v3080 = vpop.f32.mrf.mxu0
    %v3081 = vadd.f32 0.0, %v3080
    %v3082 = vpop.f32.mrf.mxu0
    %3083 = vdwg.mxu0
    %v3085 = vrot.slane %v3081, 1
    %v3087 = vsub.f32 %v1598, %v3085
    %v3088 = vmul.f32 %v3087, %v3087
    %v3089 = vsel %vm123, %v3088, 0.0
    %v3090 = vrot.slane %v3089, 4
    %v3091 = vadd.f32 %v3089, %v3090
    %v3092 = vrot.slane %v3091, 2
    %v3093 = vadd.f32 %v3091, %v3092
    %v3094 = vrot.slane %v3093, 1
    %v3095 = vadd.f32 %v3093, %v3094
    %v3096 = vmul.f32 %v3095, -1000.0
    %v3097 = vmul.f32 %v3096, 1.442695
    %v3098 = vpow.pop %v3097
    %v3099 = vmul.f32 %v3081, 2.0
    %v3100 = vadd.f32 %v3099, 1e-06
    %v3101 = vrcp.pop %v3100
    %v3102 = vmul.f32 1.0, %v3101
    %v3103 = vmul.f32 %v3098, %v3102
    %v3104 = vsub.f32 1.0, %v3103
    %v3105 = vsel %vm1170, %v3104, 0.0
    %3106 = vadd.xlane.f32.xlu0 %v3105
    %v3107 = vpop.xlane.xlu0 %3106
    %v3108 = vrot.slane %v3107, 4
    %v3109 = vadd.f32 %v3107, %v3108
    %v3110 = vrot.slane %v3109, 2
    %v3111 = vadd.f32 %v3109, %v3110
    %v3112 = vrot.slane %v3111, 1
    %v3113 = vadd.f32 %v3111, %v3112
    %s3114 = vtos %v3113
    %v3115 = vrcp.pop 128.0
    %s3116 = vtos %v3115
    %s3117 = smul.f32 %s3114, %s3116
    %s3118 = sadd.f32 %s2840, %s3117
    %s3119 = smul.f32 %s3118, 0.5
    %v3120 = vstv %s3119
    %v3121 = vsel %vm1579, %v3120, 0.0
    %v3122 = vadd.f32 %v1578, %v3121
    %vm3123 = vcmask 8192
    %3124 = vst.msk [vmem:[#allocation2] sm:$0x1] %vm3123, %v3122
    // Predicated region
    $region14: #{tpu_custom_call.1} parent=1 // pred_check
      _
    $region15: #{tpu_custom_call.1} parent=1 // pred_check_branch
      %3126 = sbr.rel (0) target = $region17
    $region16: #{tpu_custom_call.1} parent=1 // pred_region
      %s3128 = ssub.s32 16, 16
      %3129 = vsyncadd [#allocation3], %s3128
      %s3131 = sshll.u32 [#allocation2], 4
      %s3132 = int_to_ptr.vmem [resolvable:$true] %s3131
      %3134 = dma.vmem_to_hbm [thread:$0]  %s3132, 16, %s3, [#allocation3]
    $region17: #{tpu_custom_call.1} parent=1 // pred_fallthru
      _
    // Predicated region
    $region18: #{tpu_custom_call.1} parent=1 // pred_check
      _
    $region19: #{tpu_custom_call.1} parent=1 // pred_check_branch
      %3136 = sbr.rel (0) target = $region21
    $region20: #{tpu_custom_call.1} parent=1 // pred_region
      %3137 = dma.done [#allocation3], 16
    $region21: #{tpu_custom_call.1} parent=1 // pred_fallthru
      _
    %3138 = vsyncpa [#allocation3], 1

</llo_original>
